<compile_context>
chip_gen: v7x
topology: tpu7x:2x2x1
jax: 0.10.0
libtpu: 0.0.40
codegen_flags: <defaults>
</compile_context>

<pallas_src>
import jax
import jax.numpy as jnp
from jax.experimental import pallas as pl
from jax.experimental.pallas import tpu as pltpu

NUM_CLASSES = 10

_VMEM = pl.BlockSpec(memory_space=pltpu.MemorySpace.VMEM)


# ---------------------------------------------------------------- kernels ----
def conv_bias_kernel(w_ref, x_ref, b_ref, o_ref):
    # o = w @ x + b ; w: (Cout, K), x: (K, M), b: (Cout, 1)  ->  (Cout, M)
    o_ref[...] = (
        jnp.dot(w_ref[...], x_ref[...], preferred_element_type=jnp.float32)
        + b_ref[...]
    ).astype(o_ref.dtype)


def conv_bn_relu_kernel(w_ref, x_ref, b_ref, g_ref, be_ref, o_ref):
    # Fused conv(matmul)+bias + train-mode BatchNorm (biased batch var) + ReLU.
    # Channels are on the sublane axis, so the BN reduce is a lane-axis reduce.
    y = jnp.dot(w_ref[...], x_ref[...], preferred_element_type=jnp.float32) + b_ref[...]
    mean = jnp.mean(y, axis=1, keepdims=True)
    var = jnp.mean((y - mean) * (y - mean), axis=1, keepdims=True)
    z = (y - mean) * jax.lax.rsqrt(var + 1e-5) * g_ref[...] + be_ref[...]
    o_ref[...] = jnp.maximum(z, 0.0).astype(o_ref.dtype)


def max4_kernel(a_ref, b_ref, c_ref, d_ref, o_ref):
    o_ref[...] = jnp.maximum(
        jnp.maximum(a_ref[...], b_ref[...]),
        jnp.maximum(c_ref[...], d_ref[...]),
    )


def fc_chain_kernel(x_ref, w1_ref, b1_ref, w2_ref, b2_ref, w3_ref, b3_ref, o_ref):
    # Fused fc1 -> fc2 -> fc3 (no activations between, per the spec forward).
    h = jnp.dot(x_ref[...], w1_ref[...], preferred_element_type=jnp.float32) + b1_ref[...]
    h = jnp.dot(h, w2_ref[...], preferred_element_type=jnp.float32) + b2_ref[...]
    o_ref[...] = (
        jnp.dot(h, w3_ref[...], preferred_element_type=jnp.float32) + b3_ref[...]
    ).astype(o_ref.dtype)


# --------------------------------------------------------------- wrappers ----
def im2col_cm(x, k, pad):
    """Channel-major im2col.  x: (C, B, H, W) -> (C*k*k, B*Ho*Wo)."""
    if pad:
        x = jnp.pad(x, ((0, 0), (0, 0), (pad, pad), (pad, pad)))
    C, B, H, W = x.shape
    Ho, Wo = H - k + 1, W - k + 1
    taps = [x[:, :, di:di + Ho, dj:dj + Wo] for di in range(k) for dj in range(k)]
    p = jnp.stack(taps, axis=1)                      # (C, k*k, B, Ho, Wo)
    return p.reshape(C * k * k, B * Ho * Wo), (B, Ho, Wo)


def conv2d_cm(xc, w, b, pad, gamma=None, beta=None):
    """Channel-major conv, stride 1.  xc: (Cin, B, H, W), w: (Cout, Cin, k, k).

    Returns (Cout, B, Ho, Wo).  If gamma/beta are given, BatchNorm(batch
    stats)+ReLU are fused into the same Pallas kernel.
    """
    Cout, Cin, k, _ = w.shape
    cols, (B, Ho, Wo) = im2col_cm(xc, k, pad)        # (Cin*k*k, B*Ho*Wo)
    w2 = w.reshape(Cout, Cin * k * k)
    M = B * Ho * Wo
    out_shape = jax.ShapeDtypeStruct((Cout, M), jnp.float32)
    if gamma is None:
        out = pl.pallas_call(
            conv_bias_kernel,
            out_shape=out_shape,
            in_specs=[_VMEM] * 3,
            out_specs=_VMEM,
        )(w2, cols, b.reshape(Cout, 1))
    else:
        out = pl.pallas_call(
            conv_bn_relu_kernel,
            out_shape=out_shape,
            in_specs=[_VMEM] * 5,
            out_specs=_VMEM,
        )(w2, cols, b.reshape(Cout, 1), gamma.reshape(Cout, 1), beta.reshape(Cout, 1))
    return out.reshape(Cout, B, Ho, Wo)


def maxpool2_cm(x):
    """2x2 max pool, stride 2, channel-major.  x: (C, B, H, W)."""
    # TODO(synk): the 2x2 window extraction stays in XLA (4 strided views) —
    # in-kernel stride-2 lane slicing is not reliably lowered by Mosaic; the
    # Pallas kernel still gets lane-dense (C, B*Ho*Wo) operands.
    C, B, H, W = x.shape
    Ho, Wo = H // 2, W // 2
    a = x[:, :, 0::2, 0::2].reshape(C, B * Ho * Wo)
    b = x[:, :, 0::2, 1::2].reshape(C, B * Ho * Wo)
    c = x[:, :, 1::2, 0::2].reshape(C, B * Ho * Wo)
    d = x[:, :, 1::2, 1::2].reshape(C, B * Ho * Wo)
    out = pl.pallas_call(
        max4_kernel,
        out_shape=jax.ShapeDtypeStruct((C, B * Ho * Wo), jnp.float32),
        in_specs=[_VMEM] * 4,
        out_specs=_VMEM,
    )(a, b, c, d)
    return out.reshape(C, B, Ho, Wo)


def fc_chain(x, p):
    B = x.shape[0]
    return pl.pallas_call(
        fc_chain_kernel,
        out_shape=jax.ShapeDtypeStruct((B, NUM_CLASSES), jnp.float32),
        in_specs=[_VMEM] * 7,
        out_specs=_VMEM,
    )(x, p["fw1"], p["fb1"], p["fw2"], p["fb2"], p["fw3"], p["fb3"])


# ----------------------------------------------------------------- params ----
def init_params(key):
    ks = jax.random.split(key, 16)

    def rnd(k, shape, scale=0.05):
        return scale * jax.random.normal(k, shape, jnp.float32)

    return {
        # tmp_conv1: Conv2d(3,6,3,1,1), then two Conv2d(6,6,3,1,1)
        "tw0": rnd(ks[0], (6, 3, 3, 3)), "tb0": rnd(ks[1], (6,)),
        "tw1": rnd(ks[2], (6, 6, 3, 3)), "tb1": rnd(ks[3], (6,)),
        "tw2": rnd(ks[4], (6, 6, 3, 3)), "tb2": rnd(ks[5], (6,)),
        # conv1: 6 -> 6, k5, no pad ; bn1(6)
        "w1": rnd(ks[6], (6, 6, 5, 5)), "b1": rnd(ks[7], (6,)),
        "g1": jnp.ones((6,), jnp.float32), "be1": jnp.zeros((6,), jnp.float32),
        # conv2: 6 -> 16, k5, no pad ; bn2(16)   (see TODO(synk) above)
        "w2": rnd(ks[8], (16, 6, 5, 5)), "b2": rnd(ks[9], (16,)),
        "g2": jnp.ones((16,), jnp.float32), "be2": jnp.zeros((16,), jnp.float32),
        # fc layers stored as (in, out) so forward is x @ W + b
        "fw1": rnd(ks[10], (400, 120)), "fb1": rnd(ks[11], (1, 120)),
        "fw2": rnd(ks[12], (120, 84)), "fb2": rnd(ks[13], (1, 84)),
        "fw3": rnd(ks[14], (84, NUM_CLASSES)), "fb3": rnd(ks[15], (1, NUM_CLASSES)),
    }


# ---------------------------------------------------------------- forward ----
def forward(p, x):
    B = x.shape[0]
    xc = x.transpose(1, 0, 2, 3)                          # (3, B, 32, 32) channel-major
    # tmp_conv1: three 3x3 pad=1 convs, no activation between (per spec)
    xc = conv2d_cm(xc, p["tw0"], p["tb0"], pad=1)         # (6, B, 32, 32)
    xc = conv2d_cm(xc, p["tw1"], p["tb1"], pad=1)         # (6, B, 32, 32)
    xc = conv2d_cm(xc, p["tw2"], p["tb2"], pad=1)         # (6, B, 32, 32)
    # conv1 + bn1 + relu (fused kernel)
    xc = conv2d_cm(xc, p["w1"], p["b1"], pad=0,
                   gamma=p["g1"], beta=p["be1"])          # (6, B, 28, 28)
    xc = maxpool2_cm(xc)                                  # (6, B, 14, 14)
    # conv2 + bn2 + relu (fused kernel)
    xc = conv2d_cm(xc, p["w2"], p["b2"], pad=0,
                   gamma=p["g2"], beta=p["be2"])          # (16, B, 10, 10)
    xc = maxpool2_cm(xc)                                  # (16, B, 5, 5)
    xf = xc.transpose(1, 0, 2, 3).reshape(B, -1)          # (B, 400), PyTorch flatten order
    return fc_chain(xf, p)                                # (B, 10)


if __name__ == "__main__":
    # Spatial size must be 32x32 so the flatten matches fc1's 16*5*5 features.
    x = jax.random.normal(jax.random.PRNGKey(0), (2, 3, 32, 32), jnp.float32)
    params = init_params(jax.random.PRNGKey(1))

    out = jax.jit(forward)(params, x)
    out = jax.block_until_ready(out)
    assert out.shape == (2, NUM_CLASSES), out.shape
    assert bool(jnp.all(jnp.isfinite(out)))
    print("KERNEL_OK")
</pallas_src>

<mosaic_0001>
module attributes {stable_mosaic.version = 11 : i64} {
  func.func @conv_bias_kernel(%arg0: memref<6x27xf32, #tpu.memory_space<vmem>>, %arg1: memref<27x2048xf32, #tpu.memory_space<vmem>>, %arg2: memref<6x1xf32, #tpu.memory_space<vmem>>, %arg3: memref<6x2048xf32, #tpu.memory_space<vmem>>) attributes {dimension_semantics = [], scalar_prefetch = 0 : i64, scratch_operands = 0 : i64, tpu.core_type = #tpu.core_type<tc>} {
    %c0 = arith.constant 0 : index
    %c0_0 = arith.constant 0 : index
    %0 = vector.load %arg0[%c0, %c0_0] : memref<6x27xf32, #tpu.memory_space<vmem>>, vector<6x27xf32>
    %c0_1 = arith.constant 0 : index
    %c0_2 = arith.constant 0 : index
    %1 = vector.load %arg1[%c0_1, %c0_2] : memref<27x2048xf32, #tpu.memory_space<vmem>>, vector<27x2048xf32>
    %cst = arith.constant dense<0.000000e+00> : vector<6x2048xf32>
    %2 = tpu.matmul %0, %1, %cst {dimension_numbers = #tpu.dot_dimension_numbers<[1], [0], [0], [1], [0, 0, 1, 1], [], []>} : vector<6x27xf32>, vector<27x2048xf32>, vector<6x2048xf32> -> vector<6x2048xf32>
    %c0_3 = arith.constant 0 : index
    %c0_4 = arith.constant 0 : index
    %3 = vector.load %arg2[%c0_3, %c0_4] : memref<6x1xf32, #tpu.memory_space<vmem>>, vector<6x1xf32>
    %4 = vector.broadcast %3 : vector<6x1xf32> to vector<6x2048xf32>
    %5 = arith.addf %2, %4 : vector<6x2048xf32>
    %c0_5 = arith.constant 0 : index
    %c0_6 = arith.constant 0 : index
    %6 = vector.load %arg3[%c0_5, %c0_6] : memref<6x2048xf32, #tpu.memory_space<vmem>>, vector<6x2048xf32>
    tpu.vector_store %arg3[%c0_5, %c0_6], %5 {strides = array<i32>} : memref<6x2048xf32, #tpu.memory_space<vmem>>, vector<6x2048xf32>,
    return
  }
}

module attributes {stable_mosaic.version = 11 : i64} {
  func.func @conv_bias_kernel(%arg0: memref<6x54xf32, #tpu.memory_space<vmem>>, %arg1: memref<54x2048xf32, #tpu.memory_space<vmem>>, %arg2: memref<6x1xf32, #tpu.memory_space<vmem>>, %arg3: memref<6x2048xf32, #tpu.memory_space<vmem>>) attributes {dimension_semantics = [], scalar_prefetch = 0 : i64, scratch_operands = 0 : i64, tpu.core_type = #tpu.core_type<tc>} {
    %c0 = arith.constant 0 : index
    %c0_0 = arith.constant 0 : index
    %0 = vector.load %arg0[%c0, %c0_0] : memref<6x54xf32, #tpu.memory_space<vmem>>, vector<6x54xf32>
    %c0_1 = arith.constant 0 : index
    %c0_2 = arith.constant 0 : index
    %1 = vector.load %arg1[%c0_1, %c0_2] : memref<54x2048xf32, #tpu.memory_space<vmem>>, vector<54x2048xf32>
    %cst = arith.constant dense<0.000000e+00> : vector<6x2048xf32>
    %2 = tpu.matmul %0, %1, %cst {dimension_numbers = #tpu.dot_dimension_numbers<[1], [0], [0], [1], [0, 0, 1, 1], [], []>} : vector<6x54xf32>, vector<54x2048xf32>, vector<6x2048xf32> -> vector<6x2048xf32>
    %c0_3 = arith.constant 0 : index
    %c0_4 = arith.constant 0 : index
    %3 = vector.load %arg2[%c0_3, %c0_4] : memref<6x1xf32, #tpu.memory_space<vmem>>, vector<6x1xf32>
    %4 = vector.broadcast %3 : vector<6x1xf32> to vector<6x2048xf32>
    %5 = arith.addf %2, %4 : vector<6x2048xf32>
    %c0_5 = arith.constant 0 : index
    %c0_6 = arith.constant 0 : index
    %6 = vector.load %arg3[%c0_5, %c0_6] : memref<6x2048xf32, #tpu.memory_space<vmem>>, vector<6x2048xf32>
    tpu.vector_store %arg3[%c0_5, %c0_6], %5 {strides = array<i32>} : memref<6x2048xf32, #tpu.memory_space<vmem>>, vector<6x2048xf32>,
    return
  }
}

module attributes {stable_mosaic.version = 11 : i64} {
  func.func @conv_bn_relu_kernel(%arg0: memref<6x150xf32, #tpu.memory_space<vmem>>, %arg1: memref<150x1568xf32, #tpu.memory_space<vmem>>, %arg2: memref<6x1xf32, #tpu.memory_space<vmem>>, %arg3: memref<6x1xf32, #tpu.memory_space<vmem>>, %arg4: memref<6x1xf32, #tpu.memory_space<vmem>>, %arg5: memref<6x1568xf32, #tpu.memory_space<vmem>>) attributes {dimension_semantics = [], scalar_prefetch = 0 : i64, scratch_operands = 0 : i64, tpu.core_type = #tpu.core_type<tc>} {
    %c0 = arith.constant 0 : index
    %c0_0 = arith.constant 0 : index
    %0 = vector.load %arg0[%c0, %c0_0] : memref<6x150xf32, #tpu.memory_space<vmem>>, vector<6x150xf32>
    %c0_1 = arith.constant 0 : index
    %c0_2 = arith.constant 0 : index
    %1 = vector.load %arg1[%c0_1, %c0_2] : memref<150x1568xf32, #tpu.memory_space<vmem>>, vector<150x1568xf32>
    %cst = arith.constant dense<0.000000e+00> : vector<6x1568xf32>
    %2 = tpu.matmul %0, %1, %cst {dimension_numbers = #tpu.dot_dimension_numbers<[1], [0], [0], [1], [0, 0, 1, 1], [], []>} : vector<6x150xf32>, vector<150x1568xf32>, vector<6x1568xf32> -> vector<6x1568xf32>
    %c0_3 = arith.constant 0 : index
    %c0_4 = arith.constant 0 : index
    %3 = vector.load %arg2[%c0_3, %c0_4] : memref<6x1xf32, #tpu.memory_space<vmem>>, vector<6x1xf32>
    %4 = vector.broadcast %3 : vector<6x1xf32> to vector<6x1568xf32>
    %5 = arith.addf %2, %4 : vector<6x1568xf32>
    %cst_5 = arith.constant dense<0.000000e+00> : vector<6xf32>
    %6 = vector.multi_reduction <add>, %5, %cst_5 [1] : vector<6x1568xf32> to vector<6xf32>
    %7 = vector.shape_cast %6 : vector<6xf32> to vector<6x1xf32>
    %cst_6 = arith.constant 1.568000e+03 : f32
    %8 = vector.broadcast %cst_6 : f32 to vector<6x1xf32>
    %9 = arith.divf %7, %8 : vector<6x1xf32>
    %10 = vector.broadcast %9 : vector<6x1xf32> to vector<6x1568xf32>
    %11 = arith.subf %5, %10 : vector<6x1568xf32>
    %12 = vector.broadcast %9 : vector<6x1xf32> to vector<6x1568xf32>
    %13 = arith.subf %5, %12 : vector<6x1568xf32>
    %14 = arith.mulf %11, %13 : vector<6x1568xf32>
    %cst_7 = arith.constant dense<0.000000e+00> : vector<6xf32>
    %15 = vector.multi_reduction <add>, %14, %cst_7 [1] : vector<6x1568xf32> to vector<6xf32>
    %16 = vector.shape_cast %15 : vector<6xf32> to vector<6x1xf32>
    %cst_8 = arith.constant 1.568000e+03 : f32
    %17 = vector.broadcast %cst_8 : f32 to vector<6x1xf32>
    %18 = arith.divf %16, %17 : vector<6x1xf32>
    %19 = vector.broadcast %9 : vector<6x1xf32> to vector<6x1568xf32>
    %20 = arith.subf %5, %19 : vector<6x1568xf32>
    %cst_9 = arith.constant 9.99999974E-6 : f32
    %21 = vector.broadcast %cst_9 : f32 to vector<6x1xf32>
    %22 = arith.addf %18, %21 : vector<6x1xf32>
    %23 = math.rsqrt %22 : vector<6x1xf32>
    %24 = vector.broadcast %23 : vector<6x1xf32> to vector<6x1568xf32>
    %25 = arith.mulf %20, %24 : vector<6x1568xf32>
    %c0_10 = arith.constant 0 : index
    %c0_11 = arith.constant 0 : index
    %26 = vector.load %arg3[%c0_10, %c0_11] : memref<6x1xf32, #tpu.memory_space<vmem>>, vector<6x1xf32>
    %27 = vector.broadcast %26 : vector<6x1xf32> to vector<6x1568xf32>
    %28 = arith.mulf %25, %27 : vector<6x1568xf32>
    %c0_12 = arith.constant 0 : index
    %c0_13 = arith.constant 0 : index
    %29 = vector.load %arg4[%c0_12, %c0_13] : memref<6x1xf32, #tpu.memory_space<vmem>>, vector<6x1xf32>
    %30 = vector.broadcast %29 : vector<6x1xf32> to vector<6x1568xf32>
    %31 = arith.addf %28, %30 : vector<6x1568xf32>
    %cst_14 = arith.constant 0.000000e+00 : f32
    %32 = vector.broadcast %cst_14 : f32 to vector<6x1568xf32>
    %33 = arith.maximumf %31, %32 : vector<6x1568xf32>
    %c0_15 = arith.constant 0 : index
    %c0_16 = arith.constant 0 : index
    %34 = vector.load %arg5[%c0_15, %c0_16] : memref<6x1568xf32, #tpu.memory_space<vmem>>, vector<6x1568xf32>
    tpu.vector_store %arg5[%c0_15, %c0_16], %33 {strides = array<i32>} : memref<6x1568xf32, #tpu.memory_space<vmem>>, vector<6x1568xf32>,
    return
  }
}

module attributes {stable_mosaic.version = 11 : i64} {
  func.func @max4_kernel(%arg0: memref<6x392xf32, #tpu.memory_space<vmem>>, %arg1: memref<6x392xf32, #tpu.memory_space<vmem>>, %arg2: memref<6x392xf32, #tpu.memory_space<vmem>>, %arg3: memref<6x392xf32, #tpu.memory_space<vmem>>, %arg4: memref<6x392xf32, #tpu.memory_space<vmem>>) attributes {dimension_semantics = [], scalar_prefetch = 0 : i64, scratch_operands = 0 : i64, tpu.core_type = #tpu.core_type<tc>} {
    %c0 = arith.constant 0 : index
    %c0_0 = arith.constant 0 : index
    %0 = vector.load %arg0[%c0, %c0_0] : memref<6x392xf32, #tpu.memory_space<vmem>>, vector<6x392xf32>
    %c0_1 = arith.constant 0 : index
    %c0_2 = arith.constant 0 : index
    %1 = vector.load %arg1[%c0_1, %c0_2] : memref<6x392xf32, #tpu.memory_space<vmem>>, vector<6x392xf32>
    %2 = arith.maximumf %0, %1 : vector<6x392xf32>
    %c0_3 = arith.constant 0 : index
    %c0_4 = arith.constant 0 : index
    %3 = vector.load %arg2[%c0_3, %c0_4] : memref<6x392xf32, #tpu.memory_space<vmem>>, vector<6x392xf32>
    %c0_5 = arith.constant 0 : index
    %c0_6 = arith.constant 0 : index
    %4 = vector.load %arg3[%c0_5, %c0_6] : memref<6x392xf32, #tpu.memory_space<vmem>>, vector<6x392xf32>
    %5 = arith.maximumf %3, %4 : vector<6x392xf32>
    %6 = arith.maximumf %2, %5 : vector<6x392xf32>
    %c0_7 = arith.constant 0 : index
    %c0_8 = arith.constant 0 : index
    %7 = vector.load %arg4[%c0_7, %c0_8] : memref<6x392xf32, #tpu.memory_space<vmem>>, vector<6x392xf32>
    tpu.vector_store %arg4[%c0_7, %c0_8], %6 {strides = array<i32>} : memref<6x392xf32, #tpu.memory_space<vmem>>, vector<6x392xf32>,
    return
  }
}

module attributes {stable_mosaic.version = 11 : i64} {
  func.func @conv_bn_relu_kernel(%arg0: memref<16x150xf32, #tpu.memory_space<vmem>>, %arg1: memref<150x200xf32, #tpu.memory_space<vmem>>, %arg2: memref<16x1xf32, #tpu.memory_space<vmem>>, %arg3: memref<16x1xf32, #tpu.memory_space<vmem>>, %arg4: memref<16x1xf32, #tpu.memory_space<vmem>>, %arg5: memref<16x200xf32, #tpu.memory_space<vmem>>) attributes {dimension_semantics = [], scalar_prefetch = 0 : i64, scratch_operands = 0 : i64, tpu.core_type = #tpu.core_type<tc>} {
    %c0 = arith.constant 0 : index
    %c0_0 = arith.constant 0 : index
    %0 = vector.load %arg0[%c0, %c0_0] : memref<16x150xf32, #tpu.memory_space<vmem>>, vector<16x150xf32>
    %c0_1 = arith.constant 0 : index
    %c0_2 = arith.constant 0 : index
    %1 = vector.load %arg1[%c0_1, %c0_2] : memref<150x200xf32, #tpu.memory_space<vmem>>, vector<150x200xf32>
    %cst = arith.constant dense<0.000000e+00> : vector<16x200xf32>
    %2 = tpu.matmul %0, %1, %cst {dimension_numbers = #tpu.dot_dimension_numbers<[1], [0], [0], [1], [0, 0, 1, 1], [], []>} : vector<16x150xf32>, vector<150x200xf32>, vector<16x200xf32> -> vector<16x200xf32>
    %c0_3 = arith.constant 0 : index
    %c0_4 = arith.constant 0 : index
    %3 = vector.load %arg2[%c0_3, %c0_4] : memref<16x1xf32, #tpu.memory_space<vmem>>, vector<16x1xf32>
    %4 = vector.broadcast %3 : vector<16x1xf32> to vector<16x200xf32>
    %5 = arith.addf %2, %4 : vector<16x200xf32>
    %cst_5 = arith.constant dense<0.000000e+00> : vector<16xf32>
    %6 = vector.multi_reduction <add>, %5, %cst_5 [1] : vector<16x200xf32> to vector<16xf32>
    %7 = vector.shape_cast %6 : vector<16xf32> to vector<16x1xf32>
    %cst_6 = arith.constant 2.000000e+02 : f32
    %8 = vector.broadcast %cst_6 : f32 to vector<16x1xf32>
    %9 = arith.divf %7, %8 : vector<16x1xf32>
    %10 = vector.broadcast %9 : vector<16x1xf32> to vector<16x200xf32>
    %11 = arith.subf %5, %10 : vector<16x200xf32>
    %12 = vector.broadcast %9 : vector<16x1xf32> to vector<16x200xf32>
    %13 = arith.subf %5, %12 : vector<16x200xf32>
    %14 = arith.mulf %11, %13 : vector<16x200xf32>
    %cst_7 = arith.constant dense<0.000000e+00> : vector<16xf32>
    %15 = vector.multi_reduction <add>, %14, %cst_7 [1] : vector<16x200xf32> to vector<16xf32>
    %16 = vector.shape_cast %15 : vector<16xf32> to vector<16x1xf32>
    %cst_8 = arith.constant 2.000000e+02 : f32
    %17 = vector.broadcast %cst_8 : f32 to vector<16x1xf32>
    %18 = arith.divf %16, %17 : vector<16x1xf32>
    %19 = vector.broadcast %9 : vector<16x1xf32> to vector<16x200xf32>
    %20 = arith.subf %5, %19 : vector<16x200xf32>
    %cst_9 = arith.constant 9.99999974E-6 : f32
    %21 = vector.broadcast %cst_9 : f32 to vector<16x1xf32>
    %22 = arith.addf %18, %21 : vector<16x1xf32>
    %23 = math.rsqrt %22 : vector<16x1xf32>
    %24 = vector.broadcast %23 : vector<16x1xf32> to vector<16x200xf32>
    %25 = arith.mulf %20, %24 : vector<16x200xf32>
    %c0_10 = arith.constant 0 : index
    %c0_11 = arith.constant 0 : index
    %26 = vector.load %arg3[%c0_10, %c0_11] : memref<16x1xf32, #tpu.memory_space<vmem>>, vector<16x1xf32>
    %27 = vector.broadcast %26 : vector<16x1xf32> to vector<16x200xf32>
    %28 = arith.mulf %25, %27 : vector<16x200xf32>
    %c0_12 = arith.constant 0 : index
    %c0_13 = arith.constant 0 : index
    %29 = vector.load %arg4[%c0_12, %c0_13] : memref<16x1xf32, #tpu.memory_space<vmem>>, vector<16x1xf32>
    %30 = vector.broadcast %29 : vector<16x1xf32> to vector<16x200xf32>
    %31 = arith.addf %28, %30 : vector<16x200xf32>
    %cst_14 = arith.constant 0.000000e+00 : f32
    %32 = vector.broadcast %cst_14 : f32 to vector<16x200xf32>
    %33 = arith.maximumf %31, %32 : vector<16x200xf32>
    %c0_15 = arith.constant 0 : index
    %c0_16 = arith.constant 0 : index
    %34 = vector.load %arg5[%c0_15, %c0_16] : memref<16x200xf32, #tpu.memory_space<vmem>>, vector<16x200xf32>
    tpu.vector_store %arg5[%c0_15, %c0_16], %33 {strides = array<i32>} : memref<16x200xf32, #tpu.memory_space<vmem>>, vector<16x200xf32>,
    return
  }
}

module attributes {stable_mosaic.version = 11 : i64} {
  func.func @max4_kernel(%arg0: memref<16x50xf32, #tpu.memory_space<vmem>>, %arg1: memref<16x50xf32, #tpu.memory_space<vmem>>, %arg2: memref<16x50xf32, #tpu.memory_space<vmem>>, %arg3: memref<16x50xf32, #tpu.memory_space<vmem>>, %arg4: memref<16x50xf32, #tpu.memory_space<vmem>>) attributes {dimension_semantics = [], scalar_prefetch = 0 : i64, scratch_operands = 0 : i64, tpu.core_type = #tpu.core_type<tc>} {
    %c0 = arith.constant 0 : index
    %c0_0 = arith.constant 0 : index
    %0 = vector.load %arg0[%c0, %c0_0] : memref<16x50xf32, #tpu.memory_space<vmem>>, vector<16x50xf32>
    %c0_1 = arith.constant 0 : index
    %c0_2 = arith.constant 0 : index
    %1 = vector.load %arg1[%c0_1, %c0_2] : memref<16x50xf32, #tpu.memory_space<vmem>>, vector<16x50xf32>
    %2 = arith.maximumf %0, %1 : vector<16x50xf32>
    %c0_3 = arith.constant 0 : index
    %c0_4 = arith.constant 0 : index
    %3 = vector.load %arg2[%c0_3, %c0_4] : memref<16x50xf32, #tpu.memory_space<vmem>>, vector<16x50xf32>
    %c0_5 = arith.constant 0 : index
    %c0_6 = arith.constant 0 : index
    %4 = vector.load %arg3[%c0_5, %c0_6] : memref<16x50xf32, #tpu.memory_space<vmem>>, vector<16x50xf32>
    %5 = arith.maximumf %3, %4 : vector<16x50xf32>
    %6 = arith.maximumf %2, %5 : vector<16x50xf32>
    %c0_7 = arith.constant 0 : index
    %c0_8 = arith.constant 0 : index
    %7 = vector.load %arg4[%c0_7, %c0_8] : memref<16x50xf32, #tpu.memory_space<vmem>>, vector<16x50xf32>
    tpu.vector_store %arg4[%c0_7, %c0_8], %6 {strides = array<i32>} : memref<16x50xf32, #tpu.memory_space<vmem>>, vector<16x50xf32>,
    return
  }
}

module attributes {stable_mosaic.version = 11 : i64} {
  func.func @fc_chain_kernel(%arg0: memref<2x400xf32, #tpu.memory_space<vmem>>, %arg1: memref<400x120xf32, #tpu.memory_space<vmem>>, %arg2: memref<1x120xf32, #tpu.memory_space<vmem>>, %arg3: memref<120x84xf32, #tpu.memory_space<vmem>>, %arg4: memref<1x84xf32, #tpu.memory_space<vmem>>, %arg5: memref<84x10xf32, #tpu.memory_space<vmem>>, %arg6: memref<1x10xf32, #tpu.memory_space<vmem>>, %arg7: memref<2x10xf32, #tpu.memory_space<vmem>>) attributes {dimension_semantics = [], scalar_prefetch = 0 : i64, scratch_operands = 0 : i64, tpu.core_type = #tpu.core_type<tc>} {
    %c0 = arith.constant 0 : index
    %c0_0 = arith.constant 0 : index
    %0 = vector.load %arg0[%c0, %c0_0] : memref<2x400xf32, #tpu.memory_space<vmem>>, vector<2x400xf32>
    %c0_1 = arith.constant 0 : index
    %c0_2 = arith.constant 0 : index
    %1 = vector.load %arg1[%c0_1, %c0_2] : memref<400x120xf32, #tpu.memory_space<vmem>>, vector<400x120xf32>
    %cst = arith.constant dense<0.000000e+00> : vector<2x120xf32>
    %2 = tpu.matmul %0, %1, %cst {dimension_numbers = #tpu.dot_dimension_numbers<[1], [0], [0], [1], [0, 0, 1, 1], [], []>} : vector<2x400xf32>, vector<400x120xf32>, vector<2x120xf32> -> vector<2x120xf32>
    %c0_3 = arith.constant 0 : index
    %c0_4 = arith.constant 0 : index
    %3 = vector.load %arg2[%c0_3, %c0_4] : memref<1x120xf32, #tpu.memory_space<vmem>>, vector<1x120xf32>
    %4 = vector.broadcast %3 : vector<1x120xf32> to vector<2x120xf32>
    %5 = arith.addf %2, %4 : vector<2x120xf32>
    %c0_5 = arith.constant 0 : index
    %c0_6 = arith.constant 0 : index
    %6 = vector.load %arg3[%c0_5, %c0_6] : memref<120x84xf32, #tpu.memory_space<vmem>>, vector<120x84xf32>
    %cst_7 = arith.constant dense<0.000000e+00> : vector<2x84xf32>
    %7 = tpu.matmul %5, %6, %cst_7 {dimension_numbers = #tpu.dot_dimension_numbers<[1], [0], [0], [1], [0, 0, 1, 1], [], []>} : vector<2x120xf32>, vector<120x84xf32>, vector<2x84xf32> -> vector<2x84xf32>
    %c0_8 = arith.constant 0 : index
    %c0_9 = arith.constant 0 : index
    %8 = vector.load %arg4[%c0_8, %c0_9] : memref<1x84xf32, #tpu.memory_space<vmem>>, vector<1x84xf32>
    %9 = vector.broadcast %8 : vector<1x84xf32> to vector<2x84xf32>
    %10 = arith.addf %7, %9 : vector<2x84xf32>
    %c0_10 = arith.constant 0 : index
    %c0_11 = arith.constant 0 : index
    %11 = vector.load %arg5[%c0_10, %c0_11] : memref<84x10xf32, #tpu.memory_space<vmem>>, vector<84x10xf32>
    %cst_12 = arith.constant dense<0.000000e+00> : vector<2x10xf32>
    %12 = tpu.matmul %10, %11, %cst_12 {dimension_numbers = #tpu.dot_dimension_numbers<[1], [0], [0], [1], [0, 0, 1, 1], [], []>} : vector<2x84xf32>, vector<84x10xf32>, vector<2x10xf32> -> vector<2x10xf32>
    %c0_13 = arith.constant 0 : index
    %c0_14 = arith.constant 0 : index
    %13 = vector.load %arg6[%c0_13, %c0_14] : memref<1x10xf32, #tpu.memory_space<vmem>>, vector<1x10xf32>
    %14 = vector.broadcast %13 : vector<1x10xf32> to vector<2x10xf32>
    %15 = arith.addf %12, %14 : vector<2x10xf32>
    %c0_15 = arith.constant 0 : index
    %c0_16 = arith.constant 0 : index
    %16 = vector.load %arg7[%c0_15, %c0_16] : memref<2x10xf32, #tpu.memory_space<vmem>>, vector<2x10xf32>
    tpu.vector_store %arg7[%c0_15, %c0_16], %15 {strides = array<i32>} : memref<2x10xf32, #tpu.memory_space<vmem>>, vector<2x10xf32>,
    return
  }
}

</mosaic_0001>

<llo_original>
// kernel: forward.8
$region0: #{forward.8}
  #allocation0 [shape = 'u32[]', space=smem, size = 0x4, offset = 0x4, fixed_abs, tag = 'smem constant byte address 0x4 - core index']
  #allocation1 [shape = 'u32[144,128]{1,0:T(1,128)}', space=vmem, size = 0x12000, scoped, tag = 'internal scratch']
  %s0 = inlined_call_operand.vmem [shape: f32[6,27], index: 0, kind: input, shape index: {}]
  %s1 = inlined_call_operand.vmem [shape: f32[27,2048], index: 1, kind: input, shape index: {}]
  %s2 = inlined_call_operand.vmem [shape: f32[6,1], index: 2, kind: input, shape index: {}]
  %s3 = inlined_call_operand.vmem [shape: f32[6,2048], index: 3, kind: output, shape index: {}]
  %s4 = sld [smem:[#allocation0]]
  $region22: #{forward.8} parent=0
    _
  %s6 = ssub.s32 1, %s4
  %s7 = scalar_select 0, %s6, %s4
  // Predicated region
  $region2: #{forward.8} parent=0 // pred_check
    _
  $region3: #{forward.8} parent=0 // pred_check_branch
    %9 = sbr.rel (0) target = $region5
  $region4: #{forward.8} parent=0 // pred_region
    _
  $region5: #{forward.8} parent=0 // pred_fallthru
    _
  // Predicated region
  $region6: #{forward.8} parent=0 // pred_check
    _
  $region7: #{forward.8} parent=0 // pred_check_branch
    %11 = sbr.rel (0) target = $region9
  $region8: #{forward.8} parent=0 // pred_region
    _
  $region9: #{forward.8} parent=0 // pred_fallthru
    _
  // Predicated region
  $region10: #{forward.8} parent=0 // pred_check
    _
  $region11: #{forward.8} parent=0 // pred_check_branch
    %13 = sbr.rel (0) target = $region13
  $region12: #{forward.8} parent=0 // pred_region
    _
  $region13: #{forward.8} parent=0 // pred_fallthru
    _
  %v14 = vld [vmem:[%s0] sm:$0x3f]
  %v15 = vld [vmem:[%s1] sm:$0xff]
  %v16 = vld [vmem:[%s1 + $0x8] sm:$0xff]
  %v17 = vld [vmem:[%s1 + $0x10] sm:$0xff]
  %v18 = vld [vmem:[%s1 + $0x18] sm:$0xff]
  %v19 = vld [vmem:[%s1 + $0x20] sm:$0xff]
  %v20 = vld [vmem:[%s1 + $0x28] sm:$0xff]
  %v21 = vld [vmem:[%s1 + $0x30] sm:$0xff]
  %v22 = vld [vmem:[%s1 + $0x38] sm:$0xff]
  %v23 = vld [vmem:[%s1 + $0x40] sm:$0xff]
  %v24 = vld [vmem:[%s1 + $0x48] sm:$0xff]
  %v25 = vld [vmem:[%s1 + $0x50] sm:$0xff]
  %v26 = vld [vmem:[%s1 + $0x58] sm:$0xff]
  %v27 = vld [vmem:[%s1 + $0x60] sm:$0xff]
  %v28 = vld [vmem:[%s1 + $0x68] sm:$0xff]
  %v29 = vld [vmem:[%s1 + $0x70] sm:$0xff]
  %v30 = vld [vmem:[%s1 + $0x78] sm:$0xff]
  %v31 = vld [vmem:[%s1 + $0x80] sm:$0xff]
  %v32 = vld [vmem:[%s1 + $0x88] sm:$0xff]
  %v33 = vld [vmem:[%s1 + $0x90] sm:$0xff]
  %v34 = vld [vmem:[%s1 + $0x98] sm:$0xff]
  %v35 = vld [vmem:[%s1 + $0xa0] sm:$0xff]
  %v36 = vld [vmem:[%s1 + $0xa8] sm:$0xff]
  %v37 = vld [vmem:[%s1 + $0xb0] sm:$0xff]
  %v38 = vld [vmem:[%s1 + $0xb8] sm:$0xff]
  %v39 = vld [vmem:[%s1 + $0xc0] sm:$0xff]
  %v40 = vld [vmem:[%s1 + $0xc8] sm:$0xff]
  %v41 = vld [vmem:[%s1 + $0xd0] sm:$0xff]
  %v42 = vld [vmem:[%s1 + $0xd8] sm:$0xff]
  %v43 = vld [vmem:[%s1 + $0xe0] sm:$0xff]
  %v44 = vld [vmem:[%s1 + $0xe8] sm:$0xff]
  %v45 = vld [vmem:[%s1 + $0xf0] sm:$0xff]
  %v46 = vld [vmem:[%s1 + $0xf8] sm:$0xff]
  %v47 = vld [vmem:[%s1 + $0x100] sm:$0xff]
  %v48 = vld [vmem:[%s1 + $0x108] sm:$0xff]
  %v49 = vld [vmem:[%s1 + $0x110] sm:$0xff]
  %v50 = vld [vmem:[%s1 + $0x118] sm:$0xff]
  %v51 = vld [vmem:[%s1 + $0x120] sm:$0xff]
  %v52 = vld [vmem:[%s1 + $0x128] sm:$0xff]
  %v53 = vld [vmem:[%s1 + $0x130] sm:$0xff]
  %v54 = vld [vmem:[%s1 + $0x138] sm:$0xff]
  %v55 = vld [vmem:[%s1 + $0x140] sm:$0xff]
  %v56 = vld [vmem:[%s1 + $0x148] sm:$0xff]
  %v57 = vld [vmem:[%s1 + $0x150] sm:$0xff]
  %v58 = vld [vmem:[%s1 + $0x158] sm:$0xff]
  %v59 = vld [vmem:[%s1 + $0x160] sm:$0xff]
  %v60 = vld [vmem:[%s1 + $0x168] sm:$0xff]
  %v61 = vld [vmem:[%s1 + $0x170] sm:$0xff]
  %v62 = vld [vmem:[%s1 + $0x178] sm:$0xff]
  %v63 = vld [vmem:[%s1 + $0x180] sm:$0x7]
  %v64 = vld [vmem:[%s1 + $0x188] sm:$0x7]
  %v65 = vld [vmem:[%s1 + $0x190] sm:$0x7]
  %v66 = vld [vmem:[%s1 + $0x198] sm:$0x7]
  %v67 = vld [vmem:[%s1 + $0x1a0] sm:$0x7]
  %v68 = vld [vmem:[%s1 + $0x1a8] sm:$0x7]
  %v69 = vld [vmem:[%s1 + $0x1b0] sm:$0x7]
  %v70 = vld [vmem:[%s1 + $0x1b8] sm:$0x7]
  %v71 = vld [vmem:[%s1 + $0x1c0] sm:$0x7]
  %v72 = vld [vmem:[%s1 + $0x1c8] sm:$0x7]
  %v73 = vld [vmem:[%s1 + $0x1d0] sm:$0x7]
  %v74 = vld [vmem:[%s1 + $0x1d8] sm:$0x7]
  %v75 = vld [vmem:[%s1 + $0x1e0] sm:$0x7]
  %v76 = vld [vmem:[%s1 + $0x1e8] sm:$0x7]
  %v77 = vld [vmem:[%s1 + $0x1f0] sm:$0x7]
  %v78 = vld [vmem:[%s1 + $0x1f8] sm:$0x7]
  %v79 = vld [vmem:[%s2] sm:$0x3f]
  %81 = vset.pattern.permute.xlu0 0
  %82 = vperm.xlu0 %81, %v79
  %v83 = vpop.permute.xlu0 %82
  %vm85 = vcmask 220160
  %v87 = vsel %vm85, %v14, 0
  %vm89 = vcmask 1042432
  %v91 = vsel %vm89, %v63, 0
  %v94 = vsel %vm89, %v64, 0
  %v97 = vsel %vm89, %v65, 0
  %v100 = vsel %vm89, %v66, 0
  %v103 = vsel %vm89, %v67, 0
  %v106 = vsel %vm89, %v68, 0
  %v109 = vsel %vm89, %v69, 0
  %v112 = vsel %vm89, %v70, 0
  %v115 = vsel %vm89, %v71, 0
  %v118 = vsel %vm89, %v72, 0
  %v121 = vsel %vm89, %v73, 0
  %v124 = vsel %vm89, %v74, 0
  %v127 = vsel %vm89, %v75, 0
  %v130 = vsel %vm89, %v76, 0
  %v133 = vsel %vm89, %v77, 0
  %v136 = vsel %vm89, %v78, 0
  %138 = vmatprep.subr.mxu0 %v16
  %139 = vmatpush1.msra.mxu0 %v15
  %140 = vmatprep.subr.mxu0 %v32
  %141 = vmatpush1.msra.mxu0 %v31
  %142 = vmatprep.subr.mxu0 %v48
  %143 = vmatpush1.msra.mxu0 %v47
  %144 = vmatprep.subr.mxu0 %v94
  %145 = vmatpush1.msra.mxu0 %v91
  %146 = vmatprep.subr.mxu0 0.0
  %147 = vmatpush1.msra.mxu0 0.0
  %148 = vmatprep.subr.mxu0 0.0
  %149 = vmatpush1.msra.mxu0 0.0
  %150 = vmatprep.subr.mxu0 0.0
  %151 = vmatpush1.msra.mxu0 0.0
  %152 = vmatprep.subr.mxu0 0.0
  %153 = vmatpush1.msra.mxu0 0.0
  %154 = vmatprep.subr.mxu0 0.0
  %155 = vmatpush1.msra.mxu0 0.0
  %156 = vmatprep.subr.mxu0 0.0
  %157 = vmatpush1.msra.mxu0 0.0
  %158 = vmatprep.subr.mxu0 0.0
  %159 = vmatpush1.msra.mxu0 0.0
  %160 = vmatprep.subr.mxu0 0.0
  %161 = vmatpush1.msra.mxu0 0.0
  %162 = vmatprep.subr.mxu0 0.0
  %163 = vmatpush1.msra.mxu0 0.0
  %164 = vmatprep.subr.mxu0 0.0
  %165 = vmatpush1.msra.mxu0 0.0
  %166 = vmatprep.subr.mxu0 0.0
  %167 = vmatpush1.msra.mxu0 0.0
  %168 = vmatprep.subr.mxu0 0.0
  %169 = vmatpush1.msra.mxu0 0.0
  %170 = vmatprep.subr.mxu0 0.0
  %171 = vmatpush1.msra.mxu0 0.0
  %172 = vmatprep.subr.mxu0 0.0
  %173 = vmatpush1.msra.mxu0 0.0
  %174 = vmatprep.subr.mxu0 0.0
  %175 = vmatpush1.msra.mxu0 0.0
  %176 = vmatprep.subr.mxu0 0.0
  %177 = vmatpush1.msra.mxu0 0.0
  %178 = vmatprep.subr.mxu0 0.0
  %179 = vmatpush1.msra.mxu0 0.0
  %180 = vmatprep.subr.mxu0 0.0
  %181 = vmatpush1.msra.mxu0 0.0
  %182 = vmatprep.subr.mxu0 0.0
  %183 = vmatpush1.msra.mxu0 0.0
  %184 = vmatprep.subr.mxu0 0.0
  %185 = vmatpush1.msra.mxu0 0.0
  %186 = vmatprep.subr.mxu0 0.0
  %187 = vmatpush1.msra.mxu0 0.0
  %188 = vmatprep.subr.mxu0 0.0
  %189 = vmatpush1.msra.mxu0 0.0
  %190 = vmatprep.subr.mxu0 0.0
  %191 = vmatpush1.msra.mxu0 0.0
  %192 = vmatprep.subr.mxu0 0.0
  %193 = vmatpush1.msra.mxu0 0.0
  %194 = vmatprep.subr.mxu0 0.0
  %195 = vmatpush1.msra.mxu0 0.0
  %196 = vmatprep.subr.mxu0 0.0
  %197 = vmatpush1.msra.mxu0 0.0
  %198 = vmatprep.subr.mxu0 0.0
  %199 = vmatpush1.msra.mxu0 0.0
  %200 = vmatprep.subr.mxu0 0.0
  %201 = vmatpush1.msra.mxu0 0.0
  %202 = vmatprep.mubr.f32.mxu0 0.0
  %203 = vmatmul.mubr.f32.gmra.mrb[0].mxu0 %v87
  %v204 = vpop.f32.mrb[0].mxu0
  %v205 = vadd.f32 %v83, %v204
  %v206 = vpop.f32.mrb[0].mxu0
  %v207 = vadd.f32 %v83, %v206
  %208 = vdwg.mxu0
  %209 = vmatprep.subr.mxu0 %v18
  %210 = vmatpush1.msra.mxu0 %v17
  %211 = vmatprep.subr.mxu0 %v34
  %212 = vmatpush1.msra.mxu0 %v33
  %213 = vmatprep.subr.mxu0 %v50
  %214 = vmatpush1.msra.mxu0 %v49
  %215 = vmatprep.subr.mxu0 %v100
  %216 = vmatpush1.msra.mxu0 %v97
  %217 = vmatprep.subr.mxu0 0.0
  %218 = vmatpush1.msra.mxu0 0.0
  %219 = vmatprep.subr.mxu0 0.0
  %220 = vmatpush1.msra.mxu0 0.0
  %221 = vmatprep.subr.mxu0 0.0
  %222 = vmatpush1.msra.mxu0 0.0
  %223 = vmatprep.subr.mxu0 0.0
  %224 = vmatpush1.msra.mxu0 0.0
  %225 = vmatprep.subr.mxu0 0.0
  %226 = vmatpush1.msra.mxu0 0.0
  %227 = vmatprep.subr.mxu0 0.0
  %228 = vmatpush1.msra.mxu0 0.0
  %229 = vmatprep.subr.mxu0 0.0
  %230 = vmatpush1.msra.mxu0 0.0
  %231 = vmatprep.subr.mxu0 0.0
  %232 = vmatpush1.msra.mxu0 0.0
  %233 = vmatprep.subr.mxu0 0.0
  %234 = vmatpush1.msra.mxu0 0.0
  %235 = vmatprep.subr.mxu0 0.0
  %236 = vmatpush1.msra.mxu0 0.0
  %237 = vmatprep.subr.mxu0 0.0
  %238 = vmatpush1.msra.mxu0 0.0
  %239 = vmatprep.subr.mxu0 0.0
  %240 = vmatpush1.msra.mxu0 0.0
  %241 = vmatprep.subr.mxu0 0.0
  %242 = vmatpush1.msra.mxu0 0.0
  %243 = vmatprep.subr.mxu0 0.0
  %244 = vmatpush1.msra.mxu0 0.0
  %245 = vmatprep.subr.mxu0 0.0
  %246 = vmatpush1.msra.mxu0 0.0
  %247 = vmatprep.subr.mxu0 0.0
  %248 = vmatpush1.msra.mxu0 0.0
  %249 = vmatprep.subr.mxu0 0.0
  %250 = vmatpush1.msra.mxu0 0.0
  %251 = vmatprep.subr.mxu0 0.0
  %252 = vmatpush1.msra.mxu0 0.0
  %253 = vmatprep.subr.mxu0 0.0
  %254 = vmatpush1.msra.mxu0 0.0
  %255 = vmatprep.subr.mxu0 0.0
  %256 = vmatpush1.msra.mxu0 0.0
  %257 = vmatprep.subr.mxu0 0.0
  %258 = vmatpush1.msra.mxu0 0.0
  %259 = vmatprep.subr.mxu0 0.0
  %260 = vmatpush1.msra.mxu0 0.0
  %261 = vmatprep.subr.mxu0 0.0
  %262 = vmatpush1.msra.mxu0 0.0
  %263 = vmatprep.subr.mxu0 0.0
  %264 = vmatpush1.msra.mxu0 0.0
  %265 = vmatprep.subr.mxu0 0.0
  %266 = vmatpush1.msra.mxu0 0.0
  %267 = vmatprep.subr.mxu0 0.0
  %268 = vmatpush1.msra.mxu0 0.0
  %269 = vmatprep.subr.mxu0 0.0
  %270 = vmatpush1.msra.mxu0 0.0
  %271 = vmatprep.subr.mxu0 0.0
  %272 = vmatpush1.msra.mxu0 0.0
  %273 = vmatprep.mubr.f32.mxu0 0.0
  %274 = vmatmul.mubr.f32.gmra.mrb[0].mxu0 %v87
  %v275 = vpop.f32.mrb[0].mxu0
  %v276 = vadd.f32 %v83, %v275
  %v277 = vpop.f32.mrb[0].mxu0
  %v278 = vadd.f32 %v83, %v277
  %279 = vdwg.mxu0
  %280 = vmatprep.subr.mxu0 %v20
  %281 = vmatpush1.msra.mxu0 %v19
  %282 = vmatprep.subr.mxu0 %v36
  %283 = vmatpush1.msra.mxu0 %v35
  %284 = vmatprep.subr.mxu0 %v52
  %285 = vmatpush1.msra.mxu0 %v51
  %286 = vmatprep.subr.mxu0 %v106
  %287 = vmatpush1.msra.mxu0 %v103
  %288 = vmatprep.subr.mxu0 0.0
  %289 = vmatpush1.msra.mxu0 0.0
  %290 = vmatprep.subr.mxu0 0.0
  %291 = vmatpush1.msra.mxu0 0.0
  %292 = vmatprep.subr.mxu0 0.0
  %293 = vmatpush1.msra.mxu0 0.0
  %294 = vmatprep.subr.mxu0 0.0
  %295 = vmatpush1.msra.mxu0 0.0
  %296 = vmatprep.subr.mxu0 0.0
  %297 = vmatpush1.msra.mxu0 0.0
  %298 = vmatprep.subr.mxu0 0.0
  %299 = vmatpush1.msra.mxu0 0.0
  %300 = vmatprep.subr.mxu0 0.0
  %301 = vmatpush1.msra.mxu0 0.0
  %302 = vmatprep.subr.mxu0 0.0
  %303 = vmatpush1.msra.mxu0 0.0
  %304 = vmatprep.subr.mxu0 0.0
  %305 = vmatpush1.msra.mxu0 0.0
  %306 = vmatprep.subr.mxu0 0.0
  %307 = vmatpush1.msra.mxu0 0.0
  %308 = vmatprep.subr.mxu0 0.0
  %309 = vmatpush1.msra.mxu0 0.0
  %310 = vmatprep.subr.mxu0 0.0
  %311 = vmatpush1.msra.mxu0 0.0
  %312 = vmatprep.subr.mxu0 0.0
  %313 = vmatpush1.msra.mxu0 0.0
  %314 = vmatprep.subr.mxu0 0.0
  %315 = vmatpush1.msra.mxu0 0.0
  %316 = vmatprep.subr.mxu0 0.0
  %317 = vmatpush1.msra.mxu0 0.0
  %318 = vmatprep.subr.mxu0 0.0
  %319 = vmatpush1.msra.mxu0 0.0
  %320 = vmatprep.subr.mxu0 0.0
  %321 = vmatpush1.msra.mxu0 0.0
  %322 = vmatprep.subr.mxu0 0.0
  %323 = vmatpush1.msra.mxu0 0.0
  %324 = vmatprep.subr.mxu0 0.0
  %325 = vmatpush1.msra.mxu0 0.0
  %326 = vmatprep.subr.mxu0 0.0
  %327 = vmatpush1.msra.mxu0 0.0
  %328 = vmatprep.subr.mxu0 0.0
  %329 = vmatpush1.msra.mxu0 0.0
  %330 = vmatprep.subr.mxu0 0.0
  %331 = vmatpush1.msra.mxu0 0.0
  %332 = vmatprep.subr.mxu0 0.0
  %333 = vmatpush1.msra.mxu0 0.0
  %334 = vmatprep.subr.mxu0 0.0
  %335 = vmatpush1.msra.mxu0 0.0
  %336 = vmatprep.subr.mxu0 0.0
  %337 = vmatpush1.msra.mxu0 0.0
  %338 = vmatprep.subr.mxu0 0.0
  %339 = vmatpush1.msra.mxu0 0.0
  %340 = vmatprep.subr.mxu0 0.0
  %341 = vmatpush1.msra.mxu0 0.0
  %342 = vmatprep.subr.mxu0 0.0
  %343 = vmatpush1.msra.mxu0 0.0
  %344 = vmatprep.mubr.f32.mxu0 0.0
  %345 = vmatmul.mubr.f32.gmra.mrb[0].mxu0 %v87
  %v346 = vpop.f32.mrb[0].mxu0
  %v347 = vadd.f32 %v83, %v346
  %v348 = vpop.f32.mrb[0].mxu0
  %v349 = vadd.f32 %v83, %v348
  %350 = vdwg.mxu0
  %351 = vmatprep.subr.mxu0 %v22
  %352 = vmatpush1.msra.mxu0 %v21
  %353 = vmatprep.subr.mxu0 %v38
  %354 = vmatpush1.msra.mxu0 %v37
  %355 = vmatprep.subr.mxu0 %v54
  %356 = vmatpush1.msra.mxu0 %v53
  %357 = vmatprep.subr.mxu0 %v112
  %358 = vmatpush1.msra.mxu0 %v109
  %359 = vmatprep.subr.mxu0 0.0
  %360 = vmatpush1.msra.mxu0 0.0
  %361 = vmatprep.subr.mxu0 0.0
  %362 = vmatpush1.msra.mxu0 0.0
  %363 = vmatprep.subr.mxu0 0.0
  %364 = vmatpush1.msra.mxu0 0.0
  %365 = vmatprep.subr.mxu0 0.0
  %366 = vmatpush1.msra.mxu0 0.0
  %367 = vmatprep.subr.mxu0 0.0
  %368 = vmatpush1.msra.mxu0 0.0
  %369 = vmatprep.subr.mxu0 0.0
  %370 = vmatpush1.msra.mxu0 0.0
  %371 = vmatprep.subr.mxu0 0.0
  %372 = vmatpush1.msra.mxu0 0.0
  %373 = vmatprep.subr.mxu0 0.0
  %374 = vmatpush1.msra.mxu0 0.0
  %375 = vmatprep.subr.mxu0 0.0
  %376 = vmatpush1.msra.mxu0 0.0
  %377 = vmatprep.subr.mxu0 0.0
  %378 = vmatpush1.msra.mxu0 0.0
  %379 = vmatprep.subr.mxu0 0.0
  %380 = vmatpush1.msra.mxu0 0.0
  %381 = vmatprep.subr.mxu0 0.0
  %382 = vmatpush1.msra.mxu0 0.0
  %383 = vmatprep.subr.mxu0 0.0
  %384 = vmatpush1.msra.mxu0 0.0
  %385 = vmatprep.subr.mxu0 0.0
  %386 = vmatpush1.msra.mxu0 0.0
  %387 = vmatprep.subr.mxu0 0.0
  %388 = vmatpush1.msra.mxu0 0.0
  %389 = vmatprep.subr.mxu0 0.0
  %390 = vmatpush1.msra.mxu0 0.0
  %391 = vmatprep.subr.mxu0 0.0
  %392 = vmatpush1.msra.mxu0 0.0
  %393 = vmatprep.subr.mxu0 0.0
  %394 = vmatpush1.msra.mxu0 0.0
  %395 = vmatprep.subr.mxu0 0.0
  %396 = vmatpush1.msra.mxu0 0.0
  %397 = vmatprep.subr.mxu0 0.0
  %398 = vmatpush1.msra.mxu0 0.0
  %399 = vmatprep.subr.mxu0 0.0
  %400 = vmatpush1.msra.mxu0 0.0
  %401 = vmatprep.subr.mxu0 0.0
  %402 = vmatpush1.msra.mxu0 0.0
  %403 = vmatprep.subr.mxu0 0.0
  %404 = vmatpush1.msra.mxu0 0.0
  %405 = vmatprep.subr.mxu0 0.0
  %406 = vmatpush1.msra.mxu0 0.0
  %407 = vmatprep.subr.mxu0 0.0
  %408 = vmatpush1.msra.mxu0 0.0
  %409 = vmatprep.subr.mxu0 0.0
  %410 = vmatpush1.msra.mxu0 0.0
  %411 = vmatprep.subr.mxu0 0.0
  %412 = vmatpush1.msra.mxu0 0.0
  %413 = vmatprep.subr.mxu0 0.0
  %414 = vmatpush1.msra.mxu0 0.0
  %415 = vmatprep.mubr.f32.mxu0 0.0
  %416 = vmatmul.mubr.f32.gmra.mrb[0].mxu0 %v87
  %v417 = vpop.f32.mrb[0].mxu0
  %v418 = vadd.f32 %v83, %v417
  %v419 = vpop.f32.mrb[0].mxu0
  %v420 = vadd.f32 %v83, %v419
  %421 = vdwg.mxu0
  %422 = vmatprep.subr.mxu0 %v24
  %423 = vmatpush1.msra.mxu0 %v23
  %424 = vmatprep.subr.mxu0 %v40
  %425 = vmatpush1.msra.mxu0 %v39
  %426 = vmatprep.subr.mxu0 %v56
  %427 = vmatpush1.msra.mxu0 %v55
  %428 = vmatprep.subr.mxu0 %v118
  %429 = vmatpush1.msra.mxu0 %v115
  %430 = vmatprep.subr.mxu0 0.0
  %431 = vmatpush1.msra.mxu0 0.0
  %432 = vmatprep.subr.mxu0 0.0
  %433 = vmatpush1.msra.mxu0 0.0
  %434 = vmatprep.subr.mxu0 0.0
  %435 = vmatpush1.msra.mxu0 0.0
  %436 = vmatprep.subr.mxu0 0.0
  %437 = vmatpush1.msra.mxu0 0.0
  %438 = vmatprep.subr.mxu0 0.0
  %439 = vmatpush1.msra.mxu0 0.0
  %440 = vmatprep.subr.mxu0 0.0
  %441 = vmatpush1.msra.mxu0 0.0
  %442 = vmatprep.subr.mxu0 0.0
  %443 = vmatpush1.msra.mxu0 0.0
  %444 = vmatprep.subr.mxu0 0.0
  %445 = vmatpush1.msra.mxu0 0.0
  %446 = vmatprep.subr.mxu0 0.0
  %447 = vmatpush1.msra.mxu0 0.0
  %448 = vmatprep.subr.mxu0 0.0
  %449 = vmatpush1.msra.mxu0 0.0
  %450 = vmatprep.subr.mxu0 0.0
  %451 = vmatpush1.msra.mxu0 0.0
  %452 = vmatprep.subr.mxu0 0.0
  %453 = vmatpush1.msra.mxu0 0.0
  %454 = vmatprep.subr.mxu0 0.0
  %455 = vmatpush1.msra.mxu0 0.0
  %456 = vmatprep.subr.mxu0 0.0
  %457 = vmatpush1.msra.mxu0 0.0
  %458 = vmatprep.subr.mxu0 0.0
  %459 = vmatpush1.msra.mxu0 0.0
  %460 = vmatprep.subr.mxu0 0.0
  %461 = vmatpush1.msra.mxu0 0.0
  %462 = vmatprep.subr.mxu0 0.0
  %463 = vmatpush1.msra.mxu0 0.0
  %464 = vmatprep.subr.mxu0 0.0
  %465 = vmatpush1.msra.mxu0 0.0
  %466 = vmatprep.subr.mxu0 0.0
  %467 = vmatpush1.msra.mxu0 0.0
  %468 = vmatprep.subr.mxu0 0.0
  %469 = vmatpush1.msra.mxu0 0.0
  %470 = vmatprep.subr.mxu0 0.0
  %471 = vmatpush1.msra.mxu0 0.0
  %472 = vmatprep.subr.mxu0 0.0
  %473 = vmatpush1.msra.mxu0 0.0
  %474 = vmatprep.subr.mxu0 0.0
  %475 = vmatpush1.msra.mxu0 0.0
  %476 = vmatprep.subr.mxu0 0.0
  %477 = vmatpush1.msra.mxu0 0.0
  %478 = vmatprep.subr.mxu0 0.0
  %479 = vmatpush1.msra.mxu0 0.0
  %480 = vmatprep.subr.mxu0 0.0
  %481 = vmatpush1.msra.mxu0 0.0
  %482 = vmatprep.subr.mxu0 0.0
  %483 = vmatpush1.msra.mxu0 0.0
  %484 = vmatprep.subr.mxu0 0.0
  %485 = vmatpush1.msra.mxu0 0.0
  %486 = vmatprep.mubr.f32.mxu0 0.0
  %487 = vmatmul.mubr.f32.gmra.mrb[0].mxu0 %v87
  %v488 = vpop.f32.mrb[0].mxu0
  %v489 = vadd.f32 %v83, %v488
  %v490 = vpop.f32.mrb[0].mxu0
  %v491 = vadd.f32 %v83, %v490
  %492 = vdwg.mxu0
  %493 = vmatprep.subr.mxu0 %v26
  %494 = vmatpush1.msra.mxu0 %v25
  %495 = vmatprep.subr.mxu0 %v42
  %496 = vmatpush1.msra.mxu0 %v41
  %497 = vmatprep.subr.mxu0 %v58
  %498 = vmatpush1.msra.mxu0 %v57
  %499 = vmatprep.subr.mxu0 %v124
  %500 = vmatpush1.msra.mxu0 %v121
  %501 = vmatprep.subr.mxu0 0.0
  %502 = vmatpush1.msra.mxu0 0.0
  %503 = vmatprep.subr.mxu0 0.0
  %504 = vmatpush1.msra.mxu0 0.0
  %505 = vmatprep.subr.mxu0 0.0
  %506 = vmatpush1.msra.mxu0 0.0
  %507 = vmatprep.subr.mxu0 0.0
  %508 = vmatpush1.msra.mxu0 0.0
  %509 = vmatprep.subr.mxu0 0.0
  %510 = vmatpush1.msra.mxu0 0.0
  %511 = vmatprep.subr.mxu0 0.0
  %512 = vmatpush1.msra.mxu0 0.0
  %513 = vmatprep.subr.mxu0 0.0
  %514 = vmatpush1.msra.mxu0 0.0
  %515 = vmatprep.subr.mxu0 0.0
  %516 = vmatpush1.msra.mxu0 0.0
  %517 = vmatprep.subr.mxu0 0.0
  %518 = vmatpush1.msra.mxu0 0.0
  %519 = vmatprep.subr.mxu0 0.0
  %520 = vmatpush1.msra.mxu0 0.0
  %521 = vmatprep.subr.mxu0 0.0
  %522 = vmatpush1.msra.mxu0 0.0
  %523 = vmatprep.subr.mxu0 0.0
  %524 = vmatpush1.msra.mxu0 0.0
  %525 = vmatprep.subr.mxu0 0.0
  %526 = vmatpush1.msra.mxu0 0.0
  %527 = vmatprep.subr.mxu0 0.0
  %528 = vmatpush1.msra.mxu0 0.0
  %529 = vmatprep.subr.mxu0 0.0
  %530 = vmatpush1.msra.mxu0 0.0
  %531 = vmatprep.subr.mxu0 0.0
  %532 = vmatpush1.msra.mxu0 0.0
  %533 = vmatprep.subr.mxu0 0.0
  %534 = vmatpush1.msra.mxu0 0.0
  %535 = vmatprep.subr.mxu0 0.0
  %536 = vmatpush1.msra.mxu0 0.0
  %537 = vmatprep.subr.mxu0 0.0
  %538 = vmatpush1.msra.mxu0 0.0
  %539 = vmatprep.subr.mxu0 0.0
  %540 = vmatpush1.msra.mxu0 0.0
  %541 = vmatprep.subr.mxu0 0.0
  %542 = vmatpush1.msra.mxu0 0.0
  %543 = vmatprep.subr.mxu0 0.0
  %544 = vmatpush1.msra.mxu0 0.0
  %545 = vmatprep.subr.mxu0 0.0
  %546 = vmatpush1.msra.mxu0 0.0
  %547 = vmatprep.subr.mxu0 0.0
  %548 = vmatpush1.msra.mxu0 0.0
  %549 = vmatprep.subr.mxu0 0.0
  %550 = vmatpush1.msra.mxu0 0.0
  %551 = vmatprep.subr.mxu0 0.0
  %552 = vmatpush1.msra.mxu0 0.0
  %553 = vmatprep.subr.mxu0 0.0
  %554 = vmatpush1.msra.mxu0 0.0
  %555 = vmatprep.subr.mxu0 0.0
  %556 = vmatpush1.msra.mxu0 0.0
  %557 = vmatprep.mubr.f32.mxu0 0.0
  %558 = vmatmul.mubr.f32.gmra.mrb[0].mxu0 %v87
  %v559 = vpop.f32.mrb[0].mxu0
  %v560 = vadd.f32 %v83, %v559
  %v561 = vpop.f32.mrb[0].mxu0
  %v562 = vadd.f32 %v83, %v561
  %563 = vdwg.mxu0
  %564 = vmatprep.subr.mxu0 %v28
  %565 = vmatpush1.msra.mxu0 %v27
  %566 = vmatprep.subr.mxu0 %v44
  %567 = vmatpush1.msra.mxu0 %v43
  %568 = vmatprep.subr.mxu0 %v60
  %569 = vmatpush1.msra.mxu0 %v59
  %570 = vmatprep.subr.mxu0 %v130
  %571 = vmatpush1.msra.mxu0 %v127
  %572 = vmatprep.subr.mxu0 0.0
  %573 = vmatpush1.msra.mxu0 0.0
  %574 = vmatprep.subr.mxu0 0.0
  %575 = vmatpush1.msra.mxu0 0.0
  %576 = vmatprep.subr.mxu0 0.0
  %577 = vmatpush1.msra.mxu0 0.0
  %578 = vmatprep.subr.mxu0 0.0
  %579 = vmatpush1.msra.mxu0 0.0
  %580 = vmatprep.subr.mxu0 0.0
  %581 = vmatpush1.msra.mxu0 0.0
  %582 = vmatprep.subr.mxu0 0.0
  %583 = vmatpush1.msra.mxu0 0.0
  %584 = vmatprep.subr.mxu0 0.0
  %585 = vmatpush1.msra.mxu0 0.0
  %586 = vmatprep.subr.mxu0 0.0
  %587 = vmatpush1.msra.mxu0 0.0
  %588 = vmatprep.subr.mxu0 0.0
  %589 = vmatpush1.msra.mxu0 0.0
  %590 = vmatprep.subr.mxu0 0.0
  %591 = vmatpush1.msra.mxu0 0.0
  %592 = vmatprep.subr.mxu0 0.0
  %593 = vmatpush1.msra.mxu0 0.0
  %594 = vmatprep.subr.mxu0 0.0
  %595 = vmatpush1.msra.mxu0 0.0
  %596 = vmatprep.subr.mxu0 0.0
  %597 = vmatpush1.msra.mxu0 0.0
  %598 = vmatprep.subr.mxu0 0.0
  %599 = vmatpush1.msra.mxu0 0.0
  %600 = vmatprep.subr.mxu0 0.0
  %601 = vmatpush1.msra.mxu0 0.0
  %602 = vmatprep.subr.mxu0 0.0
  %603 = vmatpush1.msra.mxu0 0.0
  %604 = vmatprep.subr.mxu0 0.0
  %605 = vmatpush1.msra.mxu0 0.0
  %606 = vmatprep.subr.mxu0 0.0
  %607 = vmatpush1.msra.mxu0 0.0
  %608 = vmatprep.subr.mxu0 0.0
  %609 = vmatpush1.msra.mxu0 0.0
  %610 = vmatprep.subr.mxu0 0.0
  %611 = vmatpush1.msra.mxu0 0.0
  %612 = vmatprep.subr.mxu0 0.0
  %613 = vmatpush1.msra.mxu0 0.0
  %614 = vmatprep.subr.mxu0 0.0
  %615 = vmatpush1.msra.mxu0 0.0
  %616 = vmatprep.subr.mxu0 0.0
  %617 = vmatpush1.msra.mxu0 0.0
  %618 = vmatprep.subr.mxu0 0.0
  %619 = vmatpush1.msra.mxu0 0.0
  %620 = vmatprep.subr.mxu0 0.0
  %621 = vmatpush1.msra.mxu0 0.0
  %622 = vmatprep.subr.mxu0 0.0
  %623 = vmatpush1.msra.mxu0 0.0
  %624 = vmatprep.subr.mxu0 0.0
  %625 = vmatpush1.msra.mxu0 0.0
  %626 = vmatprep.subr.mxu0 0.0
  %627 = vmatpush1.msra.mxu0 0.0
  %628 = vmatprep.mubr.f32.mxu0 0.0
  %629 = vmatmul.mubr.f32.gmra.mrb[0].mxu0 %v87
  %v630 = vpop.f32.mrb[0].mxu0
  %v631 = vadd.f32 %v83, %v630
  %v632 = vpop.f32.mrb[0].mxu0
  %v633 = vadd.f32 %v83, %v632
  %634 = vdwg.mxu0
  %635 = vmatprep.subr.mxu0 %v30
  %636 = vmatpush1.msra.mxu0 %v29
  %637 = vmatprep.subr.mxu0 %v46
  %638 = vmatpush1.msra.mxu0 %v45
  %639 = vmatprep.subr.mxu0 %v62
  %640 = vmatpush1.msra.mxu0 %v61
  %641 = vmatprep.subr.mxu0 %v136
  %642 = vmatpush1.msra.mxu0 %v133
  %643 = vmatprep.subr.mxu0 0.0
  %644 = vmatpush1.msra.mxu0 0.0
  %645 = vmatprep.subr.mxu0 0.0
  %646 = vmatpush1.msra.mxu0 0.0
  %647 = vmatprep.subr.mxu0 0.0
  %648 = vmatpush1.msra.mxu0 0.0
  %649 = vmatprep.subr.mxu0 0.0
  %650 = vmatpush1.msra.mxu0 0.0
  %651 = vmatprep.subr.mxu0 0.0
  %652 = vmatpush1.msra.mxu0 0.0
  %653 = vmatprep.subr.mxu0 0.0
  %654 = vmatpush1.msra.mxu0 0.0
  %655 = vmatprep.subr.mxu0 0.0
  %656 = vmatpush1.msra.mxu0 0.0
  %657 = vmatprep.subr.mxu0 0.0
  %658 = vmatpush1.msra.mxu0 0.0
  %659 = vmatprep.subr.mxu0 0.0
  %660 = vmatpush1.msra.mxu0 0.0
  %661 = vmatprep.subr.mxu0 0.0
  %662 = vmatpush1.msra.mxu0 0.0
  %663 = vmatprep.subr.mxu0 0.0
  %664 = vmatpush1.msra.mxu0 0.0
  %665 = vmatprep.subr.mxu0 0.0
  %666 = vmatpush1.msra.mxu0 0.0
  %667 = vmatprep.subr.mxu0 0.0
  %668 = vmatpush1.msra.mxu0 0.0
  %669 = vmatprep.subr.mxu0 0.0
  %670 = vmatpush1.msra.mxu0 0.0
  %671 = vmatprep.subr.mxu0 0.0
  %672 = vmatpush1.msra.mxu0 0.0
  %673 = vmatprep.subr.mxu0 0.0
  %674 = vmatpush1.msra.mxu0 0.0
  %675 = vmatprep.subr.mxu0 0.0
  %676 = vmatpush1.msra.mxu0 0.0
  %677 = vmatprep.subr.mxu0 0.0
  %678 = vmatpush1.msra.mxu0 0.0
  %679 = vmatprep.subr.mxu0 0.0
  %680 = vmatpush1.msra.mxu0 0.0
  %681 = vmatprep.subr.mxu0 0.0
  %682 = vmatpush1.msra.mxu0 0.0
  %683 = vmatprep.subr.mxu0 0.0
  %684 = vmatpush1.msra.mxu0 0.0
  %685 = vmatprep.subr.mxu0 0.0
  %686 = vmatpush1.msra.mxu0 0.0
  %687 = vmatprep.subr.mxu0 0.0
  %688 = vmatpush1.msra.mxu0 0.0
  %689 = vmatprep.subr.mxu0 0.0
  %690 = vmatpush1.msra.mxu0 0.0
  %691 = vmatprep.subr.mxu0 0.0
  %692 = vmatpush1.msra.mxu0 0.0
  %693 = vmatprep.subr.mxu0 0.0
  %694 = vmatpush1.msra.mxu0 0.0
  %695 = vmatprep.subr.mxu0 0.0
  %696 = vmatpush1.msra.mxu0 0.0
  %697 = vmatprep.subr.mxu0 0.0
  %698 = vmatpush1.msra.mxu0 0.0
  %699 = vmatprep.mubr.f32.mxu0 0.0
  %700 = vmatmul.mubr.f32.gmra.mrb[0].mxu0 %v87
  %v701 = vpop.f32.mrb[0].mxu0
  %v702 = vadd.f32 %v83, %v701
  %v703 = vpop.f32.mrb[0].mxu0
  %v704 = vadd.f32 %v83, %v703
  %705 = vdwg.mxu0
  %706 = vst [vmem:[%s3] sm:$0x3f] %v205
  %707 = vst [vmem:[%s3 + $0x8] sm:$0x3f] %v207
  %708 = vst [vmem:[%s3 + $0x10] sm:$0x3f] %v276
  %709 = vst [vmem:[%s3 + $0x18] sm:$0x3f] %v278
  %710 = vst [vmem:[%s3 + $0x20] sm:$0x3f] %v347
  %711 = vst [vmem:[%s3 + $0x28] sm:$0x3f] %v349
  %712 = vst [vmem:[%s3 + $0x30] sm:$0x3f] %v418
  %713 = vst [vmem:[%s3 + $0x38] sm:$0x3f] %v420
  %714 = vst [vmem:[%s3 + $0x40] sm:$0x3f] %v489
  %715 = vst [vmem:[%s3 + $0x48] sm:$0x3f] %v491
  %716 = vst [vmem:[%s3 + $0x50] sm:$0x3f] %v560
  %717 = vst [vmem:[%s3 + $0x58] sm:$0x3f] %v562
  %718 = vst [vmem:[%s3 + $0x60] sm:$0x3f] %v631
  %719 = vst [vmem:[%s3 + $0x68] sm:$0x3f] %v633
  %720 = vst [vmem:[%s3 + $0x70] sm:$0x3f] %v702
  %721 = vst [vmem:[%s3 + $0x78] sm:$0x3f] %v704
  // Predicated region
  $region14: #{forward.8} parent=0 // pred_check
    _
  $region15: #{forward.8} parent=0 // pred_check_branch
    %723 = sbr.rel (0) target = $region17
  $region16: #{forward.8} parent=0 // pred_region
    _
  $region17: #{forward.8} parent=0 // pred_fallthru
    _
  // Predicated region
  $region18: #{forward.8} parent=0 // pred_check
    _
  $region19: #{forward.8} parent=0 // pred_check_branch
    %725 = sbr.rel (0) target = $region21
  $region20: #{forward.8} parent=0 // pred_region
    _
  $region21: #{forward.8} parent=0 // pred_fallthru
    _

// kernel: forward.9
$region0: #{forward.9}
  #allocation0 [shape = 'u32[]', space=smem, size = 0x4, offset = 0x4, fixed_abs, tag = 'smem constant byte address 0x4 - core index']
  #allocation1 [shape = 'u32[144,128]{1,0:T(1,128)}', space=vmem, size = 0x12000, scoped, tag = 'internal scratch']
  %s0 = inlined_call_operand.vmem [shape: f32[6,54], index: 0, kind: input, shape index: {}]
  %s1 = inlined_call_operand.vmem [shape: f32[54,2048], index: 1, kind: input, shape index: {}]
  %s2 = inlined_call_operand.vmem [shape: f32[6,1], index: 2, kind: input, shape index: {}]
  %s3 = inlined_call_operand.vmem [shape: f32[6,2048], index: 3, kind: output, shape index: {}]
  %s4 = sld [smem:[#allocation0]]
  $region22: #{forward.9} parent=0
    _
  %s6 = ssub.s32 1, %s4
  %s7 = scalar_select 0, %s6, %s4
  // Predicated region
  $region2: #{forward.9} parent=0 // pred_check
    _
  $region3: #{forward.9} parent=0 // pred_check_branch
    %9 = sbr.rel (0) target = $region5
  $region4: #{forward.9} parent=0 // pred_region
    _
  $region5: #{forward.9} parent=0 // pred_fallthru
    _
  // Predicated region
  $region6: #{forward.9} parent=0 // pred_check
    _
  $region7: #{forward.9} parent=0 // pred_check_branch
    %11 = sbr.rel (0) target = $region9
  $region8: #{forward.9} parent=0 // pred_region
    _
  $region9: #{forward.9} parent=0 // pred_fallthru
    _
  // Predicated region
  $region10: #{forward.9} parent=0 // pred_check
    _
  $region11: #{forward.9} parent=0 // pred_check_branch
    %13 = sbr.rel (0) target = $region13
  $region12: #{forward.9} parent=0 // pred_region
    _
  $region13: #{forward.9} parent=0 // pred_fallthru
    _
  %v14 = vld [vmem:[%s0] sm:$0x3f]
  %v15 = vld [vmem:[%s1] sm:$0xff]
  %v16 = vld [vmem:[%s1 + $0x8] sm:$0xff]
  %v17 = vld [vmem:[%s1 + $0x10] sm:$0xff]
  %v18 = vld [vmem:[%s1 + $0x18] sm:$0xff]
  %v19 = vld [vmem:[%s1 + $0x20] sm:$0xff]
  %v20 = vld [vmem:[%s1 + $0x28] sm:$0xff]
  %v21 = vld [vmem:[%s1 + $0x30] sm:$0xff]
  %v22 = vld [vmem:[%s1 + $0x38] sm:$0xff]
  %v23 = vld [vmem:[%s1 + $0x40] sm:$0xff]
  %v24 = vld [vmem:[%s1 + $0x48] sm:$0xff]
  %v25 = vld [vmem:[%s1 + $0x50] sm:$0xff]
  %v26 = vld [vmem:[%s1 + $0x58] sm:$0xff]
  %v27 = vld [vmem:[%s1 + $0x60] sm:$0xff]
  %v28 = vld [vmem:[%s1 + $0x68] sm:$0xff]
  %v29 = vld [vmem:[%s1 + $0x70] sm:$0xff]
  %v30 = vld [vmem:[%s1 + $0x78] sm:$0xff]
  %v31 = vld [vmem:[%s1 + $0x80] sm:$0xff]
  %v32 = vld [vmem:[%s1 + $0x88] sm:$0xff]
  %v33 = vld [vmem:[%s1 + $0x90] sm:$0xff]
  %v34 = vld [vmem:[%s1 + $0x98] sm:$0xff]
  %v35 = vld [vmem:[%s1 + $0xa0] sm:$0xff]
  %v36 = vld [vmem:[%s1 + $0xa8] sm:$0xff]
  %v37 = vld [vmem:[%s1 + $0xb0] sm:$0xff]
  %v38 = vld [vmem:[%s1 + $0xb8] sm:$0xff]
  %v39 = vld [vmem:[%s1 + $0xc0] sm:$0xff]
  %v40 = vld [vmem:[%s1 + $0xc8] sm:$0xff]
  %v41 = vld [vmem:[%s1 + $0xd0] sm:$0xff]
  %v42 = vld [vmem:[%s1 + $0xd8] sm:$0xff]
  %v43 = vld [vmem:[%s1 + $0xe0] sm:$0xff]
  %v44 = vld [vmem:[%s1 + $0xe8] sm:$0xff]
  %v45 = vld [vmem:[%s1 + $0xf0] sm:$0xff]
  %v46 = vld [vmem:[%s1 + $0xf8] sm:$0xff]
  %v47 = vld [vmem:[%s1 + $0x100] sm:$0xff]
  %v48 = vld [vmem:[%s1 + $0x108] sm:$0xff]
  %v49 = vld [vmem:[%s1 + $0x110] sm:$0xff]
  %v50 = vld [vmem:[%s1 + $0x118] sm:$0xff]
  %v51 = vld [vmem:[%s1 + $0x120] sm:$0xff]
  %v52 = vld [vmem:[%s1 + $0x128] sm:$0xff]
  %v53 = vld [vmem:[%s1 + $0x130] sm:$0xff]
  %v54 = vld [vmem:[%s1 + $0x138] sm:$0xff]
  %v55 = vld [vmem:[%s1 + $0x140] sm:$0xff]
  %v56 = vld [vmem:[%s1 + $0x148] sm:$0xff]
  %v57 = vld [vmem:[%s1 + $0x150] sm:$0xff]
  %v58 = vld [vmem:[%s1 + $0x158] sm:$0xff]
  %v59 = vld [vmem:[%s1 + $0x160] sm:$0xff]
  %v60 = vld [vmem:[%s1 + $0x168] sm:$0xff]
  %v61 = vld [vmem:[%s1 + $0x170] sm:$0xff]
  %v62 = vld [vmem:[%s1 + $0x178] sm:$0xff]
  %v63 = vld [vmem:[%s1 + $0x180] sm:$0xff]
  %v64 = vld [vmem:[%s1 + $0x188] sm:$0xff]
  %v65 = vld [vmem:[%s1 + $0x190] sm:$0xff]
  %v66 = vld [vmem:[%s1 + $0x198] sm:$0xff]
  %v67 = vld [vmem:[%s1 + $0x1a0] sm:$0xff]
  %v68 = vld [vmem:[%s1 + $0x1a8] sm:$0xff]
  %v69 = vld [vmem:[%s1 + $0x1b0] sm:$0xff]
  %v70 = vld [vmem:[%s1 + $0x1b8] sm:$0xff]
  %v71 = vld [vmem:[%s1 + $0x1c0] sm:$0xff]
  %v72 = vld [vmem:[%s1 + $0x1c8] sm:$0xff]
  %v73 = vld [vmem:[%s1 + $0x1d0] sm:$0xff]
  %v74 = vld [vmem:[%s1 + $0x1d8] sm:$0xff]
  %v75 = vld [vmem:[%s1 + $0x1e0] sm:$0xff]
  %v76 = vld [vmem:[%s1 + $0x1e8] sm:$0xff]
  %v77 = vld [vmem:[%s1 + $0x1f0] sm:$0xff]
  %v78 = vld [vmem:[%s1 + $0x1f8] sm:$0xff]
  %v79 = vld [vmem:[%s1 + $0x200] sm:$0xff]
  %v80 = vld [vmem:[%s1 + $0x208] sm:$0xff]
  %v81 = vld [vmem:[%s1 + $0x210] sm:$0xff]
  %v82 = vld [vmem:[%s1 + $0x218] sm:$0xff]
  %v83 = vld [vmem:[%s1 + $0x220] sm:$0xff]
  %v84 = vld [vmem:[%s1 + $0x228] sm:$0xff]
  %v85 = vld [vmem:[%s1 + $0x230] sm:$0xff]
  %v86 = vld [vmem:[%s1 + $0x238] sm:$0xff]
  %v87 = vld [vmem:[%s1 + $0x240] sm:$0xff]
  %v88 = vld [vmem:[%s1 + $0x248] sm:$0xff]
  %v89 = vld [vmem:[%s1 + $0x250] sm:$0xff]
  %v90 = vld [vmem:[%s1 + $0x258] sm:$0xff]
  %v91 = vld [vmem:[%s1 + $0x260] sm:$0xff]
  %v92 = vld [vmem:[%s1 + $0x268] sm:$0xff]
  %v93 = vld [vmem:[%s1 + $0x270] sm:$0xff]
  %v94 = vld [vmem:[%s1 + $0x278] sm:$0xff]
  %v95 = vld [vmem:[%s1 + $0x280] sm:$0xff]
  %v96 = vld [vmem:[%s1 + $0x288] sm:$0xff]
  %v97 = vld [vmem:[%s1 + $0x290] sm:$0xff]
  %v98 = vld [vmem:[%s1 + $0x298] sm:$0xff]
  %v99 = vld [vmem:[%s1 + $0x2a0] sm:$0xff]
  %v100 = vld [vmem:[%s1 + $0x2a8] sm:$0xff]
  %v101 = vld [vmem:[%s1 + $0x2b0] sm:$0xff]
  %v102 = vld [vmem:[%s1 + $0x2b8] sm:$0xff]
  %v103 = vld [vmem:[%s1 + $0x2c0] sm:$0xff]
  %v104 = vld [vmem:[%s1 + $0x2c8] sm:$0xff]
  %v105 = vld [vmem:[%s1 + $0x2d0] sm:$0xff]
  %v106 = vld [vmem:[%s1 + $0x2d8] sm:$0xff]
  %v107 = vld [vmem:[%s1 + $0x2e0] sm:$0xff]
  %v108 = vld [vmem:[%s1 + $0x2e8] sm:$0xff]
  %v109 = vld [vmem:[%s1 + $0x2f0] sm:$0xff]
  %v110 = vld [vmem:[%s1 + $0x2f8] sm:$0xff]
  %v111 = vld [vmem:[%s1 + $0x300] sm:$0x3f]
  %v112 = vld [vmem:[%s1 + $0x308] sm:$0x3f]
  %v113 = vld [vmem:[%s1 + $0x310] sm:$0x3f]
  %v114 = vld [vmem:[%s1 + $0x318] sm:$0x3f]
  %v115 = vld [vmem:[%s1 + $0x320] sm:$0x3f]
  %v116 = vld [vmem:[%s1 + $0x328] sm:$0x3f]
  %v117 = vld [vmem:[%s1 + $0x330] sm:$0x3f]
  %v118 = vld [vmem:[%s1 + $0x338] sm:$0x3f]
  %v119 = vld [vmem:[%s1 + $0x340] sm:$0x3f]
  %v120 = vld [vmem:[%s1 + $0x348] sm:$0x3f]
  %v121 = vld [vmem:[%s1 + $0x350] sm:$0x3f]
  %v122 = vld [vmem:[%s1 + $0x358] sm:$0x3f]
  %v123 = vld [vmem:[%s1 + $0x360] sm:$0x3f]
  %v124 = vld [vmem:[%s1 + $0x368] sm:$0x3f]
  %v125 = vld [vmem:[%s1 + $0x370] sm:$0x3f]
  %v126 = vld [vmem:[%s1 + $0x378] sm:$0x3f]
  %v127 = vld [vmem:[%s2] sm:$0x3f]
  %129 = vset.pattern.permute.xlu0 0
  %130 = vperm.xlu0 %129, %v127
  %v131 = vpop.permute.xlu0 %130
  %vm133 = vcmask 441344
  %v135 = vsel %vm133, %v14, 0
  %vm137 = vcmask 1045504
  %v139 = vsel %vm137, %v111, 0
  %v142 = vsel %vm137, %v112, 0
  %v145 = vsel %vm137, %v113, 0
  %v148 = vsel %vm137, %v114, 0
  %v151 = vsel %vm137, %v115, 0
  %v154 = vsel %vm137, %v116, 0
  %v157 = vsel %vm137, %v117, 0
  %v160 = vsel %vm137, %v118, 0
  %v163 = vsel %vm137, %v119, 0
  %v166 = vsel %vm137, %v120, 0
  %v169 = vsel %vm137, %v121, 0
  %v172 = vsel %vm137, %v122, 0
  %v175 = vsel %vm137, %v123, 0
  %v178 = vsel %vm137, %v124, 0
  %v181 = vsel %vm137, %v125, 0
  %v184 = vsel %vm137, %v126, 0
  %186 = vmatprep.subr.mxu0 %v16
  %187 = vmatpush1.msra.mxu0 %v15
  %188 = vmatprep.subr.mxu0 %v32
  %189 = vmatpush1.msra.mxu0 %v31
  %190 = vmatprep.subr.mxu0 %v48
  %191 = vmatpush1.msra.mxu0 %v47
  %192 = vmatprep.subr.mxu0 %v64
  %193 = vmatpush1.msra.mxu0 %v63
  %194 = vmatprep.subr.mxu0 %v80
  %195 = vmatpush1.msra.mxu0 %v79
  %196 = vmatprep.subr.mxu0 %v96
  %197 = vmatpush1.msra.mxu0 %v95
  %198 = vmatprep.subr.mxu0 %v142
  %199 = vmatpush1.msra.mxu0 %v139
  %200 = vmatprep.subr.mxu0 0.0
  %201 = vmatpush1.msra.mxu0 0.0
  %202 = vmatprep.subr.mxu0 0.0
  %203 = vmatpush1.msra.mxu0 0.0
  %204 = vmatprep.subr.mxu0 0.0
  %205 = vmatpush1.msra.mxu0 0.0
  %206 = vmatprep.subr.mxu0 0.0
  %207 = vmatpush1.msra.mxu0 0.0
  %208 = vmatprep.subr.mxu0 0.0
  %209 = vmatpush1.msra.mxu0 0.0
  %210 = vmatprep.subr.mxu0 0.0
  %211 = vmatpush1.msra.mxu0 0.0
  %212 = vmatprep.subr.mxu0 0.0
  %213 = vmatpush1.msra.mxu0 0.0
  %214 = vmatprep.subr.mxu0 0.0
  %215 = vmatpush1.msra.mxu0 0.0
  %216 = vmatprep.subr.mxu0 0.0
  %217 = vmatpush1.msra.mxu0 0.0
  %218 = vmatprep.subr.mxu0 0.0
  %219 = vmatpush1.msra.mxu0 0.0
  %220 = vmatprep.subr.mxu0 0.0
  %221 = vmatpush1.msra.mxu0 0.0
  %222 = vmatprep.subr.mxu0 0.0
  %223 = vmatpush1.msra.mxu0 0.0
  %224 = vmatprep.subr.mxu0 0.0
  %225 = vmatpush1.msra.mxu0 0.0
  %226 = vmatprep.subr.mxu0 0.0
  %227 = vmatpush1.msra.mxu0 0.0
  %228 = vmatprep.subr.mxu0 0.0
  %229 = vmatpush1.msra.mxu0 0.0
  %230 = vmatprep.subr.mxu0 0.0
  %231 = vmatpush1.msra.mxu0 0.0
  %232 = vmatprep.subr.mxu0 0.0
  %233 = vmatpush1.msra.mxu0 0.0
  %234 = vmatprep.subr.mxu0 0.0
  %235 = vmatpush1.msra.mxu0 0.0
  %236 = vmatprep.subr.mxu0 0.0
  %237 = vmatpush1.msra.mxu0 0.0
  %238 = vmatprep.subr.mxu0 0.0
  %239 = vmatpush1.msra.mxu0 0.0
  %240 = vmatprep.subr.mxu0 0.0
  %241 = vmatpush1.msra.mxu0 0.0
  %242 = vmatprep.subr.mxu0 0.0
  %243 = vmatpush1.msra.mxu0 0.0
  %244 = vmatprep.subr.mxu0 0.0
  %245 = vmatpush1.msra.mxu0 0.0
  %246 = vmatprep.subr.mxu0 0.0
  %247 = vmatpush1.msra.mxu0 0.0
  %248 = vmatprep.subr.mxu0 0.0
  %249 = vmatpush1.msra.mxu0 0.0
  %250 = vmatprep.mubr.f32.mxu0 0.0
  %251 = vmatmul.mubr.f32.gmra.mrb[0].mxu0 %v135
  %v252 = vpop.f32.mrb[0].mxu0
  %v253 = vadd.f32 %v131, %v252
  %v254 = vpop.f32.mrb[0].mxu0
  %v255 = vadd.f32 %v131, %v254
  %256 = vdwg.mxu0
  %257 = vmatprep.subr.mxu0 %v18
  %258 = vmatpush1.msra.mxu0 %v17
  %259 = vmatprep.subr.mxu0 %v34
  %260 = vmatpush1.msra.mxu0 %v33
  %261 = vmatprep.subr.mxu0 %v50
  %262 = vmatpush1.msra.mxu0 %v49
  %263 = vmatprep.subr.mxu0 %v66
  %264 = vmatpush1.msra.mxu0 %v65
  %265 = vmatprep.subr.mxu0 %v82
  %266 = vmatpush1.msra.mxu0 %v81
  %267 = vmatprep.subr.mxu0 %v98
  %268 = vmatpush1.msra.mxu0 %v97
  %269 = vmatprep.subr.mxu0 %v148
  %270 = vmatpush1.msra.mxu0 %v145
  %271 = vmatprep.subr.mxu0 0.0
  %272 = vmatpush1.msra.mxu0 0.0
  %273 = vmatprep.subr.mxu0 0.0
  %274 = vmatpush1.msra.mxu0 0.0
  %275 = vmatprep.subr.mxu0 0.0
  %276 = vmatpush1.msra.mxu0 0.0
  %277 = vmatprep.subr.mxu0 0.0
  %278 = vmatpush1.msra.mxu0 0.0
  %279 = vmatprep.subr.mxu0 0.0
  %280 = vmatpush1.msra.mxu0 0.0
  %281 = vmatprep.subr.mxu0 0.0
  %282 = vmatpush1.msra.mxu0 0.0
  %283 = vmatprep.subr.mxu0 0.0
  %284 = vmatpush1.msra.mxu0 0.0
  %285 = vmatprep.subr.mxu0 0.0
  %286 = vmatpush1.msra.mxu0 0.0
  %287 = vmatprep.subr.mxu0 0.0
  %288 = vmatpush1.msra.mxu0 0.0
  %289 = vmatprep.subr.mxu0 0.0
  %290 = vmatpush1.msra.mxu0 0.0
  %291 = vmatprep.subr.mxu0 0.0
  %292 = vmatpush1.msra.mxu0 0.0
  %293 = vmatprep.subr.mxu0 0.0
  %294 = vmatpush1.msra.mxu0 0.0
  %295 = vmatprep.subr.mxu0 0.0
  %296 = vmatpush1.msra.mxu0 0.0
  %297 = vmatprep.subr.mxu0 0.0
  %298 = vmatpush1.msra.mxu0 0.0
  %299 = vmatprep.subr.mxu0 0.0
  %300 = vmatpush1.msra.mxu0 0.0
  %301 = vmatprep.subr.mxu0 0.0
  %302 = vmatpush1.msra.mxu0 0.0
  %303 = vmatprep.subr.mxu0 0.0
  %304 = vmatpush1.msra.mxu0 0.0
  %305 = vmatprep.subr.mxu0 0.0
  %306 = vmatpush1.msra.mxu0 0.0
  %307 = vmatprep.subr.mxu0 0.0
  %308 = vmatpush1.msra.mxu0 0.0
  %309 = vmatprep.subr.mxu0 0.0
  %310 = vmatpush1.msra.mxu0 0.0
  %311 = vmatprep.subr.mxu0 0.0
  %312 = vmatpush1.msra.mxu0 0.0
  %313 = vmatprep.subr.mxu0 0.0
  %314 = vmatpush1.msra.mxu0 0.0
  %315 = vmatprep.subr.mxu0 0.0
  %316 = vmatpush1.msra.mxu0 0.0
  %317 = vmatprep.subr.mxu0 0.0
  %318 = vmatpush1.msra.mxu0 0.0
  %319 = vmatprep.subr.mxu0 0.0
  %320 = vmatpush1.msra.mxu0 0.0
  %321 = vmatprep.mubr.f32.mxu0 0.0
  %322 = vmatmul.mubr.f32.gmra.mrb[0].mxu0 %v135
  %v323 = vpop.f32.mrb[0].mxu0
  %v324 = vadd.f32 %v131, %v323
  %v325 = vpop.f32.mrb[0].mxu0
  %v326 = vadd.f32 %v131, %v325
  %327 = vdwg.mxu0
  %328 = vmatprep.subr.mxu0 %v20
  %329 = vmatpush1.msra.mxu0 %v19
  %330 = vmatprep.subr.mxu0 %v36
  %331 = vmatpush1.msra.mxu0 %v35
  %332 = vmatprep.subr.mxu0 %v52
  %333 = vmatpush1.msra.mxu0 %v51
  %334 = vmatprep.subr.mxu0 %v68
  %335 = vmatpush1.msra.mxu0 %v67
  %336 = vmatprep.subr.mxu0 %v84
  %337 = vmatpush1.msra.mxu0 %v83
  %338 = vmatprep.subr.mxu0 %v100
  %339 = vmatpush1.msra.mxu0 %v99
  %340 = vmatprep.subr.mxu0 %v154
  %341 = vmatpush1.msra.mxu0 %v151
  %342 = vmatprep.subr.mxu0 0.0
  %343 = vmatpush1.msra.mxu0 0.0
  %344 = vmatprep.subr.mxu0 0.0
  %345 = vmatpush1.msra.mxu0 0.0
  %346 = vmatprep.subr.mxu0 0.0
  %347 = vmatpush1.msra.mxu0 0.0
  %348 = vmatprep.subr.mxu0 0.0
  %349 = vmatpush1.msra.mxu0 0.0
  %350 = vmatprep.subr.mxu0 0.0
  %351 = vmatpush1.msra.mxu0 0.0
  %352 = vmatprep.subr.mxu0 0.0
  %353 = vmatpush1.msra.mxu0 0.0
  %354 = vmatprep.subr.mxu0 0.0
  %355 = vmatpush1.msra.mxu0 0.0
  %356 = vmatprep.subr.mxu0 0.0
  %357 = vmatpush1.msra.mxu0 0.0
  %358 = vmatprep.subr.mxu0 0.0
  %359 = vmatpush1.msra.mxu0 0.0
  %360 = vmatprep.subr.mxu0 0.0
  %361 = vmatpush1.msra.mxu0 0.0
  %362 = vmatprep.subr.mxu0 0.0
  %363 = vmatpush1.msra.mxu0 0.0
  %364 = vmatprep.subr.mxu0 0.0
  %365 = vmatpush1.msra.mxu0 0.0
  %366 = vmatprep.subr.mxu0 0.0
  %367 = vmatpush1.msra.mxu0 0.0
  %368 = vmatprep.subr.mxu0 0.0
  %369 = vmatpush1.msra.mxu0 0.0
  %370 = vmatprep.subr.mxu0 0.0
  %371 = vmatpush1.msra.mxu0 0.0
  %372 = vmatprep.subr.mxu0 0.0
  %373 = vmatpush1.msra.mxu0 0.0
  %374 = vmatprep.subr.mxu0 0.0
  %375 = vmatpush1.msra.mxu0 0.0
  %376 = vmatprep.subr.mxu0 0.0
  %377 = vmatpush1.msra.mxu0 0.0
  %378 = vmatprep.subr.mxu0 0.0
  %379 = vmatpush1.msra.mxu0 0.0
  %380 = vmatprep.subr.mxu0 0.0
  %381 = vmatpush1.msra.mxu0 0.0
  %382 = vmatprep.subr.mxu0 0.0
  %383 = vmatpush1.msra.mxu0 0.0
  %384 = vmatprep.subr.mxu0 0.0
  %385 = vmatpush1.msra.mxu0 0.0
  %386 = vmatprep.subr.mxu0 0.0
  %387 = vmatpush1.msra.mxu0 0.0
  %388 = vmatprep.subr.mxu0 0.0
  %389 = vmatpush1.msra.mxu0 0.0
  %390 = vmatprep.subr.mxu0 0.0
  %391 = vmatpush1.msra.mxu0 0.0
  %392 = vmatprep.mubr.f32.mxu0 0.0
  %393 = vmatmul.mubr.f32.gmra.mrb[0].mxu0 %v135
  %v394 = vpop.f32.mrb[0].mxu0
  %v395 = vadd.f32 %v131, %v394
  %v396 = vpop.f32.mrb[0].mxu0
  %v397 = vadd.f32 %v131, %v396
  %398 = vdwg.mxu0
  %399 = vmatprep.subr.mxu0 %v22
  %400 = vmatpush1.msra.mxu0 %v21
  %401 = vmatprep.subr.mxu0 %v38
  %402 = vmatpush1.msra.mxu0 %v37
  %403 = vmatprep.subr.mxu0 %v54
  %404 = vmatpush1.msra.mxu0 %v53
  %405 = vmatprep.subr.mxu0 %v70
  %406 = vmatpush1.msra.mxu0 %v69
  %407 = vmatprep.subr.mxu0 %v86
  %408 = vmatpush1.msra.mxu0 %v85
  %409 = vmatprep.subr.mxu0 %v102
  %410 = vmatpush1.msra.mxu0 %v101
  %411 = vmatprep.subr.mxu0 %v160
  %412 = vmatpush1.msra.mxu0 %v157
  %413 = vmatprep.subr.mxu0 0.0
  %414 = vmatpush1.msra.mxu0 0.0
  %415 = vmatprep.subr.mxu0 0.0
  %416 = vmatpush1.msra.mxu0 0.0
  %417 = vmatprep.subr.mxu0 0.0
  %418 = vmatpush1.msra.mxu0 0.0
  %419 = vmatprep.subr.mxu0 0.0
  %420 = vmatpush1.msra.mxu0 0.0
  %421 = vmatprep.subr.mxu0 0.0
  %422 = vmatpush1.msra.mxu0 0.0
  %423 = vmatprep.subr.mxu0 0.0
  %424 = vmatpush1.msra.mxu0 0.0
  %425 = vmatprep.subr.mxu0 0.0
  %426 = vmatpush1.msra.mxu0 0.0
  %427 = vmatprep.subr.mxu0 0.0
  %428 = vmatpush1.msra.mxu0 0.0
  %429 = vmatprep.subr.mxu0 0.0
  %430 = vmatpush1.msra.mxu0 0.0
  %431 = vmatprep.subr.mxu0 0.0
  %432 = vmatpush1.msra.mxu0 0.0
  %433 = vmatprep.subr.mxu0 0.0
  %434 = vmatpush1.msra.mxu0 0.0
  %435 = vmatprep.subr.mxu0 0.0
  %436 = vmatpush1.msra.mxu0 0.0
  %437 = vmatprep.subr.mxu0 0.0
  %438 = vmatpush1.msra.mxu0 0.0
  %439 = vmatprep.subr.mxu0 0.0
  %440 = vmatpush1.msra.mxu0 0.0
  %441 = vmatprep.subr.mxu0 0.0
  %442 = vmatpush1.msra.mxu0 0.0
  %443 = vmatprep.subr.mxu0 0.0
  %444 = vmatpush1.msra.mxu0 0.0
  %445 = vmatprep.subr.mxu0 0.0
  %446 = vmatpush1.msra.mxu0 0.0
  %447 = vmatprep.subr.mxu0 0.0
  %448 = vmatpush1.msra.mxu0 0.0
  %449 = vmatprep.subr.mxu0 0.0
  %450 = vmatpush1.msra.mxu0 0.0
  %451 = vmatprep.subr.mxu0 0.0
  %452 = vmatpush1.msra.mxu0 0.0
  %453 = vmatprep.subr.mxu0 0.0
  %454 = vmatpush1.msra.mxu0 0.0
  %455 = vmatprep.subr.mxu0 0.0
  %456 = vmatpush1.msra.mxu0 0.0
  %457 = vmatprep.subr.mxu0 0.0
  %458 = vmatpush1.msra.mxu0 0.0
  %459 = vmatprep.subr.mxu0 0.0
  %460 = vmatpush1.msra.mxu0 0.0
  %461 = vmatprep.subr.mxu0 0.0
  %462 = vmatpush1.msra.mxu0 0.0
  %463 = vmatprep.mubr.f32.mxu0 0.0
  %464 = vmatmul.mubr.f32.gmra.mrb[0].mxu0 %v135
  %v465 = vpop.f32.mrb[0].mxu0
  %v466 = vadd.f32 %v131, %v465
  %v467 = vpop.f32.mrb[0].mxu0
  %v468 = vadd.f32 %v131, %v467
  %469 = vdwg.mxu0
  %470 = vmatprep.subr.mxu0 %v24
  %471 = vmatpush1.msra.mxu0 %v23
  %472 = vmatprep.subr.mxu0 %v40
  %473 = vmatpush1.msra.mxu0 %v39
  %474 = vmatprep.subr.mxu0 %v56
  %475 = vmatpush1.msra.mxu0 %v55
  %476 = vmatprep.subr.mxu0 %v72
  %477 = vmatpush1.msra.mxu0 %v71
  %478 = vmatprep.subr.mxu0 %v88
  %479 = vmatpush1.msra.mxu0 %v87
  %480 = vmatprep.subr.mxu0 %v104
  %481 = vmatpush1.msra.mxu0 %v103
  %482 = vmatprep.subr.mxu0 %v166
  %483 = vmatpush1.msra.mxu0 %v163
  %484 = vmatprep.subr.mxu0 0.0
  %485 = vmatpush1.msra.mxu0 0.0
  %486 = vmatprep.subr.mxu0 0.0
  %487 = vmatpush1.msra.mxu0 0.0
  %488 = vmatprep.subr.mxu0 0.0
  %489 = vmatpush1.msra.mxu0 0.0
  %490 = vmatprep.subr.mxu0 0.0
  %491 = vmatpush1.msra.mxu0 0.0
  %492 = vmatprep.subr.mxu0 0.0
  %493 = vmatpush1.msra.mxu0 0.0
  %494 = vmatprep.subr.mxu0 0.0
  %495 = vmatpush1.msra.mxu0 0.0
  %496 = vmatprep.subr.mxu0 0.0
  %497 = vmatpush1.msra.mxu0 0.0
  %498 = vmatprep.subr.mxu0 0.0
  %499 = vmatpush1.msra.mxu0 0.0
  %500 = vmatprep.subr.mxu0 0.0
  %501 = vmatpush1.msra.mxu0 0.0
  %502 = vmatprep.subr.mxu0 0.0
  %503 = vmatpush1.msra.mxu0 0.0
  %504 = vmatprep.subr.mxu0 0.0
  %505 = vmatpush1.msra.mxu0 0.0
  %506 = vmatprep.subr.mxu0 0.0
  %507 = vmatpush1.msra.mxu0 0.0
  %508 = vmatprep.subr.mxu0 0.0
  %509 = vmatpush1.msra.mxu0 0.0
  %510 = vmatprep.subr.mxu0 0.0
  %511 = vmatpush1.msra.mxu0 0.0
  %512 = vmatprep.subr.mxu0 0.0
  %513 = vmatpush1.msra.mxu0 0.0
  %514 = vmatprep.subr.mxu0 0.0
  %515 = vmatpush1.msra.mxu0 0.0
  %516 = vmatprep.subr.mxu0 0.0
  %517 = vmatpush1.msra.mxu0 0.0
  %518 = vmatprep.subr.mxu0 0.0
  %519 = vmatpush1.msra.mxu0 0.0
  %520 = vmatprep.subr.mxu0 0.0
  %521 = vmatpush1.msra.mxu0 0.0
  %522 = vmatprep.subr.mxu0 0.0
  %523 = vmatpush1.msra.mxu0 0.0
  %524 = vmatprep.subr.mxu0 0.0
  %525 = vmatpush1.msra.mxu0 0.0
  %526 = vmatprep.subr.mxu0 0.0
  %527 = vmatpush1.msra.mxu0 0.0
  %528 = vmatprep.subr.mxu0 0.0
  %529 = vmatpush1.msra.mxu0 0.0
  %530 = vmatprep.subr.mxu0 0.0
  %531 = vmatpush1.msra.mxu0 0.0
  %532 = vmatprep.subr.mxu0 0.0
  %533 = vmatpush1.msra.mxu0 0.0
  %534 = vmatprep.mubr.f32.mxu0 0.0
  %535 = vmatmul.mubr.f32.gmra.mrb[0].mxu0 %v135
  %v536 = vpop.f32.mrb[0].mxu0
  %v537 = vadd.f32 %v131, %v536
  %v538 = vpop.f32.mrb[0].mxu0
  %v539 = vadd.f32 %v131, %v538
  %540 = vdwg.mxu0
  %541 = vmatprep.subr.mxu0 %v26
  %542 = vmatpush1.msra.mxu0 %v25
  %543 = vmatprep.subr.mxu0 %v42
  %544 = vmatpush1.msra.mxu0 %v41
  %545 = vmatprep.subr.mxu0 %v58
  %546 = vmatpush1.msra.mxu0 %v57
  %547 = vmatprep.subr.mxu0 %v74
  %548 = vmatpush1.msra.mxu0 %v73
  %549 = vmatprep.subr.mxu0 %v90
  %550 = vmatpush1.msra.mxu0 %v89
  %551 = vmatprep.subr.mxu0 %v106
  %552 = vmatpush1.msra.mxu0 %v105
  %553 = vmatprep.subr.mxu0 %v172
  %554 = vmatpush1.msra.mxu0 %v169
  %555 = vmatprep.subr.mxu0 0.0
  %556 = vmatpush1.msra.mxu0 0.0
  %557 = vmatprep.subr.mxu0 0.0
  %558 = vmatpush1.msra.mxu0 0.0
  %559 = vmatprep.subr.mxu0 0.0
  %560 = vmatpush1.msra.mxu0 0.0
  %561 = vmatprep.subr.mxu0 0.0
  %562 = vmatpush1.msra.mxu0 0.0
  %563 = vmatprep.subr.mxu0 0.0
  %564 = vmatpush1.msra.mxu0 0.0
  %565 = vmatprep.subr.mxu0 0.0
  %566 = vmatpush1.msra.mxu0 0.0
  %567 = vmatprep.subr.mxu0 0.0
  %568 = vmatpush1.msra.mxu0 0.0
  %569 = vmatprep.subr.mxu0 0.0
  %570 = vmatpush1.msra.mxu0 0.0
  %571 = vmatprep.subr.mxu0 0.0
  %572 = vmatpush1.msra.mxu0 0.0
  %573 = vmatprep.subr.mxu0 0.0
  %574 = vmatpush1.msra.mxu0 0.0
  %575 = vmatprep.subr.mxu0 0.0
  %576 = vmatpush1.msra.mxu0 0.0
  %577 = vmatprep.subr.mxu0 0.0
  %578 = vmatpush1.msra.mxu0 0.0
  %579 = vmatprep.subr.mxu0 0.0
  %580 = vmatpush1.msra.mxu0 0.0
  %581 = vmatprep.subr.mxu0 0.0
  %582 = vmatpush1.msra.mxu0 0.0
  %583 = vmatprep.subr.mxu0 0.0
  %584 = vmatpush1.msra.mxu0 0.0
  %585 = vmatprep.subr.mxu0 0.0
  %586 = vmatpush1.msra.mxu0 0.0
  %587 = vmatprep.subr.mxu0 0.0
  %588 = vmatpush1.msra.mxu0 0.0
  %589 = vmatprep.subr.mxu0 0.0
  %590 = vmatpush1.msra.mxu0 0.0
  %591 = vmatprep.subr.mxu0 0.0
  %592 = vmatpush1.msra.mxu0 0.0
  %593 = vmatprep.subr.mxu0 0.0
  %594 = vmatpush1.msra.mxu0 0.0
  %595 = vmatprep.subr.mxu0 0.0
  %596 = vmatpush1.msra.mxu0 0.0
  %597 = vmatprep.subr.mxu0 0.0
  %598 = vmatpush1.msra.mxu0 0.0
  %599 = vmatprep.subr.mxu0 0.0
  %600 = vmatpush1.msra.mxu0 0.0
  %601 = vmatprep.subr.mxu0 0.0
  %602 = vmatpush1.msra.mxu0 0.0
  %603 = vmatprep.subr.mxu0 0.0
  %604 = vmatpush1.msra.mxu0 0.0
  %605 = vmatprep.mubr.f32.mxu0 0.0
  %606 = vmatmul.mubr.f32.gmra.mrb[0].mxu0 %v135
  %v607 = vpop.f32.mrb[0].mxu0
  %v608 = vadd.f32 %v131, %v607
  %v609 = vpop.f32.mrb[0].mxu0
  %v610 = vadd.f32 %v131, %v609
  %611 = vdwg.mxu0
  %612 = vmatprep.subr.mxu0 %v28
  %613 = vmatpush1.msra.mxu0 %v27
  %614 = vmatprep.subr.mxu0 %v44
  %615 = vmatpush1.msra.mxu0 %v43
  %616 = vmatprep.subr.mxu0 %v60
  %617 = vmatpush1.msra.mxu0 %v59
  %618 = vmatprep.subr.mxu0 %v76
  %619 = vmatpush1.msra.mxu0 %v75
  %620 = vmatprep.subr.mxu0 %v92
  %621 = vmatpush1.msra.mxu0 %v91
  %622 = vmatprep.subr.mxu0 %v108
  %623 = vmatpush1.msra.mxu0 %v107
  %624 = vmatprep.subr.mxu0 %v178
  %625 = vmatpush1.msra.mxu0 %v175
  %626 = vmatprep.subr.mxu0 0.0
  %627 = vmatpush1.msra.mxu0 0.0
  %628 = vmatprep.subr.mxu0 0.0
  %629 = vmatpush1.msra.mxu0 0.0
  %630 = vmatprep.subr.mxu0 0.0
  %631 = vmatpush1.msra.mxu0 0.0
  %632 = vmatprep.subr.mxu0 0.0
  %633 = vmatpush1.msra.mxu0 0.0
  %634 = vmatprep.subr.mxu0 0.0
  %635 = vmatpush1.msra.mxu0 0.0
  %636 = vmatprep.subr.mxu0 0.0
  %637 = vmatpush1.msra.mxu0 0.0
  %638 = vmatprep.subr.mxu0 0.0
  %639 = vmatpush1.msra.mxu0 0.0
  %640 = vmatprep.subr.mxu0 0.0
  %641 = vmatpush1.msra.mxu0 0.0
  %642 = vmatprep.subr.mxu0 0.0
  %643 = vmatpush1.msra.mxu0 0.0
  %644 = vmatprep.subr.mxu0 0.0
  %645 = vmatpush1.msra.mxu0 0.0
  %646 = vmatprep.subr.mxu0 0.0
  %647 = vmatpush1.msra.mxu0 0.0
  %648 = vmatprep.subr.mxu0 0.0
  %649 = vmatpush1.msra.mxu0 0.0
  %650 = vmatprep.subr.mxu0 0.0
  %651 = vmatpush1.msra.mxu0 0.0
  %652 = vmatprep.subr.mxu0 0.0
  %653 = vmatpush1.msra.mxu0 0.0
  %654 = vmatprep.subr.mxu0 0.0
  %655 = vmatpush1.msra.mxu0 0.0
  %656 = vmatprep.subr.mxu0 0.0
  %657 = vmatpush1.msra.mxu0 0.0
  %658 = vmatprep.subr.mxu0 0.0
  %659 = vmatpush1.msra.mxu0 0.0
  %660 = vmatprep.subr.mxu0 0.0
  %661 = vmatpush1.msra.mxu0 0.0
  %662 = vmatprep.subr.mxu0 0.0
  %663 = vmatpush1.msra.mxu0 0.0
  %664 = vmatprep.subr.mxu0 0.0
  %665 = vmatpush1.msra.mxu0 0.0
  %666 = vmatprep.subr.mxu0 0.0
  %667 = vmatpush1.msra.mxu0 0.0
  %668 = vmatprep.subr.mxu0 0.0
  %669 = vmatpush1.msra.mxu0 0.0
  %670 = vmatprep.subr.mxu0 0.0
  %671 = vmatpush1.msra.mxu0 0.0
  %672 = vmatprep.subr.mxu0 0.0
  %673 = vmatpush1.msra.mxu0 0.0
  %674 = vmatprep.subr.mxu0 0.0
  %675 = vmatpush1.msra.mxu0 0.0
  %676 = vmatprep.mubr.f32.mxu0 0.0
  %677 = vmatmul.mubr.f32.gmra.mrb[0].mxu0 %v135
  %v678 = vpop.f32.mrb[0].mxu0
  %v679 = vadd.f32 %v131, %v678
  %v680 = vpop.f32.mrb[0].mxu0
  %v681 = vadd.f32 %v131, %v680
  %682 = vdwg.mxu0
  %683 = vmatprep.subr.mxu0 %v30
  %684 = vmatpush1.msra.mxu0 %v29
  %685 = vmatprep.subr.mxu0 %v46
  %686 = vmatpush1.msra.mxu0 %v45
  %687 = vmatprep.subr.mxu0 %v62
  %688 = vmatpush1.msra.mxu0 %v61
  %689 = vmatprep.subr.mxu0 %v78
  %690 = vmatpush1.msra.mxu0 %v77
  %691 = vmatprep.subr.mxu0 %v94
  %692 = vmatpush1.msra.mxu0 %v93
  %693 = vmatprep.subr.mxu0 %v110
  %694 = vmatpush1.msra.mxu0 %v109
  %695 = vmatprep.subr.mxu0 %v184
  %696 = vmatpush1.msra.mxu0 %v181
  %697 = vmatprep.subr.mxu0 0.0
  %698 = vmatpush1.msra.mxu0 0.0
  %699 = vmatprep.subr.mxu0 0.0
  %700 = vmatpush1.msra.mxu0 0.0
  %701 = vmatprep.subr.mxu0 0.0
  %702 = vmatpush1.msra.mxu0 0.0
  %703 = vmatprep.subr.mxu0 0.0
  %704 = vmatpush1.msra.mxu0 0.0
  %705 = vmatprep.subr.mxu0 0.0
  %706 = vmatpush1.msra.mxu0 0.0
  %707 = vmatprep.subr.mxu0 0.0
  %708 = vmatpush1.msra.mxu0 0.0
  %709 = vmatprep.subr.mxu0 0.0
  %710 = vmatpush1.msra.mxu0 0.0
  %711 = vmatprep.subr.mxu0 0.0
  %712 = vmatpush1.msra.mxu0 0.0
  %713 = vmatprep.subr.mxu0 0.0
  %714 = vmatpush1.msra.mxu0 0.0
  %715 = vmatprep.subr.mxu0 0.0
  %716 = vmatpush1.msra.mxu0 0.0
  %717 = vmatprep.subr.mxu0 0.0
  %718 = vmatpush1.msra.mxu0 0.0
  %719 = vmatprep.subr.mxu0 0.0
  %720 = vmatpush1.msra.mxu0 0.0
  %721 = vmatprep.subr.mxu0 0.0
  %722 = vmatpush1.msra.mxu0 0.0
  %723 = vmatprep.subr.mxu0 0.0
  %724 = vmatpush1.msra.mxu0 0.0
  %725 = vmatprep.subr.mxu0 0.0
  %726 = vmatpush1.msra.mxu0 0.0
  %727 = vmatprep.subr.mxu0 0.0
  %728 = vmatpush1.msra.mxu0 0.0
  %729 = vmatprep.subr.mxu0 0.0
  %730 = vmatpush1.msra.mxu0 0.0
  %731 = vmatprep.subr.mxu0 0.0
  %732 = vmatpush1.msra.mxu0 0.0
  %733 = vmatprep.subr.mxu0 0.0
  %734 = vmatpush1.msra.mxu0 0.0
  %735 = vmatprep.subr.mxu0 0.0
  %736 = vmatpush1.msra.mxu0 0.0
  %737 = vmatprep.subr.mxu0 0.0
  %738 = vmatpush1.msra.mxu0 0.0
  %739 = vmatprep.subr.mxu0 0.0
  %740 = vmatpush1.msra.mxu0 0.0
  %741 = vmatprep.subr.mxu0 0.0
  %742 = vmatpush1.msra.mxu0 0.0
  %743 = vmatprep.subr.mxu0 0.0
  %744 = vmatpush1.msra.mxu0 0.0
  %745 = vmatprep.subr.mxu0 0.0
  %746 = vmatpush1.msra.mxu0 0.0
  %747 = vmatprep.mubr.f32.mxu0 0.0
  %748 = vmatmul.mubr.f32.gmra.mrb[0].mxu0 %v135
  %v749 = vpop.f32.mrb[0].mxu0
  %v750 = vadd.f32 %v131, %v749
  %v751 = vpop.f32.mrb[0].mxu0
  %v752 = vadd.f32 %v131, %v751
  %753 = vdwg.mxu0
  %754 = vst [vmem:[%s3] sm:$0x3f] %v253
  %755 = vst [vmem:[%s3 + $0x8] sm:$0x3f] %v255
  %756 = vst [vmem:[%s3 + $0x10] sm:$0x3f] %v324
  %757 = vst [vmem:[%s3 + $0x18] sm:$0x3f] %v326
  %758 = vst [vmem:[%s3 + $0x20] sm:$0x3f] %v395
  %759 = vst [vmem:[%s3 + $0x28] sm:$0x3f] %v397
  %760 = vst [vmem:[%s3 + $0x30] sm:$0x3f] %v466
  %761 = vst [vmem:[%s3 + $0x38] sm:$0x3f] %v468
  %762 = vst [vmem:[%s3 + $0x40] sm:$0x3f] %v537
  %763 = vst [vmem:[%s3 + $0x48] sm:$0x3f] %v539
  %764 = vst [vmem:[%s3 + $0x50] sm:$0x3f] %v608
  %765 = vst [vmem:[%s3 + $0x58] sm:$0x3f] %v610
  %766 = vst [vmem:[%s3 + $0x60] sm:$0x3f] %v679
  %767 = vst [vmem:[%s3 + $0x68] sm:$0x3f] %v681
  %768 = vst [vmem:[%s3 + $0x70] sm:$0x3f] %v750
  %769 = vst [vmem:[%s3 + $0x78] sm:$0x3f] %v752
  // Predicated region
  $region14: #{forward.9} parent=0 // pred_check
    _
  $region15: #{forward.9} parent=0 // pred_check_branch
    %771 = sbr.rel (0) target = $region17
  $region16: #{forward.9} parent=0 // pred_region
    _
  $region17: #{forward.9} parent=0 // pred_fallthru
    _
  // Predicated region
  $region18: #{forward.9} parent=0 // pred_check
    _
  $region19: #{forward.9} parent=0 // pred_check_branch
    %773 = sbr.rel (0) target = $region21
  $region20: #{forward.9} parent=0 // pred_region
    _
  $region21: #{forward.9} parent=0 // pred_fallthru
    _

// kernel: forward.11
$region0: #{forward.11}
  #allocation0 [shape = 'u32[]', space=smem, size = 0x4, offset = 0x4, fixed_abs, tag = 'smem constant byte address 0x4 - core index']
  #allocation1 [shape = 'u32[144,128]{1,0:T(1,128)}', space=vmem, size = 0x12000, scoped, tag = 'internal scratch']
  %s0 = inlined_call_operand.vmem [shape: f32[6,150], index: 0, kind: input, shape index: {}]
  %s1 = inlined_call_operand.vmem [shape: f32[150,1568], index: 1, kind: input, shape index: {}]
  %s2 = inlined_call_operand.vmem [shape: f32[6,1], index: 2, kind: input, shape index: {}]
  %s3 = inlined_call_operand.vmem [shape: f32[6,1], index: 3, kind: input, shape index: {}]
  %s4 = inlined_call_operand.vmem [shape: f32[6,1], index: 4, kind: input, shape index: {}]
  %s5 = inlined_call_operand.vmem [shape: f32[6,1568], index: 5, kind: output, shape index: {}]
  %s6 = sld [smem:[#allocation0]]
  $region30: #{forward.11} parent=0
    _
  %s8 = ssub.s32 1, %s6
  %s9 = scalar_select 0, %s8, %s6
  // Predicated region
  $region2: #{forward.11} parent=0 // pred_check
    _
  $region3: #{forward.11} parent=0 // pred_check_branch
    %11 = sbr.rel (0) target = $region5
  $region4: #{forward.11} parent=0 // pred_region
    _
  $region5: #{forward.11} parent=0 // pred_fallthru
    _
  // Predicated region
  $region6: #{forward.11} parent=0 // pred_check
    _
  $region7: #{forward.11} parent=0 // pred_check_branch
    %13 = sbr.rel (0) target = $region9
  $region8: #{forward.11} parent=0 // pred_region
    _
  $region9: #{forward.11} parent=0 // pred_fallthru
    _
  // Predicated region
  $region10: #{forward.11} parent=0 // pred_check
    _
  $region11: #{forward.11} parent=0 // pred_check_branch
    %15 = sbr.rel (0) target = $region13
  $region12: #{forward.11} parent=0 // pred_region
    _
  $region13: #{forward.11} parent=0 // pred_fallthru
    _
  // Predicated region
  $region14: #{forward.11} parent=0 // pred_check
    _
  $region15: #{forward.11} parent=0 // pred_check_branch
    %17 = sbr.rel (0) target = $region17
  $region16: #{forward.11} parent=0 // pred_region
    _
  $region17: #{forward.11} parent=0 // pred_fallthru
    _
  // Predicated region
  $region18: #{forward.11} parent=0 // pred_check
    _
  $region19: #{forward.11} parent=0 // pred_check_branch
    %19 = sbr.rel (0) target = $region21
  $region20: #{forward.11} parent=0 // pred_region
    _
  $region21: #{forward.11} parent=0 // pred_fallthru
    _
  %v20 = vld [vmem:[%s0] sm:$0x3f]
  %v21 = vld [vmem:[%s0 + $0x8] sm:$0x3f]
  %v22 = vld [vmem:[%s1] sm:$0xff]
  %v23 = vld [vmem:[%s1 + $0x8] sm:$0xff]
  %v24 = vld [vmem:[%s1 + $0x10] sm:$0xff]
  %v25 = vld [vmem:[%s1 + $0x18] sm:$0xff]
  %v26 = vld [vmem:[%s1 + $0x20] sm:$0xff]
  %v27 = vld [vmem:[%s1 + $0x28] sm:$0xff]
  %v28 = vld [vmem:[%s1 + $0x30] sm:$0xff]
  %v29 = vld [vmem:[%s1 + $0x38] sm:$0xff]
  %v30 = vld [vmem:[%s1 + $0x40] sm:$0xff]
  %v31 = vld [vmem:[%s1 + $0x48] sm:$0xff]
  %v32 = vld [vmem:[%s1 + $0x50] sm:$0xff]
  %v33 = vld [vmem:[%s1 + $0x58] sm:$0xff]
  %v34 = vld [vmem:[%s1 + $0x60] sm:$0xff]
  %v35 = vld [vmem:[%s1 + $0x68] sm:$0xff]
  %v36 = vld [vmem:[%s1 + $0x70] sm:$0xff]
  %v37 = vld [vmem:[%s1 + $0x78] sm:$0xff]
  %v38 = vld [vmem:[%s1 + $0x80] sm:$0xff]
  %v39 = vld [vmem:[%s1 + $0x88] sm:$0xff]
  %v40 = vld [vmem:[%s1 + $0x90] sm:$0xff]
  %v41 = vld [vmem:[%s1 + $0x98] sm:$0xff]
  %v42 = vld [vmem:[%s1 + $0xa0] sm:$0xff]
  %v43 = vld [vmem:[%s1 + $0xa8] sm:$0xff]
  %v44 = vld [vmem:[%s1 + $0xb0] sm:$0xff]
  %v45 = vld [vmem:[%s1 + $0xb8] sm:$0xff]
  %v46 = vld [vmem:[%s1 + $0xc0] sm:$0xff]
  %v47 = vld [vmem:[%s1 + $0xc8] sm:$0xff]
  %v48 = vld [vmem:[%s1 + $0xd0] sm:$0xff]
  %v49 = vld [vmem:[%s1 + $0xd8] sm:$0xff]
  %v50 = vld [vmem:[%s1 + $0xe0] sm:$0xff]
  %v51 = vld [vmem:[%s1 + $0xe8] sm:$0xff]
  %v52 = vld [vmem:[%s1 + $0xf0] sm:$0xff]
  %v53 = vld [vmem:[%s1 + $0xf8] sm:$0xff]
  %v54 = vld [vmem:[%s1 + $0x100] sm:$0xff]
  %v55 = vld [vmem:[%s1 + $0x108] sm:$0xff]
  %v56 = vld [vmem:[%s1 + $0x110] sm:$0xff]
  %v57 = vld [vmem:[%s1 + $0x118] sm:$0xff]
  %v58 = vld [vmem:[%s1 + $0x120] sm:$0xff]
  %v59 = vld [vmem:[%s1 + $0x128] sm:$0xff]
  %v60 = vld [vmem:[%s1 + $0x130] sm:$0xff]
  %v61 = vld [vmem:[%s1 + $0x138] sm:$0xff]
  %v62 = vld [vmem:[%s1 + $0x140] sm:$0xff]
  %v63 = vld [vmem:[%s1 + $0x148] sm:$0xff]
  %v64 = vld [vmem:[%s1 + $0x150] sm:$0xff]
  %v65 = vld [vmem:[%s1 + $0x158] sm:$0xff]
  %v66 = vld [vmem:[%s1 + $0x160] sm:$0xff]
  %v67 = vld [vmem:[%s1 + $0x168] sm:$0xff]
  %v68 = vld [vmem:[%s1 + $0x170] sm:$0xff]
  %v69 = vld [vmem:[%s1 + $0x178] sm:$0xff]
  %v70 = vld [vmem:[%s1 + $0x180] sm:$0xff]
  %v71 = vld [vmem:[%s1 + $0x188] sm:$0xff]
  %v72 = vld [vmem:[%s1 + $0x190] sm:$0xff]
  %v73 = vld [vmem:[%s1 + $0x198] sm:$0xff]
  %v74 = vld [vmem:[%s1 + $0x1a0] sm:$0xff]
  %v75 = vld [vmem:[%s1 + $0x1a8] sm:$0xff]
  %v76 = vld [vmem:[%s1 + $0x1b0] sm:$0xff]
  %v77 = vld [vmem:[%s1 + $0x1b8] sm:$0xff]
  %v78 = vld [vmem:[%s1 + $0x1c0] sm:$0xff]
  %v79 = vld [vmem:[%s1 + $0x1c8] sm:$0xff]
  %v80 = vld [vmem:[%s1 + $0x1d0] sm:$0xff]
  %v81 = vld [vmem:[%s1 + $0x1d8] sm:$0xff]
  %v82 = vld [vmem:[%s1 + $0x1e0] sm:$0xff]
  %v83 = vld [vmem:[%s1 + $0x1e8] sm:$0xff]
  %v84 = vld [vmem:[%s1 + $0x1f0] sm:$0xff]
  %v85 = vld [vmem:[%s1 + $0x1f8] sm:$0xff]
  %v86 = vld [vmem:[%s1 + $0x200] sm:$0xff]
  %v87 = vld [vmem:[%s1 + $0x208] sm:$0xff]
  %v88 = vld [vmem:[%s1 + $0x210] sm:$0xff]
  %v89 = vld [vmem:[%s1 + $0x218] sm:$0xff]
  %v90 = vld [vmem:[%s1 + $0x220] sm:$0xff]
  %v91 = vld [vmem:[%s1 + $0x228] sm:$0xff]
  %v92 = vld [vmem:[%s1 + $0x230] sm:$0xff]
  %v93 = vld [vmem:[%s1 + $0x238] sm:$0xff]
  %v94 = vld [vmem:[%s1 + $0x240] sm:$0xff]
  %v95 = vld [vmem:[%s1 + $0x248] sm:$0xff]
  %v96 = vld [vmem:[%s1 + $0x250] sm:$0xff]
  %v97 = vld [vmem:[%s1 + $0x258] sm:$0xff]
  %v98 = vld [vmem:[%s1 + $0x260] sm:$0xff]
  %v99 = vld [vmem:[%s1 + $0x268] sm:$0xff]
  %v100 = vld [vmem:[%s1 + $0x270] sm:$0xff]
  %v101 = vld [vmem:[%s1 + $0x278] sm:$0xff]
  %v102 = vld [vmem:[%s1 + $0x280] sm:$0xff]
  %v103 = vld [vmem:[%s1 + $0x288] sm:$0xff]
  %v104 = vld [vmem:[%s1 + $0x290] sm:$0xff]
  %v105 = vld [vmem:[%s1 + $0x298] sm:$0xff]
  %v106 = vld [vmem:[%s1 + $0x2a0] sm:$0xff]
  %v107 = vld [vmem:[%s1 + $0x2a8] sm:$0xff]
  %v108 = vld [vmem:[%s1 + $0x2b0] sm:$0xff]
  %v109 = vld [vmem:[%s1 + $0x2b8] sm:$0xff]
  %v110 = vld [vmem:[%s1 + $0x2c0] sm:$0xff]
  %v111 = vld [vmem:[%s1 + $0x2c8] sm:$0xff]
  %v112 = vld [vmem:[%s1 + $0x2d0] sm:$0xff]
  %v113 = vld [vmem:[%s1 + $0x2d8] sm:$0xff]
  %v114 = vld [vmem:[%s1 + $0x2e0] sm:$0xff]
  %v115 = vld [vmem:[%s1 + $0x2e8] sm:$0xff]
  %v116 = vld [vmem:[%s1 + $0x2f0] sm:$0xff]
  %v117 = vld [vmem:[%s1 + $0x2f8] sm:$0xff]
  %v118 = vld [vmem:[%s1 + $0x300] sm:$0xff]
  %v119 = vld [vmem:[%s1 + $0x308] sm:$0xff]
  %v120 = vld [vmem:[%s1 + $0x310] sm:$0xff]
  %v121 = vld [vmem:[%s1 + $0x318] sm:$0xff]
  %v122 = vld [vmem:[%s1 + $0x320] sm:$0xff]
  %v123 = vld [vmem:[%s1 + $0x328] sm:$0xff]
  %v124 = vld [vmem:[%s1 + $0x330] sm:$0xff]
  %v125 = vld [vmem:[%s1 + $0x338] sm:$0xff]
  %v126 = vld [vmem:[%s1 + $0x340] sm:$0xff]
  %v127 = vld [vmem:[%s1 + $0x348] sm:$0xff]
  %v128 = vld [vmem:[%s1 + $0x350] sm:$0xff]
  %v129 = vld [vmem:[%s1 + $0x358] sm:$0xff]
  %v130 = vld [vmem:[%s1 + $0x360] sm:$0xff]
  %v131 = vld [vmem:[%s1 + $0x368] sm:$0xff]
  %v132 = vld [vmem:[%s1 + $0x370] sm:$0xff]
  %v133 = vld [vmem:[%s1 + $0x378] sm:$0xff]
  %v134 = vld [vmem:[%s1 + $0x380] sm:$0xff]
  %v135 = vld [vmem:[%s1 + $0x388] sm:$0xff]
  %v136 = vld [vmem:[%s1 + $0x390] sm:$0xff]
  %v137 = vld [vmem:[%s1 + $0x398] sm:$0xff]
  %v138 = vld [vmem:[%s1 + $0x3a0] sm:$0xff]
  %v139 = vld [vmem:[%s1 + $0x3a8] sm:$0xff]
  %v140 = vld [vmem:[%s1 + $0x3b0] sm:$0xff]
  %v141 = vld [vmem:[%s1 + $0x3b8] sm:$0xff]
  %v142 = vld [vmem:[%s1 + $0x3c0] sm:$0xff]
  %v143 = vld [vmem:[%s1 + $0x3c8] sm:$0xff]
  %v144 = vld [vmem:[%s1 + $0x3d0] sm:$0xff]
  %v145 = vld [vmem:[%s1 + $0x3d8] sm:$0xff]
  %v146 = vld [vmem:[%s1 + $0x3e0] sm:$0xff]
  %v147 = vld [vmem:[%s1 + $0x3e8] sm:$0xff]
  %v148 = vld [vmem:[%s1 + $0x3f0] sm:$0xff]
  %v149 = vld [vmem:[%s1 + $0x3f8] sm:$0xff]
  %v150 = vld [vmem:[%s1 + $0x400] sm:$0xff]
  %v151 = vld [vmem:[%s1 + $0x408] sm:$0xff]
  %v152 = vld [vmem:[%s1 + $0x410] sm:$0xff]
  %v153 = vld [vmem:[%s1 + $0x418] sm:$0xff]
  %v154 = vld [vmem:[%s1 + $0x420] sm:$0xff]
  %v155 = vld [vmem:[%s1 + $0x428] sm:$0xff]
  %v156 = vld [vmem:[%s1 + $0x430] sm:$0xff]
  %v157 = vld [vmem:[%s1 + $0x438] sm:$0xff]
  %v158 = vld [vmem:[%s1 + $0x440] sm:$0xff]
  %v159 = vld [vmem:[%s1 + $0x448] sm:$0xff]
  %v160 = vld [vmem:[%s1 + $0x450] sm:$0xff]
  %v161 = vld [vmem:[%s1 + $0x458] sm:$0xff]
  %v162 = vld [vmem:[%s1 + $0x460] sm:$0xff]
  %v163 = vld [vmem:[%s1 + $0x468] sm:$0xff]
  %v164 = vld [vmem:[%s1 + $0x470] sm:$0xff]
  %v165 = vld [vmem:[%s1 + $0x478] sm:$0xff]
  %v166 = vld [vmem:[%s1 + $0x480] sm:$0xff]
  %v167 = vld [vmem:[%s1 + $0x488] sm:$0xff]
  %v168 = vld [vmem:[%s1 + $0x490] sm:$0xff]
  %v169 = vld [vmem:[%s1 + $0x498] sm:$0xff]
  %v170 = vld [vmem:[%s1 + $0x4a0] sm:$0xff]
  %v171 = vld [vmem:[%s1 + $0x4a8] sm:$0xff]
  %v172 = vld [vmem:[%s1 + $0x4b0] sm:$0xff]
  %v173 = vld [vmem:[%s1 + $0x4b8] sm:$0xff]
  %v174 = vld [vmem:[%s1 + $0x4c0] sm:$0xff]
  %v175 = vld [vmem:[%s1 + $0x4c8] sm:$0xff]
  %v176 = vld [vmem:[%s1 + $0x4d0] sm:$0xff]
  %v177 = vld [vmem:[%s1 + $0x4d8] sm:$0xff]
  %v178 = vld [vmem:[%s1 + $0x4e0] sm:$0xff]
  %v179 = vld [vmem:[%s1 + $0x4e8] sm:$0xff]
  %v180 = vld [vmem:[%s1 + $0x4f0] sm:$0xff]
  %v181 = vld [vmem:[%s1 + $0x4f8] sm:$0xff]
  %v182 = vld [vmem:[%s1 + $0x500] sm:$0xff]
  %v183 = vld [vmem:[%s1 + $0x508] sm:$0xff]
  %v184 = vld [vmem:[%s1 + $0x510] sm:$0xff]
  %v185 = vld [vmem:[%s1 + $0x518] sm:$0xff]
  %v186 = vld [vmem:[%s1 + $0x520] sm:$0xff]
  %v187 = vld [vmem:[%s1 + $0x528] sm:$0xff]
  %v188 = vld [vmem:[%s1 + $0x530] sm:$0xff]
  %v189 = vld [vmem:[%s1 + $0x538] sm:$0xff]
  %v190 = vld [vmem:[%s1 + $0x540] sm:$0xff]
  %v191 = vld [vmem:[%s1 + $0x548] sm:$0xff]
  %v192 = vld [vmem:[%s1 + $0x550] sm:$0xff]
  %v193 = vld [vmem:[%s1 + $0x558] sm:$0xff]
  %v194 = vld [vmem:[%s1 + $0x560] sm:$0xff]
  %v195 = vld [vmem:[%s1 + $0x568] sm:$0xff]
  %v196 = vld [vmem:[%s1 + $0x570] sm:$0xff]
  %v197 = vld [vmem:[%s1 + $0x578] sm:$0xff]
  %v198 = vld [vmem:[%s1 + $0x580] sm:$0xff]
  %v199 = vld [vmem:[%s1 + $0x588] sm:$0xff]
  %v200 = vld [vmem:[%s1 + $0x590] sm:$0xff]
  %v201 = vld [vmem:[%s1 + $0x598] sm:$0xff]
  %v202 = vld [vmem:[%s1 + $0x5a0] sm:$0xff]
  %v203 = vld [vmem:[%s1 + $0x5a8] sm:$0xff]
  %v204 = vld [vmem:[%s1 + $0x5b0] sm:$0xff]
  %v205 = vld [vmem:[%s1 + $0x5b8] sm:$0xff]
  %v206 = vld [vmem:[%s1 + $0x5c0] sm:$0xff]
  %v207 = vld [vmem:[%s1 + $0x5c8] sm:$0xff]
  %v208 = vld [vmem:[%s1 + $0x5d0] sm:$0xff]
  %v209 = vld [vmem:[%s1 + $0x5d8] sm:$0xff]
  %v210 = vld [vmem:[%s1 + $0x5e0] sm:$0xff]
  %v211 = vld [vmem:[%s1 + $0x5e8] sm:$0xff]
  %v212 = vld [vmem:[%s1 + $0x5f0] sm:$0xff]
  %v213 = vld [vmem:[%s1 + $0x5f8] sm:$0xff]
  %v214 = vld [vmem:[%s1 + $0x600] sm:$0xff]
  %v215 = vld [vmem:[%s1 + $0x608] sm:$0xff]
  %v216 = vld [vmem:[%s1 + $0x610] sm:$0xff]
  %v217 = vld [vmem:[%s1 + $0x618] sm:$0xff]
  %v218 = vld [vmem:[%s1 + $0x620] sm:$0xff]
  %v219 = vld [vmem:[%s1 + $0x628] sm:$0xff]
  %v220 = vld [vmem:[%s1 + $0x630] sm:$0xff]
  %v221 = vld [vmem:[%s1 + $0x638] sm:$0xff]
  %v222 = vld [vmem:[%s1 + $0x640] sm:$0xff]
  %v223 = vld [vmem:[%s1 + $0x648] sm:$0xff]
  %v224 = vld [vmem:[%s1 + $0x650] sm:$0xff]
  %v225 = vld [vmem:[%s1 + $0x658] sm:$0xff]
  %v226 = vld [vmem:[%s1 + $0x660] sm:$0xff]
  %v227 = vld [vmem:[%s1 + $0x668] sm:$0xff]
  %v228 = vld [vmem:[%s1 + $0x670] sm:$0xff]
  %v229 = vld [vmem:[%s1 + $0x678] sm:$0xff]
  %v230 = vld [vmem:[%s1 + $0x680] sm:$0xff]
  %v231 = vld [vmem:[%s1 + $0x688] sm:$0xff]
  %v232 = vld [vmem:[%s1 + $0x690] sm:$0xff]
  %v233 = vld [vmem:[%s1 + $0x698] sm:$0xff]
  %v234 = vld [vmem:[%s1 + $0x6a0] sm:$0xff]
  %v235 = vld [vmem:[%s1 + $0x6a8] sm:$0xff]
  %v236 = vld [vmem:[%s1 + $0x6b0] sm:$0xff]
  %v237 = vld [vmem:[%s1 + $0x6b8] sm:$0xff]
  %v238 = vld [vmem:[%s1 + $0x6c0] sm:$0xff]
  %v239 = vld [vmem:[%s1 + $0x6c8] sm:$0xff]
  %v240 = vld [vmem:[%s1 + $0x6d0] sm:$0xff]
  %v241 = vld [vmem:[%s1 + $0x6d8] sm:$0xff]
  %v242 = vld [vmem:[%s1 + $0x6e0] sm:$0xff]
  %v243 = vld [vmem:[%s1 + $0x6e8] sm:$0xff]
  %v244 = vld [vmem:[%s1 + $0x6f0] sm:$0xff]
  %v245 = vld [vmem:[%s1 + $0x6f8] sm:$0xff]
  %v246 = vld [vmem:[%s1 + $0x700] sm:$0xff]
  %v247 = vld [vmem:[%s1 + $0x708] sm:$0xff]
  %v248 = vld [vmem:[%s1 + $0x710] sm:$0xff]
  %v249 = vld [vmem:[%s1 + $0x718] sm:$0xff]
  %v250 = vld [vmem:[%s1 + $0x720] sm:$0xff]
  %v251 = vld [vmem:[%s1 + $0x728] sm:$0xff]
  %v252 = vld [vmem:[%s1 + $0x730] sm:$0xff]
  %v253 = vld [vmem:[%s1 + $0x738] sm:$0xff]
  %v254 = vld [vmem:[%s1 + $0x740] sm:$0xff]
  %v255 = vld [vmem:[%s1 + $0x748] sm:$0xff]
  %v256 = vld [vmem:[%s1 + $0x750] sm:$0x3f]
  %v257 = vld [vmem:[%s1 + $0x758] sm:$0x3f]
  %v258 = vld [vmem:[%s1 + $0x760] sm:$0x3f]
  %v259 = vld [vmem:[%s1 + $0x768] sm:$0x3f]
  %v260 = vld [vmem:[%s1 + $0x770] sm:$0x3f]
  %v261 = vld [vmem:[%s1 + $0x778] sm:$0x3f]
  %v262 = vld [vmem:[%s1 + $0x780] sm:$0x3f]
  %v263 = vld [vmem:[%s1 + $0x788] sm:$0x3f]
  %v264 = vld [vmem:[%s1 + $0x790] sm:$0x3f]
  %v265 = vld [vmem:[%s1 + $0x798] sm:$0x3f]
  %v266 = vld [vmem:[%s1 + $0x7a0] sm:$0x3f]
  %v267 = vld [vmem:[%s1 + $0x7a8] sm:$0x3f]
  %v268 = vld [vmem:[%s1 + $0x7b0] sm:$0x3f]
  %v269 = vld [vmem:[%s2] sm:$0x3f]
  %271 = vset.pattern.permute.xlu0 0
  %272 = vperm.xlu0 %271, %v269
  %v273 = vpop.permute.xlu0 %272
  %vm275 = vcmask 179200
  %v277 = vsel %vm275, %v21, 0
  %vm279 = vcmask 1045504
  %v281 = vsel %vm279, %v256, 0
  %v284 = vsel %vm279, %v257, 0
  %v287 = vsel %vm279, %v258, 0
  %v290 = vsel %vm279, %v259, 0
  %v293 = vsel %vm279, %v260, 0
  %v296 = vsel %vm279, %v261, 0
  %v299 = vsel %vm279, %v262, 0
  %v302 = vsel %vm279, %v263, 0
  %v305 = vsel %vm279, %v264, 0
  %v308 = vsel %vm279, %v265, 0
  %v311 = vsel %vm279, %v266, 0
  %v314 = vsel %vm279, %v267, 0
  %v317 = vsel %vm279, %v268, 0
  %319 = vmatprep.subr.mxu0 %v23
  %320 = vmatpush1.msra.mxu0 %v22
  %321 = vmatprep.subr.mxu0 %v36
  %322 = vmatpush1.msra.mxu0 %v35
  %323 = vmatprep.subr.mxu0 %v49
  %324 = vmatpush1.msra.mxu0 %v48
  %325 = vmatprep.subr.mxu0 %v62
  %326 = vmatpush1.msra.mxu0 %v61
  %327 = vmatprep.subr.mxu0 %v75
  %328 = vmatpush1.msra.mxu0 %v74
  %329 = vmatprep.subr.mxu0 %v88
  %330 = vmatpush1.msra.mxu0 %v87
  %331 = vmatprep.subr.mxu0 %v101
  %332 = vmatpush1.msra.mxu0 %v100
  %333 = vmatprep.subr.mxu0 %v114
  %334 = vmatpush1.msra.mxu0 %v113
  %335 = vmatprep.subr.mxu0 %v127
  %336 = vmatpush1.msra.mxu0 %v126
  %337 = vmatprep.subr.mxu0 %v140
  %338 = vmatpush1.msra.mxu0 %v139
  %339 = vmatprep.subr.mxu0 %v153
  %340 = vmatpush1.msra.mxu0 %v152
  %341 = vmatprep.subr.mxu0 %v166
  %342 = vmatpush1.msra.mxu0 %v165
  %343 = vmatprep.subr.mxu0 %v179
  %344 = vmatpush1.msra.mxu0 %v178
  %345 = vmatprep.subr.mxu0 %v192
  %346 = vmatpush1.msra.mxu0 %v191
  %347 = vmatprep.subr.mxu0 %v205
  %348 = vmatpush1.msra.mxu0 %v204
  %349 = vmatprep.subr.mxu0 %v218
  %350 = vmatpush1.msra.mxu0 %v217
  %351 = vmatprep.subr.mxu0 %v231
  %352 = vmatpush1.msra.mxu0 %v230
  %353 = vmatprep.subr.mxu0 %v244
  %354 = vmatpush1.msra.mxu0 %v243
  %355 = vmatprep.subr.mxu0 %v284
  %356 = vmatpush1.msra.mxu0 %v281
  %357 = vmatprep.subr.mxu0 0.0
  %358 = vmatpush1.msra.mxu0 0.0
  %359 = vmatprep.subr.mxu0 0.0
  %360 = vmatpush1.msra.mxu0 0.0
  %361 = vmatprep.subr.mxu0 0.0
  %362 = vmatpush1.msra.mxu0 0.0
  %363 = vmatprep.subr.mxu0 0.0
  %364 = vmatpush1.msra.mxu0 0.0
  %365 = vmatprep.subr.mxu0 0.0
  %366 = vmatpush1.msra.mxu0 0.0
  %367 = vmatprep.subr.mxu0 0.0
  %368 = vmatpush1.msra.mxu0 0.0
  %369 = vmatprep.subr.mxu0 0.0
  %370 = vmatpush1.msra.mxu0 0.0
  %371 = vmatprep.subr.mxu0 0.0
  %372 = vmatpush1.msra.mxu0 0.0
  %373 = vmatprep.subr.mxu0 0.0
  %374 = vmatpush1.msra.mxu0 0.0
  %375 = vmatprep.subr.mxu0 0.0
  %376 = vmatpush1.msra.mxu0 0.0
  %377 = vmatprep.subr.mxu0 0.0
  %378 = vmatpush1.msra.mxu0 0.0
  %379 = vmatprep.subr.mxu0 0.0
  %380 = vmatpush1.msra.mxu0 0.0
  %381 = vmatprep.subr.mxu0 0.0
  %382 = vmatpush1.msra.mxu0 0.0
  %383 = vmatprep.mubr.f32.mxu0 %v277
  %384 = vmatmul.mubr.f32.gmra.mrb[0].mxu0 %v20
  %v385 = vpop.f32.mrb[0].mxu0
  %v386 = vadd.f32 %v273, %v385
  %v387 = vpop.f32.mrb[0].mxu0
  %v388 = vadd.f32 %v273, %v387
  %389 = vdwg.mxu0
  %390 = vmatprep.subr.mxu0 %v25
  %391 = vmatpush1.msra.mxu0 %v24
  %392 = vmatprep.subr.mxu0 %v38
  %393 = vmatpush1.msra.mxu0 %v37
  %394 = vmatprep.subr.mxu0 %v51
  %395 = vmatpush1.msra.mxu0 %v50
  %396 = vmatprep.subr.mxu0 %v64
  %397 = vmatpush1.msra.mxu0 %v63
  %398 = vmatprep.subr.mxu0 %v77
  %399 = vmatpush1.msra.mxu0 %v76
  %400 = vmatprep.subr.mxu0 %v90
  %401 = vmatpush1.msra.mxu0 %v89
  %402 = vmatprep.subr.mxu0 %v103
  %403 = vmatpush1.msra.mxu0 %v102
  %404 = vmatprep.subr.mxu0 %v116
  %405 = vmatpush1.msra.mxu0 %v115
  %406 = vmatprep.subr.mxu0 %v129
  %407 = vmatpush1.msra.mxu0 %v128
  %408 = vmatprep.subr.mxu0 %v142
  %409 = vmatpush1.msra.mxu0 %v141
  %410 = vmatprep.subr.mxu0 %v155
  %411 = vmatpush1.msra.mxu0 %v154
  %412 = vmatprep.subr.mxu0 %v168
  %413 = vmatpush1.msra.mxu0 %v167
  %414 = vmatprep.subr.mxu0 %v181
  %415 = vmatpush1.msra.mxu0 %v180
  %416 = vmatprep.subr.mxu0 %v194
  %417 = vmatpush1.msra.mxu0 %v193
  %418 = vmatprep.subr.mxu0 %v207
  %419 = vmatpush1.msra.mxu0 %v206
  %420 = vmatprep.subr.mxu0 %v220
  %421 = vmatpush1.msra.mxu0 %v219
  %422 = vmatprep.subr.mxu0 %v233
  %423 = vmatpush1.msra.mxu0 %v232
  %424 = vmatprep.subr.mxu0 %v246
  %425 = vmatpush1.msra.mxu0 %v245
  %426 = vmatprep.subr.mxu0 %v290
  %427 = vmatpush1.msra.mxu0 %v287
  %428 = vmatprep.subr.mxu0 0.0
  %429 = vmatpush1.msra.mxu0 0.0
  %430 = vmatprep.subr.mxu0 0.0
  %431 = vmatpush1.msra.mxu0 0.0
  %432 = vmatprep.subr.mxu0 0.0
  %433 = vmatpush1.msra.mxu0 0.0
  %434 = vmatprep.subr.mxu0 0.0
  %435 = vmatpush1.msra.mxu0 0.0
  %436 = vmatprep.subr.mxu0 0.0
  %437 = vmatpush1.msra.mxu0 0.0
  %438 = vmatprep.subr.mxu0 0.0
  %439 = vmatpush1.msra.mxu0 0.0
  %440 = vmatprep.subr.mxu0 0.0
  %441 = vmatpush1.msra.mxu0 0.0
  %442 = vmatprep.subr.mxu0 0.0
  %443 = vmatpush1.msra.mxu0 0.0
  %444 = vmatprep.subr.mxu0 0.0
  %445 = vmatpush1.msra.mxu0 0.0
  %446 = vmatprep.subr.mxu0 0.0
  %447 = vmatpush1.msra.mxu0 0.0
  %448 = vmatprep.subr.mxu0 0.0
  %449 = vmatpush1.msra.mxu0 0.0
  %450 = vmatprep.subr.mxu0 0.0
  %451 = vmatpush1.msra.mxu0 0.0
  %452 = vmatprep.subr.mxu0 0.0
  %453 = vmatpush1.msra.mxu0 0.0
  %454 = vmatprep.mubr.f32.mxu0 %v277
  %455 = vmatmul.mubr.f32.gmra.mrb[0].mxu0 %v20
  %v456 = vpop.f32.mrb[0].mxu0
  %v457 = vadd.f32 %v273, %v456
  %v458 = vpop.f32.mrb[0].mxu0
  %v459 = vadd.f32 %v273, %v458
  %460 = vdwg.mxu0
  %461 = vmatprep.subr.mxu0 %v27
  %462 = vmatpush1.msra.mxu0 %v26
  %463 = vmatprep.subr.mxu0 %v40
  %464 = vmatpush1.msra.mxu0 %v39
  %465 = vmatprep.subr.mxu0 %v53
  %466 = vmatpush1.msra.mxu0 %v52
  %467 = vmatprep.subr.mxu0 %v66
  %468 = vmatpush1.msra.mxu0 %v65
  %469 = vmatprep.subr.mxu0 %v79
  %470 = vmatpush1.msra.mxu0 %v78
  %471 = vmatprep.subr.mxu0 %v92
  %472 = vmatpush1.msra.mxu0 %v91
  %473 = vmatprep.subr.mxu0 %v105
  %474 = vmatpush1.msra.mxu0 %v104
  %475 = vmatprep.subr.mxu0 %v118
  %476 = vmatpush1.msra.mxu0 %v117
  %477 = vmatprep.subr.mxu0 %v131
  %478 = vmatpush1.msra.mxu0 %v130
  %479 = vmatprep.subr.mxu0 %v144
  %480 = vmatpush1.msra.mxu0 %v143
  %481 = vmatprep.subr.mxu0 %v157
  %482 = vmatpush1.msra.mxu0 %v156
  %483 = vmatprep.subr.mxu0 %v170
  %484 = vmatpush1.msra.mxu0 %v169
  %485 = vmatprep.subr.mxu0 %v183
  %486 = vmatpush1.msra.mxu0 %v182
  %487 = vmatprep.subr.mxu0 %v196
  %488 = vmatpush1.msra.mxu0 %v195
  %489 = vmatprep.subr.mxu0 %v209
  %490 = vmatpush1.msra.mxu0 %v208
  %491 = vmatprep.subr.mxu0 %v222
  %492 = vmatpush1.msra.mxu0 %v221
  %493 = vmatprep.subr.mxu0 %v235
  %494 = vmatpush1.msra.mxu0 %v234
  %495 = vmatprep.subr.mxu0 %v248
  %496 = vmatpush1.msra.mxu0 %v247
  %497 = vmatprep.subr.mxu0 %v296
  %498 = vmatpush1.msra.mxu0 %v293
  %499 = vmatprep.subr.mxu0 0.0
  %500 = vmatpush1.msra.mxu0 0.0
  %501 = vmatprep.subr.mxu0 0.0
  %502 = vmatpush1.msra.mxu0 0.0
  %503 = vmatprep.subr.mxu0 0.0
  %504 = vmatpush1.msra.mxu0 0.0
  %505 = vmatprep.subr.mxu0 0.0
  %506 = vmatpush1.msra.mxu0 0.0
  %507 = vmatprep.subr.mxu0 0.0
  %508 = vmatpush1.msra.mxu0 0.0
  %509 = vmatprep.subr.mxu0 0.0
  %510 = vmatpush1.msra.mxu0 0.0
  %511 = vmatprep.subr.mxu0 0.0
  %512 = vmatpush1.msra.mxu0 0.0
  %513 = vmatprep.subr.mxu0 0.0
  %514 = vmatpush1.msra.mxu0 0.0
  %515 = vmatprep.subr.mxu0 0.0
  %516 = vmatpush1.msra.mxu0 0.0
  %517 = vmatprep.subr.mxu0 0.0
  %518 = vmatpush1.msra.mxu0 0.0
  %519 = vmatprep.subr.mxu0 0.0
  %520 = vmatpush1.msra.mxu0 0.0
  %521 = vmatprep.subr.mxu0 0.0
  %522 = vmatpush1.msra.mxu0 0.0
  %523 = vmatprep.subr.mxu0 0.0
  %524 = vmatpush1.msra.mxu0 0.0
  %525 = vmatprep.mubr.f32.mxu0 %v277
  %526 = vmatmul.mubr.f32.gmra.mrb[0].mxu0 %v20
  %v527 = vpop.f32.mrb[0].mxu0
  %v528 = vadd.f32 %v273, %v527
  %v529 = vpop.f32.mrb[0].mxu0
  %v530 = vadd.f32 %v273, %v529
  %531 = vdwg.mxu0
  %532 = vmatprep.subr.mxu0 %v29
  %533 = vmatpush1.msra.mxu0 %v28
  %534 = vmatprep.subr.mxu0 %v42
  %535 = vmatpush1.msra.mxu0 %v41
  %536 = vmatprep.subr.mxu0 %v55
  %537 = vmatpush1.msra.mxu0 %v54
  %538 = vmatprep.subr.mxu0 %v68
  %539 = vmatpush1.msra.mxu0 %v67
  %540 = vmatprep.subr.mxu0 %v81
  %541 = vmatpush1.msra.mxu0 %v80
  %542 = vmatprep.subr.mxu0 %v94
  %543 = vmatpush1.msra.mxu0 %v93
  %544 = vmatprep.subr.mxu0 %v107
  %545 = vmatpush1.msra.mxu0 %v106
  %546 = vmatprep.subr.mxu0 %v120
  %547 = vmatpush1.msra.mxu0 %v119
  %548 = vmatprep.subr.mxu0 %v133
  %549 = vmatpush1.msra.mxu0 %v132
  %550 = vmatprep.subr.mxu0 %v146
  %551 = vmatpush1.msra.mxu0 %v145
  %552 = vmatprep.subr.mxu0 %v159
  %553 = vmatpush1.msra.mxu0 %v158
  %554 = vmatprep.subr.mxu0 %v172
  %555 = vmatpush1.msra.mxu0 %v171
  %556 = vmatprep.subr.mxu0 %v185
  %557 = vmatpush1.msra.mxu0 %v184
  %558 = vmatprep.subr.mxu0 %v198
  %559 = vmatpush1.msra.mxu0 %v197
  %560 = vmatprep.subr.mxu0 %v211
  %561 = vmatpush1.msra.mxu0 %v210
  %562 = vmatprep.subr.mxu0 %v224
  %563 = vmatpush1.msra.mxu0 %v223
  %564 = vmatprep.subr.mxu0 %v237
  %565 = vmatpush1.msra.mxu0 %v236
  %566 = vmatprep.subr.mxu0 %v250
  %567 = vmatpush1.msra.mxu0 %v249
  %568 = vmatprep.subr.mxu0 %v302
  %569 = vmatpush1.msra.mxu0 %v299
  %570 = vmatprep.subr.mxu0 0.0
  %571 = vmatpush1.msra.mxu0 0.0
  %572 = vmatprep.subr.mxu0 0.0
  %573 = vmatpush1.msra.mxu0 0.0
  %574 = vmatprep.subr.mxu0 0.0
  %575 = vmatpush1.msra.mxu0 0.0
  %576 = vmatprep.subr.mxu0 0.0
  %577 = vmatpush1.msra.mxu0 0.0
  %578 = vmatprep.subr.mxu0 0.0
  %579 = vmatpush1.msra.mxu0 0.0
  %580 = vmatprep.subr.mxu0 0.0
  %581 = vmatpush1.msra.mxu0 0.0
  %582 = vmatprep.subr.mxu0 0.0
  %583 = vmatpush1.msra.mxu0 0.0
  %584 = vmatprep.subr.mxu0 0.0
  %585 = vmatpush1.msra.mxu0 0.0
  %586 = vmatprep.subr.mxu0 0.0
  %587 = vmatpush1.msra.mxu0 0.0
  %588 = vmatprep.subr.mxu0 0.0
  %589 = vmatpush1.msra.mxu0 0.0
  %590 = vmatprep.subr.mxu0 0.0
  %591 = vmatpush1.msra.mxu0 0.0
  %592 = vmatprep.subr.mxu0 0.0
  %593 = vmatpush1.msra.mxu0 0.0
  %594 = vmatprep.subr.mxu0 0.0
  %595 = vmatpush1.msra.mxu0 0.0
  %596 = vmatprep.mubr.f32.mxu0 %v277
  %597 = vmatmul.mubr.f32.gmra.mrb[0].mxu0 %v20
  %v598 = vpop.f32.mrb[0].mxu0
  %v599 = vadd.f32 %v273, %v598
  %v600 = vpop.f32.mrb[0].mxu0
  %v601 = vadd.f32 %v273, %v600
  %602 = vdwg.mxu0
  %603 = vmatprep.subr.mxu0 %v31
  %604 = vmatpush1.msra.mxu0 %v30
  %605 = vmatprep.subr.mxu0 %v44
  %606 = vmatpush1.msra.mxu0 %v43
  %607 = vmatprep.subr.mxu0 %v57
  %608 = vmatpush1.msra.mxu0 %v56
  %609 = vmatprep.subr.mxu0 %v70
  %610 = vmatpush1.msra.mxu0 %v69
  %611 = vmatprep.subr.mxu0 %v83
  %612 = vmatpush1.msra.mxu0 %v82
  %613 = vmatprep.subr.mxu0 %v96
  %614 = vmatpush1.msra.mxu0 %v95
  %615 = vmatprep.subr.mxu0 %v109
  %616 = vmatpush1.msra.mxu0 %v108
  %617 = vmatprep.subr.mxu0 %v122
  %618 = vmatpush1.msra.mxu0 %v121
  %619 = vmatprep.subr.mxu0 %v135
  %620 = vmatpush1.msra.mxu0 %v134
  %621 = vmatprep.subr.mxu0 %v148
  %622 = vmatpush1.msra.mxu0 %v147
  %623 = vmatprep.subr.mxu0 %v161
  %624 = vmatpush1.msra.mxu0 %v160
  %625 = vmatprep.subr.mxu0 %v174
  %626 = vmatpush1.msra.mxu0 %v173
  %627 = vmatprep.subr.mxu0 %v187
  %628 = vmatpush1.msra.mxu0 %v186
  %629 = vmatprep.subr.mxu0 %v200
  %630 = vmatpush1.msra.mxu0 %v199
  %631 = vmatprep.subr.mxu0 %v213
  %632 = vmatpush1.msra.mxu0 %v212
  %633 = vmatprep.subr.mxu0 %v226
  %634 = vmatpush1.msra.mxu0 %v225
  %635 = vmatprep.subr.mxu0 %v239
  %636 = vmatpush1.msra.mxu0 %v238
  %637 = vmatprep.subr.mxu0 %v252
  %638 = vmatpush1.msra.mxu0 %v251
  %639 = vmatprep.subr.mxu0 %v308
  %640 = vmatpush1.msra.mxu0 %v305
  %641 = vmatprep.subr.mxu0 0.0
  %642 = vmatpush1.msra.mxu0 0.0
  %643 = vmatprep.subr.mxu0 0.0
  %644 = vmatpush1.msra.mxu0 0.0
  %645 = vmatprep.subr.mxu0 0.0
  %646 = vmatpush1.msra.mxu0 0.0
  %647 = vmatprep.subr.mxu0 0.0
  %648 = vmatpush1.msra.mxu0 0.0
  %649 = vmatprep.subr.mxu0 0.0
  %650 = vmatpush1.msra.mxu0 0.0
  %651 = vmatprep.subr.mxu0 0.0
  %652 = vmatpush1.msra.mxu0 0.0
  %653 = vmatprep.subr.mxu0 0.0
  %654 = vmatpush1.msra.mxu0 0.0
  %655 = vmatprep.subr.mxu0 0.0
  %656 = vmatpush1.msra.mxu0 0.0
  %657 = vmatprep.subr.mxu0 0.0
  %658 = vmatpush1.msra.mxu0 0.0
  %659 = vmatprep.subr.mxu0 0.0
  %660 = vmatpush1.msra.mxu0 0.0
  %661 = vmatprep.subr.mxu0 0.0
  %662 = vmatpush1.msra.mxu0 0.0
  %663 = vmatprep.subr.mxu0 0.0
  %664 = vmatpush1.msra.mxu0 0.0
  %665 = vmatprep.subr.mxu0 0.0
  %666 = vmatpush1.msra.mxu0 0.0
  %667 = vmatprep.mubr.f32.mxu0 %v277
  %668 = vmatmul.mubr.f32.gmra.mrb[0].mxu0 %v20
  %v669 = vpop.f32.mrb[0].mxu0
  %v670 = vadd.f32 %v273, %v669
  %v671 = vpop.f32.mrb[0].mxu0
  %v672 = vadd.f32 %v273, %v671
  %673 = vdwg.mxu0
  %674 = vmatprep.subr.mxu0 %v33
  %675 = vmatpush1.msra.mxu0 %v32
  %676 = vmatprep.subr.mxu0 %v46
  %677 = vmatpush1.msra.mxu0 %v45
  %678 = vmatprep.subr.mxu0 %v59
  %679 = vmatpush1.msra.mxu0 %v58
  %680 = vmatprep.subr.mxu0 %v72
  %681 = vmatpush1.msra.mxu0 %v71
  %682 = vmatprep.subr.mxu0 %v85
  %683 = vmatpush1.msra.mxu0 %v84
  %684 = vmatprep.subr.mxu0 %v98
  %685 = vmatpush1.msra.mxu0 %v97
  %686 = vmatprep.subr.mxu0 %v111
  %687 = vmatpush1.msra.mxu0 %v110
  %688 = vmatprep.subr.mxu0 %v124
  %689 = vmatpush1.msra.mxu0 %v123
  %690 = vmatprep.subr.mxu0 %v137
  %691 = vmatpush1.msra.mxu0 %v136
  %692 = vmatprep.subr.mxu0 %v150
  %693 = vmatpush1.msra.mxu0 %v149
  %694 = vmatprep.subr.mxu0 %v163
  %695 = vmatpush1.msra.mxu0 %v162
  %696 = vmatprep.subr.mxu0 %v176
  %697 = vmatpush1.msra.mxu0 %v175
  %698 = vmatprep.subr.mxu0 %v189
  %699 = vmatpush1.msra.mxu0 %v188
  %700 = vmatprep.subr.mxu0 %v202
  %701 = vmatpush1.msra.mxu0 %v201
  %702 = vmatprep.subr.mxu0 %v215
  %703 = vmatpush1.msra.mxu0 %v214
  %704 = vmatprep.subr.mxu0 %v228
  %705 = vmatpush1.msra.mxu0 %v227
  %706 = vmatprep.subr.mxu0 %v241
  %707 = vmatpush1.msra.mxu0 %v240
  %708 = vmatprep.subr.mxu0 %v254
  %709 = vmatpush1.msra.mxu0 %v253
  %710 = vmatprep.subr.mxu0 %v314
  %711 = vmatpush1.msra.mxu0 %v311
  %712 = vmatprep.subr.mxu0 0.0
  %713 = vmatpush1.msra.mxu0 0.0
  %714 = vmatprep.subr.mxu0 0.0
  %715 = vmatpush1.msra.mxu0 0.0
  %716 = vmatprep.subr.mxu0 0.0
  %717 = vmatpush1.msra.mxu0 0.0
  %718 = vmatprep.subr.mxu0 0.0
  %719 = vmatpush1.msra.mxu0 0.0
  %720 = vmatprep.subr.mxu0 0.0
  %721 = vmatpush1.msra.mxu0 0.0
  %722 = vmatprep.subr.mxu0 0.0
  %723 = vmatpush1.msra.mxu0 0.0
  %724 = vmatprep.subr.mxu0 0.0
  %725 = vmatpush1.msra.mxu0 0.0
  %726 = vmatprep.subr.mxu0 0.0
  %727 = vmatpush1.msra.mxu0 0.0
  %728 = vmatprep.subr.mxu0 0.0
  %729 = vmatpush1.msra.mxu0 0.0
  %730 = vmatprep.subr.mxu0 0.0
  %731 = vmatpush1.msra.mxu0 0.0
  %732 = vmatprep.subr.mxu0 0.0
  %733 = vmatpush1.msra.mxu0 0.0
  %734 = vmatprep.subr.mxu0 0.0
  %735 = vmatpush1.msra.mxu0 0.0
  %736 = vmatprep.subr.mxu0 0.0
  %737 = vmatpush1.msra.mxu0 0.0
  %738 = vmatprep.mubr.f32.mxu0 %v277
  %739 = vmatmul.mubr.f32.gmra.mrb[0].mxu0 %v20
  %v740 = vpop.f32.mrb[0].mxu0
  %v741 = vadd.f32 %v273, %v740
  %v742 = vpop.f32.mrb[0].mxu0
  %v743 = vadd.f32 %v273, %v742
  %744 = vdwg.mxu0
  %745 = vmatprep.subr.mxu0 0.0
  %746 = vmatpush1.msra.mxu0 %v34
  %747 = vmatprep.subr.mxu0 0.0
  %748 = vmatpush1.msra.mxu0 %v47
  %749 = vmatprep.subr.mxu0 0.0
  %750 = vmatpush1.msra.mxu0 %v60
  %751 = vmatprep.subr.mxu0 0.0
  %752 = vmatpush1.msra.mxu0 %v73
  %753 = vmatprep.subr.mxu0 0.0
  %754 = vmatpush1.msra.mxu0 %v86
  %755 = vmatprep.subr.mxu0 0.0
  %756 = vmatpush1.msra.mxu0 %v99
  %757 = vmatprep.subr.mxu0 0.0
  %758 = vmatpush1.msra.mxu0 %v112
  %759 = vmatprep.subr.mxu0 0.0
  %760 = vmatpush1.msra.mxu0 %v125
  %761 = vmatprep.subr.mxu0 0.0
  %762 = vmatpush1.msra.mxu0 %v138
  %763 = vmatprep.subr.mxu0 0.0
  %764 = vmatpush1.msra.mxu0 %v151
  %765 = vmatprep.subr.mxu0 0.0
  %766 = vmatpush1.msra.mxu0 %v164
  %767 = vmatprep.subr.mxu0 0.0
  %768 = vmatpush1.msra.mxu0 %v177
  %769 = vmatprep.subr.mxu0 0.0
  %770 = vmatpush1.msra.mxu0 %v190
  %771 = vmatprep.subr.mxu0 0.0
  %772 = vmatpush1.msra.mxu0 %v203
  %773 = vmatprep.subr.mxu0 0.0
  %774 = vmatpush1.msra.mxu0 %v216
  %775 = vmatprep.subr.mxu0 0.0
  %776 = vmatpush1.msra.mxu0 %v229
  %777 = vmatprep.subr.mxu0 0.0
  %778 = vmatpush1.msra.mxu0 %v242
  %779 = vmatprep.subr.mxu0 0.0
  %780 = vmatpush1.msra.mxu0 %v255
  %781 = vmatprep.subr.mxu0 0.0
  %782 = vmatpush1.msra.mxu0 %v317
  %783 = vmatprep.subr.mxu0 0.0
  %784 = vmatpush1.msra.mxu0 0.0
  %785 = vmatprep.subr.mxu0 0.0
  %786 = vmatpush1.msra.mxu0 0.0
  %787 = vmatprep.subr.mxu0 0.0
  %788 = vmatpush1.msra.mxu0 0.0
  %789 = vmatprep.subr.mxu0 0.0
  %790 = vmatpush1.msra.mxu0 0.0
  %791 = vmatprep.subr.mxu0 0.0
  %792 = vmatpush1.msra.mxu0 0.0
  %793 = vmatprep.subr.mxu0 0.0
  %794 = vmatpush1.msra.mxu0 0.0
  %795 = vmatprep.subr.mxu0 0.0
  %796 = vmatpush1.msra.mxu0 0.0
  %797 = vmatprep.subr.mxu0 0.0
  %798 = vmatpush1.msra.mxu0 0.0
  %799 = vmatprep.subr.mxu0 0.0
  %800 = vmatpush1.msra.mxu0 0.0
  %801 = vmatprep.subr.mxu0 0.0
  %802 = vmatpush1.msra.mxu0 0.0
  %803 = vmatprep.subr.mxu0 0.0
  %804 = vmatpush1.msra.mxu0 0.0
  %805 = vmatprep.subr.mxu0 0.0
  %806 = vmatpush1.msra.mxu0 0.0
  %807 = vmatprep.subr.mxu0 0.0
  %808 = vmatpush1.msra.mxu0 0.0
  %809 = vmatprep.mubr.f32.mxu0 %v277
  %810 = vmatmul.mubr.f32.gmra.mrb[0].mxu0 %v20
  %v811 = vpop.f32.mrb[0].mxu0
  %v812 = vadd.f32 %v273, %v811
  %v813 = vpop.f32.mrb[0].mxu0
  %814 = vdwg.mxu0
  %v815 = vsel %vm279, %v386, 0.0
  %v816 = vsel %vm279, %v388, 0.0
  %v817 = vadd.f32 %v815, %v816
  %v818 = vsel %vm279, %v457, 0.0
  %v819 = vadd.f32 %v817, %v818
  %v820 = vsel %vm279, %v459, 0.0
  %v821 = vadd.f32 %v819, %v820
  %v822 = vsel %vm279, %v528, 0.0
  %v823 = vadd.f32 %v821, %v822
  %v824 = vsel %vm279, %v530, 0.0
  %v825 = vadd.f32 %v823, %v824
  %v826 = vsel %vm279, %v599, 0.0
  %v827 = vadd.f32 %v825, %v826
  %v828 = vsel %vm279, %v601, 0.0
  %v829 = vadd.f32 %v827, %v828
  %v830 = vsel %vm279, %v670, 0.0
  %v831 = vadd.f32 %v829, %v830
  %v832 = vsel %vm279, %v672, 0.0
  %v833 = vadd.f32 %v831, %v832
  %v834 = vsel %vm279, %v741, 0.0
  %v835 = vadd.f32 %v833, %v834
  %v836 = vsel %vm279, %v743, 0.0
  %v837 = vadd.f32 %v835, %v836
  %vm838 = vcmask 259072
  %v839 = vsel %vm838, %v812, 0.0
  %v840 = vadd.f32 %v837, %v839
  %841 = vadd.xlane.f32.xlu0 %v840
  %v842 = vpop.xlane.xlu0 %841
  %v843 = vrcp.pop 1568.0
  %v844 = vmul.f32 %v842, %v843
  %v845 = vsub.f32 %v386, %v844
  %v846 = vsub.f32 %v388, %v844
  %v847 = vsub.f32 %v457, %v844
  %v848 = vsub.f32 %v459, %v844
  %v849 = vsub.f32 %v528, %v844
  %v850 = vsub.f32 %v530, %v844
  %v851 = vsub.f32 %v599, %v844
  %v852 = vsub.f32 %v601, %v844
  %v853 = vsub.f32 %v670, %v844
  %v854 = vsub.f32 %v672, %v844
  %v855 = vsub.f32 %v741, %v844
  %v856 = vsub.f32 %v743, %v844
  %v857 = vsub.f32 %v812, %v844
  %v858 = vmul.f32 %v845, %v845
  %v859 = vmul.f32 %v846, %v846
  %v860 = vmul.f32 %v847, %v847
  %v861 = vmul.f32 %v848, %v848
  %v862 = vmul.f32 %v849, %v849
  %v863 = vmul.f32 %v850, %v850
  %v864 = vmul.f32 %v851, %v851
  %v865 = vmul.f32 %v852, %v852
  %v866 = vmul.f32 %v853, %v853
  %v867 = vmul.f32 %v854, %v854
  %v868 = vmul.f32 %v855, %v855
  %v869 = vmul.f32 %v856, %v856
  %v870 = vmul.f32 %v857, %v857
  %v871 = vsel %vm279, %v858, 0.0
  %v872 = vsel %vm279, %v859, 0.0
  %v873 = vadd.f32 %v871, %v872
  %v874 = vsel %vm279, %v860, 0.0
  %v875 = vadd.f32 %v873, %v874
  %v876 = vsel %vm279, %v861, 0.0
  %v877 = vadd.f32 %v875, %v876
  %v878 = vsel %vm279, %v862, 0.0
  %v879 = vadd.f32 %v877, %v878
  %v880 = vsel %vm279, %v863, 0.0
  %v881 = vadd.f32 %v879, %v880
  %v882 = vsel %vm279, %v864, 0.0
  %v883 = vadd.f32 %v881, %v882
  %v884 = vsel %vm279, %v865, 0.0
  %v885 = vadd.f32 %v883, %v884
  %v886 = vsel %vm279, %v866, 0.0
  %v887 = vadd.f32 %v885, %v886
  %v888 = vsel %vm279, %v867, 0.0
  %v889 = vadd.f32 %v887, %v888
  %v890 = vsel %vm279, %v868, 0.0
  %v891 = vadd.f32 %v889, %v890
  %v892 = vsel %vm279, %v869, 0.0
  %v893 = vadd.f32 %v891, %v892
  %v894 = vsel %vm838, %v870, 0.0
  %v895 = vadd.f32 %v893, %v894
  %896 = vadd.xlane.f32.xlu0 %v895
  %v897 = vpop.xlane.xlu0 %896
  %v898 = vmul.f32 %v897, %v843
  %v899 = vadd.f32 %v898, 1e-05
  %v900 = vrsqrt.pop %v899
  %v901 = vmul.f32 %v845, %v900
  %v902 = vmul.f32 %v846, %v900
  %v903 = vmul.f32 %v847, %v900
  %v904 = vmul.f32 %v848, %v900
  %v905 = vmul.f32 %v849, %v900
  %v906 = vmul.f32 %v850, %v900
  %v907 = vmul.f32 %v851, %v900
  %v908 = vmul.f32 %v852, %v900
  %v909 = vmul.f32 %v853, %v900
  %v910 = vmul.f32 %v854, %v900
  %v911 = vmul.f32 %v855, %v900
  %v912 = vmul.f32 %v856, %v900
  %v913 = vmul.f32 %v857, %v900
  %v914 = vld [vmem:[%s3] sm:$0x3f]
  %916 = vset.pattern.permute.xlu0 0
  %917 = vperm.xlu0 %916, %v914
  %v918 = vpop.permute.xlu0 %917
  %v920 = vmul.f32 %v901, %v918
  %v921 = vmul.f32 %v902, %v918
  %v922 = vmul.f32 %v903, %v918
  %v923 = vmul.f32 %v904, %v918
  %v924 = vmul.f32 %v905, %v918
  %v925 = vmul.f32 %v906, %v918
  %v926 = vmul.f32 %v907, %v918
  %v927 = vmul.f32 %v908, %v918
  %v928 = vmul.f32 %v909, %v918
  %v929 = vmul.f32 %v910, %v918
  %v930 = vmul.f32 %v911, %v918
  %v931 = vmul.f32 %v912, %v918
  %v932 = vmul.f32 %v913, %v918
  %v933 = vld [vmem:[%s4] sm:$0x3f]
  %935 = vset.pattern.permute.xlu0 0
  %936 = vperm.xlu0 %935, %v933
  %v937 = vpop.permute.xlu0 %936
  %v939 = vadd.f32 %v920, %v937
  %v940 = vadd.f32 %v921, %v937
  %v941 = vadd.f32 %v922, %v937
  %v942 = vadd.f32 %v923, %v937
  %v943 = vadd.f32 %v924, %v937
  %v944 = vadd.f32 %v925, %v937
  %v945 = vadd.f32 %v926, %v937
  %v946 = vadd.f32 %v927, %v937
  %v947 = vadd.f32 %v928, %v937
  %v948 = vadd.f32 %v929, %v937
  %v949 = vadd.f32 %v930, %v937
  %v950 = vadd.f32 %v931, %v937
  %v951 = vadd.f32 %v932, %v937
  %v952 = vmax.f32 %v939, 0.0
  %v953 = vmax.f32 %v940, 0.0
  %v954 = vmax.f32 %v941, 0.0
  %v955 = vmax.f32 %v942, 0.0
  %v956 = vmax.f32 %v943, 0.0
  %v957 = vmax.f32 %v944, 0.0
  %v958 = vmax.f32 %v945, 0.0
  %v959 = vmax.f32 %v946, 0.0
  %v960 = vmax.f32 %v947, 0.0
  %v961 = vmax.f32 %v948, 0.0
  %v962 = vmax.f32 %v949, 0.0
  %v963 = vmax.f32 %v950, 0.0
  %v964 = vmax.f32 %v951, 0.0
  %965 = vst [vmem:[%s5] sm:$0x3f] %v952
  %966 = vst [vmem:[%s5 + $0x8] sm:$0x3f] %v953
  %967 = vst [vmem:[%s5 + $0x10] sm:$0x3f] %v954
  %968 = vst [vmem:[%s5 + $0x18] sm:$0x3f] %v955
  %969 = vst [vmem:[%s5 + $0x20] sm:$0x3f] %v956
  %970 = vst [vmem:[%s5 + $0x28] sm:$0x3f] %v957
  %971 = vst [vmem:[%s5 + $0x30] sm:$0x3f] %v958
  %972 = vst [vmem:[%s5 + $0x38] sm:$0x3f] %v959
  %973 = vst [vmem:[%s5 + $0x40] sm:$0x3f] %v960
  %974 = vst [vmem:[%s5 + $0x48] sm:$0x3f] %v961
  %975 = vst [vmem:[%s5 + $0x50] sm:$0x3f] %v962
  %976 = vst [vmem:[%s5 + $0x58] sm:$0x3f] %v963
  %977 = vst.msk [vmem:[%s5 + $0x60] sm:$0x3f] %vm838, %v964
  // Predicated region
  $region22: #{forward.11} parent=0 // pred_check
    _
  $region23: #{forward.11} parent=0 // pred_check_branch
    %979 = sbr.rel (0) target = $region25
  $region24: #{forward.11} parent=0 // pred_region
    _
  $region25: #{forward.11} parent=0 // pred_fallthru
    _
  // Predicated region
  $region26: #{forward.11} parent=0 // pred_check
    _
  $region27: #{forward.11} parent=0 // pred_check_branch
    %981 = sbr.rel (0) target = $region29
  $region28: #{forward.11} parent=0 // pred_region
    _
  $region29: #{forward.11} parent=0 // pred_fallthru
    _

// kernel: forward.12
$region0: #{forward.12}
  #allocation0 [shape = 'u32[]', space=smem, size = 0x4, offset = 0x4, fixed_abs, tag = 'smem constant byte address 0x4 - core index']
  #allocation1 [shape = 'u32[144,128]{1,0:T(1,128)}', space=vmem, size = 0x12000, scoped, tag = 'internal scratch']
  %s0 = inlined_call_operand.vmem [shape: f32[6,392], index: 0, kind: input, shape index: {}]
  %s1 = inlined_call_operand.vmem [shape: f32[6,392], index: 1, kind: input, shape index: {}]
  %s2 = inlined_call_operand.vmem [shape: f32[6,392], index: 2, kind: input, shape index: {}]
  %s3 = inlined_call_operand.vmem [shape: f32[6,392], index: 3, kind: input, shape index: {}]
  %s4 = inlined_call_operand.vmem [shape: f32[6,392], index: 4, kind: output, shape index: {}]
  %s5 = sld [smem:[#allocation0]]
  $region26: #{forward.12} parent=0
    _
  %s7 = ssub.s32 1, %s5
  %s8 = scalar_select 0, %s7, %s5
  // Predicated region
  $region2: #{forward.12} parent=0 // pred_check
    _
  $region3: #{forward.12} parent=0 // pred_check_branch
    %10 = sbr.rel (0) target = $region5
  $region4: #{forward.12} parent=0 // pred_region
    _
  $region5: #{forward.12} parent=0 // pred_fallthru
    _
  // Predicated region
  $region6: #{forward.12} parent=0 // pred_check
    _
  $region7: #{forward.12} parent=0 // pred_check_branch
    %12 = sbr.rel (0) target = $region9
  $region8: #{forward.12} parent=0 // pred_region
    _
  $region9: #{forward.12} parent=0 // pred_fallthru
    _
  // Predicated region
  $region10: #{forward.12} parent=0 // pred_check
    _
  $region11: #{forward.12} parent=0 // pred_check_branch
    %14 = sbr.rel (0) target = $region13
  $region12: #{forward.12} parent=0 // pred_region
    _
  $region13: #{forward.12} parent=0 // pred_fallthru
    _
  // Predicated region
  $region14: #{forward.12} parent=0 // pred_check
    _
  $region15: #{forward.12} parent=0 // pred_check_branch
    %16 = sbr.rel (0) target = $region17
  $region16: #{forward.12} parent=0 // pred_region
    _
  $region17: #{forward.12} parent=0 // pred_fallthru
    _
  %v17 = vld [vmem:[%s0] sm:$0x3f]
  %v18 = vld [vmem:[%s0 + $0x8] sm:$0x3f]
  %v19 = vld [vmem:[%s0 + $0x10] sm:$0x3f]
  %v20 = vld [vmem:[%s0 + $0x18] sm:$0x3f]
  %v21 = vld [vmem:[%s1] sm:$0x3f]
  %v22 = vld [vmem:[%s1 + $0x8] sm:$0x3f]
  %v23 = vld [vmem:[%s1 + $0x10] sm:$0x3f]
  %v24 = vld [vmem:[%s1 + $0x18] sm:$0x3f]
  %v25 = vmax.f32 %v17, %v21
  %v26 = vmax.f32 %v18, %v22
  %v27 = vmax.f32 %v19, %v23
  %v28 = vmax.f32 %v20, %v24
  %v29 = vld [vmem:[%s2] sm:$0x3f]
  %v30 = vld [vmem:[%s2 + $0x8] sm:$0x3f]
  %v31 = vld [vmem:[%s2 + $0x10] sm:$0x3f]
  %v32 = vld [vmem:[%s2 + $0x18] sm:$0x3f]
  %v33 = vld [vmem:[%s3] sm:$0x3f]
  %v34 = vld [vmem:[%s3 + $0x8] sm:$0x3f]
  %v35 = vld [vmem:[%s3 + $0x10] sm:$0x3f]
  %v36 = vld [vmem:[%s3 + $0x18] sm:$0x3f]
  %v37 = vmax.f32 %v29, %v33
  %v38 = vmax.f32 %v30, %v34
  %v39 = vmax.f32 %v31, %v35
  %v40 = vmax.f32 %v32, %v36
  %v41 = vmax.f32 %v25, %v37
  %v42 = vmax.f32 %v26, %v38
  %v43 = vmax.f32 %v27, %v39
  %v44 = vmax.f32 %v28, %v40
  %45 = vst [vmem:[%s4] sm:$0x3f] %v41
  %46 = vst [vmem:[%s4 + $0x8] sm:$0x3f] %v42
  %47 = vst [vmem:[%s4 + $0x10] sm:$0x3f] %v43
  %vm48 = vcmask 62464
  %49 = vst.msk [vmem:[%s4 + $0x18] sm:$0x3f] %vm48, %v44
  // Predicated region
  $region18: #{forward.12} parent=0 // pred_check
    _
  $region19: #{forward.12} parent=0 // pred_check_branch
    %51 = sbr.rel (0) target = $region21
  $region20: #{forward.12} parent=0 // pred_region
    _
  $region21: #{forward.12} parent=0 // pred_fallthru
    _
  // Predicated region
  $region22: #{forward.12} parent=0 // pred_check
    _
  $region23: #{forward.12} parent=0 // pred_check_branch
    %53 = sbr.rel (0) target = $region25
  $region24: #{forward.12} parent=0 // pred_region
    _
  $region25: #{forward.12} parent=0 // pred_fallthru
    _

// kernel: forward.13
$region0: #{forward.13}
  #allocation0 [shape = 'u32[]', space=smem, size = 0x4, offset = 0x4, fixed_abs, tag = 'smem constant byte address 0x4 - core index']
  #allocation1 [shape = 'u32[144,128]{1,0:T(1,128)}', space=vmem, size = 0x12000, scoped, tag = 'internal scratch']
  %s0 = inlined_call_operand.vmem [shape: f32[16,150], index: 0, kind: input, shape index: {}]
  %s1 = inlined_call_operand.vmem [shape: f32[150,200], index: 1, kind: input, shape index: {}]
  %s2 = inlined_call_operand.vmem [shape: f32[16,1], index: 2, kind: input, shape index: {}]
  %s3 = inlined_call_operand.vmem [shape: f32[16,1], index: 3, kind: input, shape index: {}]
  %s4 = inlined_call_operand.vmem [shape: f32[16,1], index: 4, kind: input, shape index: {}]
  %s5 = inlined_call_operand.vmem [shape: f32[16,200], index: 5, kind: output, shape index: {}]
  %s6 = sld [smem:[#allocation0]]
  $region30: #{forward.13} parent=0
    _
  %s8 = ssub.s32 1, %s6
  %s9 = scalar_select 0, %s8, %s6
  // Predicated region
  $region2: #{forward.13} parent=0 // pred_check
    _
  $region3: #{forward.13} parent=0 // pred_check_branch
    %11 = sbr.rel (0) target = $region5
  $region4: #{forward.13} parent=0 // pred_region
    _
  $region5: #{forward.13} parent=0 // pred_fallthru
    _
  // Predicated region
  $region6: #{forward.13} parent=0 // pred_check
    _
  $region7: #{forward.13} parent=0 // pred_check_branch
    %13 = sbr.rel (0) target = $region9
  $region8: #{forward.13} parent=0 // pred_region
    _
  $region9: #{forward.13} parent=0 // pred_fallthru
    _
  // Predicated region
  $region10: #{forward.13} parent=0 // pred_check
    _
  $region11: #{forward.13} parent=0 // pred_check_branch
    %15 = sbr.rel (0) target = $region13
  $region12: #{forward.13} parent=0 // pred_region
    _
  $region13: #{forward.13} parent=0 // pred_fallthru
    _
  // Predicated region
  $region14: #{forward.13} parent=0 // pred_check
    _
  $region15: #{forward.13} parent=0 // pred_check_branch
    %17 = sbr.rel (0) target = $region17
  $region16: #{forward.13} parent=0 // pred_region
    _
  $region17: #{forward.13} parent=0 // pred_fallthru
    _
  // Predicated region
  $region18: #{forward.13} parent=0 // pred_check
    _
  $region19: #{forward.13} parent=0 // pred_check_branch
    %19 = sbr.rel (0) target = $region21
  $region20: #{forward.13} parent=0 // pred_region
    _
  $region21: #{forward.13} parent=0 // pred_fallthru
    _
  %v20 = vld [vmem:[%s0] sm:$0xff]
  %v21 = vld [vmem:[%s0 + $0x8] sm:$0xff]
  %v22 = vld [vmem:[%s0 + $0x10] sm:$0xff]
  %v23 = vld [vmem:[%s0 + $0x18] sm:$0xff]
  %v24 = vld [vmem:[%s1] sm:$0xff]
  %v25 = vld [vmem:[%s1 + $0x8] sm:$0xff]
  %v26 = vld [vmem:[%s1 + $0x10] sm:$0xff]
  %v27 = vld [vmem:[%s1 + $0x18] sm:$0xff]
  %v28 = vld [vmem:[%s1 + $0x20] sm:$0xff]
  %v29 = vld [vmem:[%s1 + $0x28] sm:$0xff]
  %v30 = vld [vmem:[%s1 + $0x30] sm:$0xff]
  %v31 = vld [vmem:[%s1 + $0x38] sm:$0xff]
  %v32 = vld [vmem:[%s1 + $0x40] sm:$0xff]
  %v33 = vld [vmem:[%s1 + $0x48] sm:$0xff]
  %v34 = vld [vmem:[%s1 + $0x50] sm:$0xff]
  %v35 = vld [vmem:[%s1 + $0x58] sm:$0xff]
  %v36 = vld [vmem:[%s1 + $0x60] sm:$0xff]
  %v37 = vld [vmem:[%s1 + $0x68] sm:$0xff]
  %v38 = vld [vmem:[%s1 + $0x70] sm:$0xff]
  %v39 = vld [vmem:[%s1 + $0x78] sm:$0xff]
  %v40 = vld [vmem:[%s1 + $0x80] sm:$0xff]
  %v41 = vld [vmem:[%s1 + $0x88] sm:$0xff]
  %v42 = vld [vmem:[%s1 + $0x90] sm:$0xff]
  %v43 = vld [vmem:[%s1 + $0x98] sm:$0xff]
  %v44 = vld [vmem:[%s1 + $0xa0] sm:$0xff]
  %v45 = vld [vmem:[%s1 + $0xa8] sm:$0xff]
  %v46 = vld [vmem:[%s1 + $0xb0] sm:$0xff]
  %v47 = vld [vmem:[%s1 + $0xb8] sm:$0xff]
  %v48 = vld [vmem:[%s1 + $0xc0] sm:$0xff]
  %v49 = vld [vmem:[%s1 + $0xc8] sm:$0xff]
  %v50 = vld [vmem:[%s1 + $0xd0] sm:$0xff]
  %v51 = vld [vmem:[%s1 + $0xd8] sm:$0xff]
  %v52 = vld [vmem:[%s1 + $0xe0] sm:$0xff]
  %v53 = vld [vmem:[%s1 + $0xe8] sm:$0xff]
  %v54 = vld [vmem:[%s1 + $0xf0] sm:$0xff]
  %v55 = vld [vmem:[%s1 + $0xf8] sm:$0xff]
  %v56 = vld [vmem:[%s1 + $0x100] sm:$0xff]
  %v57 = vld [vmem:[%s1 + $0x108] sm:$0xff]
  %v58 = vld [vmem:[%s1 + $0x110] sm:$0xff]
  %v59 = vld [vmem:[%s1 + $0x118] sm:$0xff]
  %v60 = vld [vmem:[%s1 + $0x120] sm:$0x3f]
  %v61 = vld [vmem:[%s1 + $0x128] sm:$0x3f]
  %v62 = vld [vmem:[%s2] sm:$0xff]
  %v63 = vld [vmem:[%s2 + $0x8] sm:$0xff]
  %65 = vset.pattern.permute.xlu0 0
  %66 = vperm.xlu0 %65, %v62
  %v67 = vpop.permute.xlu0 %66
  %70 = vset.pattern.permute.xlu0 0
  %71 = vperm.xlu0 %70, %v63
  %v72 = vpop.permute.xlu0 %71
  %vm74 = vcmask 179200
  %v76 = vsel %vm74, %v21, 0
  %v79 = vsel %vm74, %v23, 0
  %vm81 = vcmask 1045504
  %v83 = vsel %vm81, %v60, 0
  %v86 = vsel %vm81, %v61, 0
  %88 = vmatprep.subr.mxu0 %v25
  %89 = vmatpush1.msra.mxu0 %v24
  %90 = vmatprep.subr.mxu0 %v27
  %91 = vmatpush1.msra.mxu0 %v26
  %92 = vmatprep.subr.mxu0 %v29
  %93 = vmatpush1.msra.mxu0 %v28
  %94 = vmatprep.subr.mxu0 %v31
  %95 = vmatpush1.msra.mxu0 %v30
  %96 = vmatprep.subr.mxu0 %v33
  %97 = vmatpush1.msra.mxu0 %v32
  %98 = vmatprep.subr.mxu0 %v35
  %99 = vmatpush1.msra.mxu0 %v34
  %100 = vmatprep.subr.mxu0 %v37
  %101 = vmatpush1.msra.mxu0 %v36
  %102 = vmatprep.subr.mxu0 %v39
  %103 = vmatpush1.msra.mxu0 %v38
  %104 = vmatprep.subr.mxu0 %v41
  %105 = vmatpush1.msra.mxu0 %v40
  %106 = vmatprep.subr.mxu0 %v43
  %107 = vmatpush1.msra.mxu0 %v42
  %108 = vmatprep.subr.mxu0 %v45
  %109 = vmatpush1.msra.mxu0 %v44
  %110 = vmatprep.subr.mxu0 %v47
  %111 = vmatpush1.msra.mxu0 %v46
  %112 = vmatprep.subr.mxu0 %v49
  %113 = vmatpush1.msra.mxu0 %v48
  %114 = vmatprep.subr.mxu0 %v51
  %115 = vmatpush1.msra.mxu0 %v50
  %116 = vmatprep.subr.mxu0 %v53
  %117 = vmatpush1.msra.mxu0 %v52
  %118 = vmatprep.subr.mxu0 %v55
  %119 = vmatpush1.msra.mxu0 %v54
  %120 = vmatprep.subr.mxu0 %v57
  %121 = vmatpush1.msra.mxu0 %v56
  %122 = vmatprep.subr.mxu0 %v59
  %123 = vmatpush1.msra.mxu0 %v58
  %124 = vmatprep.subr.mxu0 %v86
  %125 = vmatpush1.msra.mxu0 %v83
  %126 = vmatprep.subr.mxu0 0.0
  %127 = vmatpush1.msra.mxu0 0.0
  %128 = vmatprep.subr.mxu0 0.0
  %129 = vmatpush1.msra.mxu0 0.0
  %130 = vmatprep.subr.mxu0 0.0
  %131 = vmatpush1.msra.mxu0 0.0
  %132 = vmatprep.subr.mxu0 0.0
  %133 = vmatpush1.msra.mxu0 0.0
  %134 = vmatprep.subr.mxu0 0.0
  %135 = vmatpush1.msra.mxu0 0.0
  %136 = vmatprep.subr.mxu0 0.0
  %137 = vmatpush1.msra.mxu0 0.0
  %138 = vmatprep.subr.mxu0 0.0
  %139 = vmatpush1.msra.mxu0 0.0
  %140 = vmatprep.subr.mxu0 0.0
  %141 = vmatpush1.msra.mxu0 0.0
  %142 = vmatprep.subr.mxu0 0.0
  %143 = vmatpush1.msra.mxu0 0.0
  %144 = vmatprep.subr.mxu0 0.0
  %145 = vmatpush1.msra.mxu0 0.0
  %146 = vmatprep.subr.mxu0 0.0
  %147 = vmatpush1.msra.mxu0 0.0
  %148 = vmatprep.subr.mxu0 0.0
  %149 = vmatpush1.msra.mxu0 0.0
  %150 = vmatprep.subr.mxu0 0.0
  %151 = vmatpush1.msra.mxu0 0.0
  %152 = vmatprep.mubr.f32.mxu0 %v76
  %153 = vmatmul.mubr.f32.gmra.mrb[0].mxu0 %v20
  %v154 = vpop.f32.mrb[0].mxu0
  %v155 = vadd.f32 %v67, %v154
  %v156 = vpop.f32.mrb[0].mxu0
  %v157 = vadd.f32 %v67, %v156
  %158 = vmatprep.mubr.f32.mxu0 %v79
  %159 = vmatmul.mubr.f32.gmra.mrb[0].mxu0 %v22
  %v160 = vpop.f32.mrb[0].mxu0
  %v161 = vadd.f32 %v72, %v160
  %v162 = vpop.f32.mrb[0].mxu0
  %v163 = vadd.f32 %v72, %v162
  %164 = vdwg.mxu0
  %vm165 = vcmask 588800
  %v166 = vsel %vm165, %v157, 0.0
  %v167 = vadd.f32 %v155, %v166
  %168 = vadd.xlane.f32.xlu0 %v167
  %v169 = vpop.xlane.xlu0 %168
  %v170 = vsel %vm165, %v163, 0.0
  %v171 = vadd.f32 %v161, %v170
  %172 = vadd.xlane.f32.xlu0 %v171
  %v173 = vpop.xlane.xlu0 %172
  %v174 = vrcp.pop 200.0
  %v175 = vmul.f32 %v169, %v174
  %v176 = vmul.f32 %v173, %v174
  %v177 = vsub.f32 %v155, %v175
  %v178 = vsub.f32 %v157, %v175
  %v179 = vsub.f32 %v161, %v176
  %v180 = vsub.f32 %v163, %v176
  %v181 = vmul.f32 %v177, %v177
  %v182 = vmul.f32 %v178, %v178
  %v183 = vmul.f32 %v179, %v179
  %v184 = vmul.f32 %v180, %v180
  %v185 = vsel %vm165, %v182, 0.0
  %v186 = vadd.f32 %v181, %v185
  %187 = vadd.xlane.f32.xlu0 %v186
  %v188 = vpop.xlane.xlu0 %187
  %v189 = vsel %vm165, %v184, 0.0
  %v190 = vadd.f32 %v183, %v189
  %191 = vadd.xlane.f32.xlu0 %v190
  %v192 = vpop.xlane.xlu0 %191
  %v193 = vmul.f32 %v188, %v174
  %v194 = vmul.f32 %v192, %v174
  %v195 = vadd.f32 %v193, 1e-05
  %v196 = vadd.f32 %v194, 1e-05
  %v197 = vrsqrt.pop %v195
  %v198 = vrsqrt.pop %v196
  %v199 = vmul.f32 %v177, %v197
  %v200 = vmul.f32 %v178, %v197
  %v201 = vmul.f32 %v179, %v198
  %v202 = vmul.f32 %v180, %v198
  %v203 = vld [vmem:[%s3] sm:$0xff]
  %v204 = vld [vmem:[%s3 + $0x8] sm:$0xff]
  %206 = vset.pattern.permute.xlu0 0
  %207 = vperm.xlu0 %206, %v203
  %v208 = vpop.permute.xlu0 %207
  %211 = vset.pattern.permute.xlu0 0
  %212 = vperm.xlu0 %211, %v204
  %v213 = vpop.permute.xlu0 %212
  %v215 = vmul.f32 %v199, %v208
  %v216 = vmul.f32 %v200, %v208
  %v217 = vmul.f32 %v201, %v213
  %v218 = vmul.f32 %v202, %v213
  %v219 = vld [vmem:[%s4] sm:$0xff]
  %v220 = vld [vmem:[%s4 + $0x8] sm:$0xff]
  %222 = vset.pattern.permute.xlu0 0
  %223 = vperm.xlu0 %222, %v219
  %v224 = vpop.permute.xlu0 %223
  %227 = vset.pattern.permute.xlu0 0
  %228 = vperm.xlu0 %227, %v220
  %v229 = vpop.permute.xlu0 %228
  %v231 = vadd.f32 %v215, %v224
  %v232 = vadd.f32 %v216, %v224
  %v233 = vadd.f32 %v217, %v229
  %v234 = vadd.f32 %v218, %v229
  %v235 = vmax.f32 %v231, 0.0
  %v236 = vmax.f32 %v232, 0.0
  %v237 = vmax.f32 %v233, 0.0
  %v238 = vmax.f32 %v234, 0.0
  %239 = vst [vmem:[%s5] sm:$0xff] %v235
  %240 = vst.msk [vmem:[%s5 + $0x8] sm:$0xff] %vm165, %v236
  %241 = vst [vmem:[%s5 + $0x10] sm:$0xff] %v237
  %242 = vst.msk [vmem:[%s5 + $0x18] sm:$0xff] %vm165, %v238
  // Predicated region
  $region22: #{forward.13} parent=0 // pred_check
    _
  $region23: #{forward.13} parent=0 // pred_check_branch
    %244 = sbr.rel (0) target = $region25
  $region24: #{forward.13} parent=0 // pred_region
    _
  $region25: #{forward.13} parent=0 // pred_fallthru
    _
  // Predicated region
  $region26: #{forward.13} parent=0 // pred_check
    _
  $region27: #{forward.13} parent=0 // pred_check_branch
    %246 = sbr.rel (0) target = $region29
  $region28: #{forward.13} parent=0 // pred_region
    _
  $region29: #{forward.13} parent=0 // pred_fallthru
    _

// kernel: forward.14
$region0: #{forward.14}
  #allocation0 [shape = 'u32[]', space=smem, size = 0x4, offset = 0x4, fixed_abs, tag = 'smem constant byte address 0x4 - core index']
  #allocation1 [shape = 'u32[144,128]{1,0:T(1,128)}', space=vmem, size = 0x12000, scoped, tag = 'internal scratch']
  %s0 = inlined_call_operand.vmem [shape: f32[16,50], index: 0, kind: input, shape index: {}]
  %s1 = inlined_call_operand.vmem [shape: f32[16,50], index: 1, kind: input, shape index: {}]
  %s2 = inlined_call_operand.vmem [shape: f32[16,50], index: 2, kind: input, shape index: {}]
  %s3 = inlined_call_operand.vmem [shape: f32[16,50], index: 3, kind: input, shape index: {}]
  %s4 = inlined_call_operand.vmem [shape: f32[16,50], index: 4, kind: output, shape index: {}]
  %s5 = sld [smem:[#allocation0]]
  $region26: #{forward.14} parent=0
    _
  %s7 = ssub.s32 1, %s5
  %s8 = scalar_select 0, %s7, %s5
  // Predicated region
  $region2: #{forward.14} parent=0 // pred_check
    _
  $region3: #{forward.14} parent=0 // pred_check_branch
    %10 = sbr.rel (0) target = $region5
  $region4: #{forward.14} parent=0 // pred_region
    _
  $region5: #{forward.14} parent=0 // pred_fallthru
    _
  // Predicated region
  $region6: #{forward.14} parent=0 // pred_check
    _
  $region7: #{forward.14} parent=0 // pred_check_branch
    %12 = sbr.rel (0) target = $region9
  $region8: #{forward.14} parent=0 // pred_region
    _
  $region9: #{forward.14} parent=0 // pred_fallthru
    _
  // Predicated region
  $region10: #{forward.14} parent=0 // pred_check
    _
  $region11: #{forward.14} parent=0 // pred_check_branch
    %14 = sbr.rel (0) target = $region13
  $region12: #{forward.14} parent=0 // pred_region
    _
  $region13: #{forward.14} parent=0 // pred_fallthru
    _
  // Predicated region
  $region14: #{forward.14} parent=0 // pred_check
    _
  $region15: #{forward.14} parent=0 // pred_check_branch
    %16 = sbr.rel (0) target = $region17
  $region16: #{forward.14} parent=0 // pred_region
    _
  $region17: #{forward.14} parent=0 // pred_fallthru
    _
  %v17 = vld [vmem:[%s0] sm:$0xff]
  %v18 = vld [vmem:[%s0 + $0x8] sm:$0xff]
  %v19 = vld [vmem:[%s1] sm:$0xff]
  %v20 = vld [vmem:[%s1 + $0x8] sm:$0xff]
  %v21 = vmax.f32 %v17, %v19
  %v22 = vmax.f32 %v18, %v20
  %v23 = vld [vmem:[%s2] sm:$0xff]
  %v24 = vld [vmem:[%s2 + $0x8] sm:$0xff]
  %v25 = vld [vmem:[%s3] sm:$0xff]
  %v26 = vld [vmem:[%s3 + $0x8] sm:$0xff]
  %v27 = vmax.f32 %v23, %v25
  %v28 = vmax.f32 %v24, %v26
  %v29 = vmax.f32 %v21, %v27
  %v30 = vmax.f32 %v22, %v28
  %vm31 = vcmask 408576
  %32 = vst.msk [vmem:[%s4] sm:$0xff] %vm31, %v29
  %33 = vst.msk [vmem:[%s4 + $0x8] sm:$0xff] %vm31, %v30
  // Predicated region
  $region18: #{forward.14} parent=0 // pred_check
    _
  $region19: #{forward.14} parent=0 // pred_check_branch
    %35 = sbr.rel (0) target = $region21
  $region20: #{forward.14} parent=0 // pred_region
    _
  $region21: #{forward.14} parent=0 // pred_fallthru
    _
  // Predicated region
  $region22: #{forward.14} parent=0 // pred_check
    _
  $region23: #{forward.14} parent=0 // pred_check_branch
    %37 = sbr.rel (0) target = $region25
  $region24: #{forward.14} parent=0 // pred_region
    _
  $region25: #{forward.14} parent=0 // pred_fallthru
    _

// kernel: forward.15
$region0: #{forward.15}
  #allocation0 [shape = 'u32[]', space=smem, size = 0x4, offset = 0x4, fixed_abs, tag = 'smem constant byte address 0x4 - core index']
  #allocation1 [shape = 'u32[144,128]{1,0:T(1,128)}', space=vmem, size = 0x12000, scoped, tag = 'internal scratch']
  %s0 = inlined_call_operand.vmem [shape: f32[2,400], index: 0, kind: input, shape index: {}]
  %s1 = inlined_call_operand.vmem [shape: f32[400,120], index: 1, kind: input, shape index: {}]
  %s2 = inlined_call_operand.vmem [shape: f32[1,120], index: 2, kind: input, shape index: {}]
  %s3 = inlined_call_operand.vmem [shape: f32[120,84], index: 3, kind: input, shape index: {}]
  %s4 = inlined_call_operand.vmem [shape: f32[1,84], index: 4, kind: input, shape index: {}]
  %s5 = inlined_call_operand.vmem [shape: f32[84,10], index: 5, kind: input, shape index: {}]
  %s6 = inlined_call_operand.vmem [shape: f32[1,10], index: 6, kind: input, shape index: {}]
  %s7 = inlined_call_operand.hbm [shape: f32[2,10], index: 7, kind: output, shape index: {}]
  %s8 = sld [smem:[#allocation0]]
  $region38: #{forward.15} parent=0
    _
  %s10 = ssub.s32 1, %s8
  %s11 = scalar_select 0, %s10, %s8
  $region1: #{forward.15} parent=0
    #allocation2 [shape = 'u8[1024]{0}', space=vmem, size = 0x400, scoped, tag = 'output window, operand 0, single buffered']
    #allocation3 [shape = 's32[1]{0}', space=sflag, size = 0x4, scoped, tag = 'scoped memory for forward.15']
    %12 = vsyncpa [#allocation3], 0
    // Predicated region
    $region2: #{forward.15} parent=1 // pred_check
      _
    $region3: #{forward.15} parent=1 // pred_check_branch
      %14 = sbr.rel (0) target = $region5
    $region4: #{forward.15} parent=1 // pred_region
      _
    $region5: #{forward.15} parent=1 // pred_fallthru
      _
    // Predicated region
    $region6: #{forward.15} parent=1 // pred_check
      _
    $region7: #{forward.15} parent=1 // pred_check_branch
      %16 = sbr.rel (0) target = $region9
    $region8: #{forward.15} parent=1 // pred_region
      _
    $region9: #{forward.15} parent=1 // pred_fallthru
      _
    // Predicated region
    $region10: #{forward.15} parent=1 // pred_check
      _
    $region11: #{forward.15} parent=1 // pred_check_branch
      %18 = sbr.rel (0) target = $region13
    $region12: #{forward.15} parent=1 // pred_region
      _
    $region13: #{forward.15} parent=1 // pred_fallthru
      _
    // Predicated region
    $region14: #{forward.15} parent=1 // pred_check
      _
    $region15: #{forward.15} parent=1 // pred_check_branch
      %20 = sbr.rel (0) target = $region17
    $region16: #{forward.15} parent=1 // pred_region
      _
    $region17: #{forward.15} parent=1 // pred_fallthru
      _
    // Predicated region
    $region18: #{forward.15} parent=1 // pred_check
      _
    $region19: #{forward.15} parent=1 // pred_check_branch
      %22 = sbr.rel (0) target = $region21
    $region20: #{forward.15} parent=1 // pred_region
      _
    $region21: #{forward.15} parent=1 // pred_fallthru
      _
    // Predicated region
    $region22: #{forward.15} parent=1 // pred_check
      _
    $region23: #{forward.15} parent=1 // pred_check_branch
      %24 = sbr.rel (0) target = $region25
    $region24: #{forward.15} parent=1 // pred_region
      _
    $region25: #{forward.15} parent=1 // pred_fallthru
      _
    // Predicated region
    $region26: #{forward.15} parent=1 // pred_check
      _
    $region27: #{forward.15} parent=1 // pred_check_branch
      %26 = sbr.rel (0) target = $region29
    $region28: #{forward.15} parent=1 // pred_region
      _
    $region29: #{forward.15} parent=1 // pred_fallthru
      _
    %v27 = vld [vmem:[%s0] sm:$0xff]
    %v28 = vld [vmem:[%s1] sm:$0xff]
    %v29 = vld [vmem:[%s1 + $0x8] sm:$0xff]
    %v30 = vld [vmem:[%s1 + $0x10] sm:$0xff]
    %v31 = vld [vmem:[%s1 + $0x18] sm:$0xff]
    %v32 = vld [vmem:[%s1 + $0x20] sm:$0xff]
    %v33 = vld [vmem:[%s1 + $0x28] sm:$0xff]
    %v34 = vld [vmem:[%s1 + $0x30] sm:$0xff]
    %v35 = vld [vmem:[%s1 + $0x38] sm:$0xff]
    %v36 = vld [vmem:[%s1 + $0x40] sm:$0xff]
    %v37 = vld [vmem:[%s1 + $0x48] sm:$0xff]
    %v38 = vld [vmem:[%s1 + $0x50] sm:$0xff]
    %v39 = vld [vmem:[%s1 + $0x58] sm:$0xff]
    %v40 = vld [vmem:[%s1 + $0x60] sm:$0xff]
    %v41 = vld [vmem:[%s1 + $0x68] sm:$0xff]
    %v42 = vld [vmem:[%s1 + $0x70] sm:$0xff]
    %v43 = vld [vmem:[%s1 + $0x78] sm:$0xff]
    %v44 = vld [vmem:[%s1 + $0x80] sm:$0xff]
    %v45 = vld [vmem:[%s1 + $0x88] sm:$0xff]
    %v46 = vld [vmem:[%s1 + $0x90] sm:$0xff]
    %v47 = vld [vmem:[%s1 + $0x98] sm:$0xff]
    %v48 = vld [vmem:[%s1 + $0xa0] sm:$0xff]
    %v49 = vld [vmem:[%s1 + $0xa8] sm:$0xff]
    %v50 = vld [vmem:[%s1 + $0xb0] sm:$0xff]
    %v51 = vld [vmem:[%s1 + $0xb8] sm:$0xff]
    %v52 = vld [vmem:[%s1 + $0xc0] sm:$0xff]
    %v53 = vld [vmem:[%s1 + $0xc8] sm:$0xff]
    %v54 = vld [vmem:[%s1 + $0xd0] sm:$0xff]
    %v55 = vld [vmem:[%s1 + $0xd8] sm:$0xff]
    %v56 = vld [vmem:[%s1 + $0xe0] sm:$0xff]
    %v57 = vld [vmem:[%s1 + $0xe8] sm:$0xff]
    %v58 = vld [vmem:[%s1 + $0xf0] sm:$0xff]
    %v59 = vld [vmem:[%s1 + $0xf8] sm:$0xff]
    %v60 = vld [vmem:[%s1 + $0x100] sm:$0xff]
    %v61 = vld [vmem:[%s1 + $0x108] sm:$0xff]
    %v62 = vld [vmem:[%s1 + $0x110] sm:$0xff]
    %v63 = vld [vmem:[%s1 + $0x118] sm:$0xff]
    %v64 = vld [vmem:[%s1 + $0x120] sm:$0xff]
    %v65 = vld [vmem:[%s1 + $0x128] sm:$0xff]
    %v66 = vld [vmem:[%s1 + $0x130] sm:$0xff]
    %v67 = vld [vmem:[%s1 + $0x138] sm:$0xff]
    %v68 = vld [vmem:[%s1 + $0x140] sm:$0xff]
    %v69 = vld [vmem:[%s1 + $0x148] sm:$0xff]
    %v70 = vld [vmem:[%s1 + $0x150] sm:$0xff]
    %v71 = vld [vmem:[%s1 + $0x158] sm:$0xff]
    %v72 = vld [vmem:[%s1 + $0x160] sm:$0xff]
    %v73 = vld [vmem:[%s1 + $0x168] sm:$0xff]
    %v74 = vld [vmem:[%s1 + $0x170] sm:$0xff]
    %v75 = vld [vmem:[%s1 + $0x178] sm:$0xff]
    %v76 = vld [vmem:[%s1 + $0x180] sm:$0xff]
    %v77 = vld [vmem:[%s1 + $0x188] sm:$0xff]
    %v78 = vld [vmem:[%s2] sm:$0x1]
    %v80 = vlaneseq
    %v81 = vshrl.u32 %v80, 7
    %v82 = vsub.s32 0, %v81
    %v83 = vrot.slane %v78, %v82
    %v86 = vcombine.high %v27, %v27
    %v88 = vunpack.c.l.s4 1983009808
    %v89 = vunpack.c.0.s8 %v88
    %v90 = vlaneseq
    %v91 = vshrl.u32 %v90, 7
    %v92 = vsub.s32 %v89, %v91
    %v93 = vrot.slane %v27, %v92
    %v95 = vunpack.c.l.s4 1983009808
    %v96 = vunpack.c.0.s8 %v95
    %v97 = vlaneseq
    %v98 = vshrl.u32 %v97, 7
    %v99 = vsub.s32 %v96, %v98
    %v100 = vrot.slane %v86, %v99
    %v101 = vcombine.high %v93, %v93
    %v102 = vcombine.high %v100, %v100
    %vm106 = vcmask 130048
    %v107 = vsel %vm106, %v102, 0
    %109 = vmatprep.subr.mxu0 0.0
    %110 = vmatpush1.msra.mxu0 %v28
    %111 = vmatprep.subr.mxu0 0.0
    %112 = vmatpush1.msra.mxu0 %v29
    %113 = vmatprep.subr.mxu0 0.0
    %114 = vmatpush1.msra.mxu0 %v30
    %115 = vmatprep.subr.mxu0 0.0
    %116 = vmatpush1.msra.mxu0 %v31
    %117 = vmatprep.subr.mxu0 0.0
    %118 = vmatpush1.msra.mxu0 %v32
    %119 = vmatprep.subr.mxu0 0.0
    %120 = vmatpush1.msra.mxu0 %v33
    %121 = vmatprep.subr.mxu0 0.0
    %122 = vmatpush1.msra.mxu0 %v34
    %123 = vmatprep.subr.mxu0 0.0
    %124 = vmatpush1.msra.mxu0 %v35
    %125 = vmatprep.subr.mxu0 0.0
    %126 = vmatpush1.msra.mxu0 %v36
    %127 = vmatprep.subr.mxu0 0.0
    %128 = vmatpush1.msra.mxu0 %v37
    %129 = vmatprep.subr.mxu0 0.0
    %130 = vmatpush1.msra.mxu0 %v38
    %131 = vmatprep.subr.mxu0 0.0
    %132 = vmatpush1.msra.mxu0 %v39
    %133 = vmatprep.subr.mxu0 0.0
    %134 = vmatpush1.msra.mxu0 %v40
    %135 = vmatprep.subr.mxu0 0.0
    %136 = vmatpush1.msra.mxu0 %v41
    %137 = vmatprep.subr.mxu0 0.0
    %138 = vmatpush1.msra.mxu0 %v42
    %139 = vmatprep.subr.mxu0 0.0
    %140 = vmatpush1.msra.mxu0 %v43
    %141 = vmatprep.subr.mxu0 0.0
    %142 = vmatpush1.msra.mxu0 %v44
    %143 = vmatprep.subr.mxu0 0.0
    %144 = vmatpush1.msra.mxu0 %v45
    %145 = vmatprep.subr.mxu0 0.0
    %146 = vmatpush1.msra.mxu0 %v46
    %147 = vmatprep.subr.mxu0 0.0
    %148 = vmatpush1.msra.mxu0 %v47
    %149 = vmatprep.subr.mxu0 0.0
    %150 = vmatpush1.msra.mxu0 %v48
    %151 = vmatprep.subr.mxu0 0.0
    %152 = vmatpush1.msra.mxu0 %v49
    %153 = vmatprep.subr.mxu0 0.0
    %154 = vmatpush1.msra.mxu0 %v50
    %155 = vmatprep.subr.mxu0 0.0
    %156 = vmatpush1.msra.mxu0 %v51
    %157 = vmatprep.subr.mxu0 0.0
    %158 = vmatpush1.msra.mxu0 %v52
    %159 = vmatprep.subr.mxu0 0.0
    %160 = vmatpush1.msra.mxu0 %v53
    %161 = vmatprep.subr.mxu0 0.0
    %162 = vmatpush1.msra.mxu0 %v54
    %163 = vmatprep.subr.mxu0 0.0
    %164 = vmatpush1.msra.mxu0 %v55
    %165 = vmatprep.subr.mxu0 0.0
    %166 = vmatpush1.msra.mxu0 %v56
    %167 = vmatprep.subr.mxu0 0.0
    %168 = vmatpush1.msra.mxu0 %v57
    %169 = vmatprep.subr.mxu0 0.0
    %170 = vmatpush1.msra.mxu0 %v58
    %171 = vmatprep.subr.mxu0 0.0
    %172 = vmatpush1.msra.mxu0 %v59
    %173 = vmatprep.mubr.f32.mxu0 %v101
    %174 = vmatmul.mubr.f32.gmra.mrb[0].mxu0 %v93
    %v175 = vpop.f32.mrb[0].mxu0
    %v176 = vadd.f32 %v83, %v175
    %v177 = vpop.f32.mrb[0].mxu0
    %178 = vdwg.mxu0
    %179 = vmatprep.subr.mxu0 0.0
    %180 = vmatpush1.msra.mxu0 %v60
    %181 = vmatprep.subr.mxu0 0.0
    %182 = vmatpush1.msra.mxu0 %v61
    %183 = vmatprep.subr.mxu0 0.0
    %184 = vmatpush1.msra.mxu0 %v62
    %185 = vmatprep.subr.mxu0 0.0
    %186 = vmatpush1.msra.mxu0 %v63
    %187 = vmatprep.subr.mxu0 0.0
    %188 = vmatpush1.msra.mxu0 %v64
    %189 = vmatprep.subr.mxu0 0.0
    %190 = vmatpush1.msra.mxu0 %v65
    %191 = vmatprep.subr.mxu0 0.0
    %192 = vmatpush1.msra.mxu0 %v66
    %193 = vmatprep.subr.mxu0 0.0
    %194 = vmatpush1.msra.mxu0 %v67
    %195 = vmatprep.subr.mxu0 0.0
    %196 = vmatpush1.msra.mxu0 %v68
    %197 = vmatprep.subr.mxu0 0.0
    %198 = vmatpush1.msra.mxu0 %v69
    %199 = vmatprep.subr.mxu0 0.0
    %200 = vmatpush1.msra.mxu0 %v70
    %201 = vmatprep.subr.mxu0 0.0
    %202 = vmatpush1.msra.mxu0 %v71
    %203 = vmatprep.subr.mxu0 0.0
    %204 = vmatpush1.msra.mxu0 %v72
    %205 = vmatprep.subr.mxu0 0.0
    %206 = vmatpush1.msra.mxu0 %v73
    %207 = vmatprep.subr.mxu0 0.0
    %208 = vmatpush1.msra.mxu0 %v74
    %209 = vmatprep.subr.mxu0 0.0
    %210 = vmatpush1.msra.mxu0 %v75
    %211 = vmatprep.subr.mxu0 0.0
    %212 = vmatpush1.msra.mxu0 %v76
    %213 = vmatprep.subr.mxu0 0.0
    %214 = vmatpush1.msra.mxu0 %v77
    %215 = vmatprep.subr.mxu0 0.0
    %216 = vmatpush1.msra.mxu0 0.0
    %217 = vmatprep.subr.mxu0 0.0
    %218 = vmatpush1.msra.mxu0 0.0
    %219 = vmatprep.subr.mxu0 0.0
    %220 = vmatpush1.msra.mxu0 0.0
    %221 = vmatprep.subr.mxu0 0.0
    %222 = vmatpush1.msra.mxu0 0.0
    %223 = vmatprep.subr.mxu0 0.0
    %224 = vmatpush1.msra.mxu0 0.0
    %225 = vmatprep.subr.mxu0 0.0
    %226 = vmatpush1.msra.mxu0 0.0
    %227 = vmatprep.subr.mxu0 0.0
    %228 = vmatpush1.msra.mxu0 0.0
    %229 = vmatprep.subr.mxu0 0.0
    %230 = vmatpush1.msra.mxu0 0.0
    %231 = vmatprep.subr.mxu0 0.0
    %232 = vmatpush1.msra.mxu0 0.0
    %233 = vmatprep.subr.mxu0 0.0
    %234 = vmatpush1.msra.mxu0 0.0
    %235 = vmatprep.subr.mxu0 0.0
    %236 = vmatpush1.msra.mxu0 0.0
    %237 = vmatprep.subr.mxu0 0.0
    %238 = vmatpush1.msra.mxu0 0.0
    %239 = vmatprep.subr.mxu0 0.0
    %240 = vmatpush1.msra.mxu0 0.0
    %241 = vmatprep.subr.mxu0 0.0
    %242 = vmatpush1.msra.mxu0 0.0
    %243 = vmatprep.mubr.f32.mxu0 %v107
    %244 = vmatmul.mubr.f32.gmra.mrb[0].mxu0 %v100
    %v245 = vpop.f32.mrb[0].mxu0
    %v246 = vadd.f32 %v176, %v245
    %v247 = vpop.f32.mrb[0].mxu0
    %248 = vdwg.mxu0
    %v249 = vld [vmem:[%s3] sm:$0xff]
    %v250 = vld [vmem:[%s3 + $0x8] sm:$0xff]
    %v251 = vld [vmem:[%s3 + $0x10] sm:$0xff]
    %v252 = vld [vmem:[%s3 + $0x18] sm:$0xff]
    %v253 = vld [vmem:[%s3 + $0x20] sm:$0xff]
    %v254 = vld [vmem:[%s3 + $0x28] sm:$0xff]
    %v255 = vld [vmem:[%s3 + $0x30] sm:$0xff]
    %v256 = vld [vmem:[%s3 + $0x38] sm:$0xff]
    %v257 = vld [vmem:[%s3 + $0x40] sm:$0xff]
    %v258 = vld [vmem:[%s3 + $0x48] sm:$0xff]
    %v259 = vld [vmem:[%s3 + $0x50] sm:$0xff]
    %v260 = vld [vmem:[%s3 + $0x58] sm:$0xff]
    %v261 = vld [vmem:[%s3 + $0x60] sm:$0xff]
    %v262 = vld [vmem:[%s3 + $0x68] sm:$0xff]
    %v263 = vld [vmem:[%s3 + $0x70] sm:$0xff]
    %v264 = vld [vmem:[%s4] sm:$0x1]
    %v266 = vlaneseq
    %v267 = vshrl.u32 %v266, 7
    %v268 = vsub.s32 0, %v267
    %v269 = vrot.slane %v264, %v268
    %vm271 = vcmask 982016
    %v273 = vsel %vm271, %v246, 0
    %275 = vmatprep.subr.mxu0 0.0
    %276 = vmatpush1.msra.mxu0 %v249
    %277 = vmatprep.subr.mxu0 0.0
    %278 = vmatpush1.msra.mxu0 %v250
    %279 = vmatprep.subr.mxu0 0.0
    %280 = vmatpush1.msra.mxu0 %v251
    %281 = vmatprep.subr.mxu0 0.0
    %282 = vmatpush1.msra.mxu0 %v252
    %283 = vmatprep.subr.mxu0 0.0
    %284 = vmatpush1.msra.mxu0 %v253
    %285 = vmatprep.subr.mxu0 0.0
    %286 = vmatpush1.msra.mxu0 %v254
    %287 = vmatprep.subr.mxu0 0.0
    %288 = vmatpush1.msra.mxu0 %v255
    %289 = vmatprep.subr.mxu0 0.0
    %290 = vmatpush1.msra.mxu0 %v256
    %291 = vmatprep.subr.mxu0 0.0
    %292 = vmatpush1.msra.mxu0 %v257
    %293 = vmatprep.subr.mxu0 0.0
    %294 = vmatpush1.msra.mxu0 %v258
    %295 = vmatprep.subr.mxu0 0.0
    %296 = vmatpush1.msra.mxu0 %v259
    %297 = vmatprep.subr.mxu0 0.0
    %298 = vmatpush1.msra.mxu0 %v260
    %299 = vmatprep.subr.mxu0 0.0
    %300 = vmatpush1.msra.mxu0 %v261
    %301 = vmatprep.subr.mxu0 0.0
    %302 = vmatpush1.msra.mxu0 %v262
    %303 = vmatprep.subr.mxu0 0.0
    %304 = vmatpush1.msra.mxu0 %v263
    %305 = vmatprep.subr.mxu0 0.0
    %306 = vmatpush1.msra.mxu0 0.0
    %307 = vmatprep.subr.mxu0 0.0
    %308 = vmatpush1.msra.mxu0 0.0
    %309 = vmatprep.subr.mxu0 0.0
    %310 = vmatpush1.msra.mxu0 0.0
    %311 = vmatprep.subr.mxu0 0.0
    %312 = vmatpush1.msra.mxu0 0.0
    %313 = vmatprep.subr.mxu0 0.0
    %314 = vmatpush1.msra.mxu0 0.0
    %315 = vmatprep.subr.mxu0 0.0
    %316 = vmatpush1.msra.mxu0 0.0
    %317 = vmatprep.subr.mxu0 0.0
    %318 = vmatpush1.msra.mxu0 0.0
    %319 = vmatprep.subr.mxu0 0.0
    %320 = vmatpush1.msra.mxu0 0.0
    %321 = vmatprep.subr.mxu0 0.0
    %322 = vmatpush1.msra.mxu0 0.0
    %323 = vmatprep.subr.mxu0 0.0
    %324 = vmatpush1.msra.mxu0 0.0
    %325 = vmatprep.subr.mxu0 0.0
    %326 = vmatpush1.msra.mxu0 0.0
    %327 = vmatprep.subr.mxu0 0.0
    %328 = vmatpush1.msra.mxu0 0.0
    %329 = vmatprep.subr.mxu0 0.0
    %330 = vmatpush1.msra.mxu0 0.0
    %331 = vmatprep.subr.mxu0 0.0
    %332 = vmatpush1.msra.mxu0 0.0
    %333 = vmatprep.subr.mxu0 0.0
    %334 = vmatpush1.msra.mxu0 0.0
    %335 = vmatprep.subr.mxu0 0.0
    %336 = vmatpush1.msra.mxu0 0.0
    %337 = vmatprep.subr.mxu0 0.0
    %338 = vmatpush1.msra.mxu0 0.0
    %339 = vmatprep.mubr.f32.mxu0 0.0
    %340 = vmatmul.mubr.f32.gmra.mrb[0].mxu0 %v273
    %v341 = vpop.f32.mrb[0].mxu0
    %v342 = vadd.f32 %v269, %v341
    %v343 = vpop.f32.mrb[0].mxu0
    %344 = vdwg.mxu0
    %v345 = vld [vmem:[%s5] sm:$0xff]
    %v346 = vld [vmem:[%s5 + $0x8] sm:$0xff]
    %v347 = vld [vmem:[%s5 + $0x10] sm:$0xff]
    %v348 = vld [vmem:[%s5 + $0x18] sm:$0xff]
    %v349 = vld [vmem:[%s5 + $0x20] sm:$0xff]
    %v350 = vld [vmem:[%s5 + $0x28] sm:$0xff]
    %v351 = vld [vmem:[%s5 + $0x30] sm:$0xff]
    %v352 = vld [vmem:[%s5 + $0x38] sm:$0xff]
    %v353 = vld [vmem:[%s5 + $0x40] sm:$0xff]
    %v354 = vld [vmem:[%s5 + $0x48] sm:$0xff]
    %v355 = vld [vmem:[%s5 + $0x50] sm:$0xf]
    %v356 = vld [vmem:[%s6] sm:$0x1]
    %v358 = vlaneseq
    %v359 = vshrl.u32 %v358, 7
    %v360 = vsub.s32 0, %v359
    %v361 = vrot.slane %v356, %v360
    %vm363 = vcmask 687104
    %v365 = vsel %vm363, %v342, 0
    %vm367 = vcmask 1043456
    %v369 = vsel %vm367, %v355, 0
    %371 = vmatprep.subr.mxu0 0.0
    %372 = vmatpush1.msra.mxu0 %v345
    %373 = vmatprep.subr.mxu0 0.0
    %374 = vmatpush1.msra.mxu0 %v346
    %375 = vmatprep.subr.mxu0 0.0
    %376 = vmatpush1.msra.mxu0 %v347
    %377 = vmatprep.subr.mxu0 0.0
    %378 = vmatpush1.msra.mxu0 %v348
    %379 = vmatprep.subr.mxu0 0.0
    %380 = vmatpush1.msra.mxu0 %v349
    %381 = vmatprep.subr.mxu0 0.0
    %382 = vmatpush1.msra.mxu0 %v350
    %383 = vmatprep.subr.mxu0 0.0
    %384 = vmatpush1.msra.mxu0 %v351
    %385 = vmatprep.subr.mxu0 0.0
    %386 = vmatpush1.msra.mxu0 %v352
    %387 = vmatprep.subr.mxu0 0.0
    %388 = vmatpush1.msra.mxu0 %v353
    %389 = vmatprep.subr.mxu0 0.0
    %390 = vmatpush1.msra.mxu0 %v354
    %391 = vmatprep.subr.mxu0 0.0
    %392 = vmatpush1.msra.mxu0 %v369
    %393 = vmatprep.subr.mxu0 0.0
    %394 = vmatpush1.msra.mxu0 0.0
    %395 = vmatprep.subr.mxu0 0.0
    %396 = vmatpush1.msra.mxu0 0.0
    %397 = vmatprep.subr.mxu0 0.0
    %398 = vmatpush1.msra.mxu0 0.0
    %399 = vmatprep.subr.mxu0 0.0
    %400 = vmatpush1.msra.mxu0 0.0
    %401 = vmatprep.subr.mxu0 0.0
    %402 = vmatpush1.msra.mxu0 0.0
    %403 = vmatprep.subr.mxu0 0.0
    %404 = vmatpush1.msra.mxu0 0.0
    %405 = vmatprep.subr.mxu0 0.0
    %406 = vmatpush1.msra.mxu0 0.0
    %407 = vmatprep.subr.mxu0 0.0
    %408 = vmatpush1.msra.mxu0 0.0
    %409 = vmatprep.subr.mxu0 0.0
    %410 = vmatpush1.msra.mxu0 0.0
    %411 = vmatprep.subr.mxu0 0.0
    %412 = vmatpush1.msra.mxu0 0.0
    %413 = vmatprep.subr.mxu0 0.0
    %414 = vmatpush1.msra.mxu0 0.0
    %415 = vmatprep.subr.mxu0 0.0
    %416 = vmatpush1.msra.mxu0 0.0
    %417 = vmatprep.subr.mxu0 0.0
    %418 = vmatpush1.msra.mxu0 0.0
    %419 = vmatprep.subr.mxu0 0.0
    %420 = vmatpush1.msra.mxu0 0.0
    %421 = vmatprep.subr.mxu0 0.0
    %422 = vmatpush1.msra.mxu0 0.0
    %423 = vmatprep.subr.mxu0 0.0
    %424 = vmatpush1.msra.mxu0 0.0
    %425 = vmatprep.subr.mxu0 0.0
    %426 = vmatpush1.msra.mxu0 0.0
    %427 = vmatprep.subr.mxu0 0.0
    %428 = vmatpush1.msra.mxu0 0.0
    %429 = vmatprep.subr.mxu0 0.0
    %430 = vmatpush1.msra.mxu0 0.0
    %431 = vmatprep.subr.mxu0 0.0
    %432 = vmatpush1.msra.mxu0 0.0
    %433 = vmatprep.subr.mxu0 0.0
    %434 = vmatpush1.msra.mxu0 0.0
    %435 = vmatprep.mubr.f32.mxu0 0.0
    %436 = vmatmul.mubr.f32.gmra.mrb[0].mxu0 %v365
    %v437 = vpop.f32.mrb[0].mxu0
    %v438 = vadd.f32 %v361, %v437
    %v439 = vpop.f32.mrb[0].mxu0
    %440 = vdwg.mxu0
    %vm441 = vcmask 74752
    %442 = vst.msk [vmem:[#allocation2] sm:$0x3] %vm441, %v438
    // Predicated region
    $region30: #{forward.15} parent=1 // pred_check
      _
    $region31: #{forward.15} parent=1 // pred_check_branch
      %444 = sbr.rel (0) target = $region33
    $region32: #{forward.15} parent=1 // pred_region
      %s446 = ssub.s32 32, 32
      %447 = vsyncadd [#allocation3], %s446
      %s449 = sshll.u32 [#allocation2], 4
      %s450 = int_to_ptr.vmem [resolvable:$true] %s449
      %452 = dma.vmem_to_hbm [thread:$0]  %s450, 32, %s7, [#allocation3]
    $region33: #{forward.15} parent=1 // pred_fallthru
      _
    // Predicated region
    $region34: #{forward.15} parent=1 // pred_check
      _
    $region35: #{forward.15} parent=1 // pred_check_branch
      %454 = sbr.rel (0) target = $region37
    $region36: #{forward.15} parent=1 // pred_region
      %455 = dma.done [#allocation3], 32
    $region37: #{forward.15} parent=1 // pred_fallthru
      _
    %456 = vsyncpa [#allocation3], 1

</llo_original>
